<compile_context>
chip_gen: v7x
topology: tpu7x:2x2x1
jax: 0.10.0
libtpu: 0.0.40
codegen_flags: <defaults>
</compile_context>

<pallas_src>
import jax
import jax.numpy as jnp
from jax import lax
from jax.experimental import pallas as pl
from jax.experimental.pallas import tpu as pltpu


def factorized_expansion2(x, w_deconv, b_deconv, gamma, beta, *, eps=1e-5):
    """x: (N, C_in, H, W) NCHW.  w_deconv: (C_in, C_out, 4, 4) (PyTorch ConvTranspose2d layout)."""
    x = x.astype(jnp.float32)
    w_deconv = w_deconv.astype(jnp.float32)
    b_deconv = b_deconv.astype(jnp.float32)
    gamma = gamma.astype(jnp.float32)
    beta = beta.astype(jnp.float32)

    N, C_in, H, W = x.shape
    C_out = w_deconv.shape[1]
    OH, OW = 2 * H, 2 * W
    Hp = H + 2                  # padded row count
    LP = Hp * OW                # flat (padded-row, out-width) length
    T = H * OW                  # flat output-spatial length per row-phase
    M = N * OH * OW             # samples per channel for batch-norm stats

    # ---------------- glue: cheap XLA ops on the *small* input / params ----------------
    # zero-stuff width by 2 (transposed conv along width == correlation over stuffed row),
    # then pad 1 row top/bottom and 2 columns left/right.
    xz = jnp.stack([x, jnp.zeros_like(x)], axis=-1).reshape(N, C_in, H, OW)
    xz = jnp.pad(xz, ((0, 0), (0, 0), (1, 1), (2, 2)))             # (N, C_in, Hp, OW + 4)
    # 4 width-shifted copies: every kernel tap becomes a contiguous slice of the flat axis.
    xs = jnp.stack([xz[..., j:j + OW] for j in range(4)], axis=1)  # (N, 4, C_in, Hp, OW)
    xs = xs.reshape(N, 4, C_in, LP)

    # tap weights: wk[dh, ph, j, co, ci] = w_deconv[ci, co, (3 - ph) - 2*dh, 3 - j]
    wflip = w_deconv[:, :, ::-1, ::-1]                 # [ci, co, kh', kw'] = w[ci, co, 3-kh', 3-kw']
    wk = wflip.transpose(2, 3, 1, 0)                   # (kh' = 2*dh + ph, kw' = j, C_out, C_in)
    wk = wk.reshape(2, 2, 4, C_out, C_in)              # (dh, ph, j, C_out, C_in)
    b_col = b_deconv.reshape(C_out, 1)

    # ------------- kernel 1: deconv as row-phase matmuls + per-image channel stats -------------
    def _deconv_kernel(xs_ref, wk_ref, b_ref, y_ref, sum_ref, ssq_ref):
        psum = jnp.zeros((C_out, 1), jnp.float32)
        pssq = jnp.zeros((C_out, 1), jnp.float32)
        for ph in (0, 1):                               # output-row parity
            acc = jnp.zeros((C_out, T), jnp.float32)
            for dh in (0, 1):                           # row tap
                row_off = (dh + ph) * OW
                for j in range(4):                      # width tap over zero-stuffed row
                    w_tap = wk_ref[dh, ph, j]                         # (C_out, C_in)
                    x_tap = xs_ref[0, j, :, row_off:row_off + T]      # (C_in, T), lane-dense
                    acc += jnp.dot(w_tap, x_tap, preferred_element_type=jnp.float32)
            acc = acc + b_ref[...]                      # bias broadcast along lanes
            psum = psum + jnp.sum(acc, axis=1, keepdims=True)
            pssq = pssq + jnp.sum(acc * acc, axis=1, keepdims=True)
            # scatter this phase's rows into the NCHW-flat output rows (2*a + ph)
            for a in range(H):
                dst = (2 * a + ph) * OW
                y_ref[0, :, dst:dst + OW] = acc[:, a * OW:a * OW + OW]
        sum_ref[0, :, :] = psum
        ssq_ref[0, :, :] = pssq

    y, psum, pssq = pl.pallas_call(
        _deconv_kernel,
        out_shape=(
            jax.ShapeDtypeStruct((N, C_out, OH * OW), jnp.float32),   # y, NCHW-flat, lane-dense
            jax.ShapeDtypeStruct((N, C_out, 1), jnp.float32),         # per-image channel sums
            jax.ShapeDtypeStruct((N, C_out, 1), jnp.float32),         # per-image channel sumsq
        ),
        grid_spec=pltpu.PrefetchScalarGridSpec(
            num_scalar_prefetch=0,
            grid=(N,),
            in_specs=[
                pl.BlockSpec((1, 4, C_in, LP), lambda n: (n, 0, 0, 0)),
                pl.BlockSpec((2, 2, 4, C_out, C_in), lambda n: (0, 0, 0, 0, 0)),
                pl.BlockSpec((C_out, 1), lambda n: (0, 0)),
            ],
            out_specs=(
                pl.BlockSpec((1, C_out, OH * OW), lambda n: (n, 0, 0)),
                pl.BlockSpec((1, C_out, 1), lambda n: (n, 0, 0)),
                pl.BlockSpec((1, C_out, 1), lambda n: (n, 0, 0)),
            ),
        ),
        compiler_params=pltpu.CompilerParams(
            dimension_semantics=("parallel",),
            vmem_limit_bytes=48 * 1024 * 1024,
        ),
    )(xs, wk, b_col)

    # tiny per-channel reductions of the partials, broadcast to per-(n, co) rows
    ch_sum = jnp.sum(psum[:, :, 0], axis=0)             # (C_out,)
    ch_ssq = jnp.sum(pssq[:, :, 0], axis=0)             # (C_out,)
    R = N * C_out
    L = OH * OW
    sum_col = jnp.tile(ch_sum, N).reshape(R, 1)
    ssq_col = jnp.tile(ch_ssq, N).reshape(R, 1)
    gamma_col = jnp.tile(gamma, N).reshape(R, 1)
    beta_col = jnp.tile(beta, N).reshape(R, 1)

    y2 = y.reshape(R, L)                                # contiguous -> free reshape
    inv_m = 1.0 / float(M)

    # ------------- kernel 2: fused batch-norm (train-mode batch stats) + ReLU -------------
    def _bn_relu_kernel(y_ref, s_ref, q_ref, g_ref, b_ref, o_ref):
        mean = s_ref[...] * inv_m
        var = q_ref[...] * inv_m - mean * mean
        scale = lax.rsqrt(var + eps) * g_ref[...]       # EUP, effectively free here
        o_ref[...] = jnp.maximum((y_ref[...] - mean) * scale + b_ref[...], 0.0)

    def _pick_rb(rows, lanes):
        # biggest row block that keeps the (double-buffered) tile modest
        if rows * lanes * 4 <= 4 * 1024 * 1024:
            return rows
        for cand in (2048, 1024, 512, 256, 128, 64, 32, 16, 8):
            if rows % cand == 0 and cand * lanes * 4 <= 4 * 1024 * 1024:
                return cand
        return rows

    rb = _pick_rb(R, L)
    grid2 = (R // rb,)

    out_flat = pl.pallas_call(
        _bn_relu_kernel,
        out_shape=jax.ShapeDtypeStruct((R, L), jnp.float32),
        grid_spec=pltpu.PrefetchScalarGridSpec(
            num_scalar_prefetch=0,
            grid=grid2,
            in_specs=[
                pl.BlockSpec((rb, L), lambda i: (i, 0)),
                pl.BlockSpec((rb, 1), lambda i: (i, 0)),
                pl.BlockSpec((rb, 1), lambda i: (i, 0)),
                pl.BlockSpec((rb, 1), lambda i: (i, 0)),
                pl.BlockSpec((rb, 1), lambda i: (i, 0)),
            ],
            out_specs=pl.BlockSpec((rb, L), lambda i: (i, 0)),
        ),
        compiler_params=pltpu.CompilerParams(
            dimension_semantics=("parallel",),
            vmem_limit_bytes=48 * 1024 * 1024,
        ),
    )(y2, sum_col, ssq_col, gamma_col, beta_col)

    return out_flat.reshape(N, C_out, OH, OW)           # contiguous -> free, already NCHW


def _reference(x, w_deconv, b_deconv, gamma, beta, eps=1e-5):
    """Pure-JAX reference: transposed conv via lhs_dilation, then train-mode BN + ReLU."""
    wf = w_deconv[:, :, ::-1, ::-1].transpose(1, 0, 2, 3)  # (C_out, C_in, 4, 4), OIHW
    y = lax.conv_general_dilated(
        x, wf, window_strides=(1, 1), padding=[(2, 2), (2, 2)],
        lhs_dilation=(2, 2), dimension_numbers=("NCHW", "OIHW", "NCHW"),
    ) + b_deconv.reshape(1, -1, 1, 1)
    mean = y.mean(axis=(0, 2, 3), keepdims=True)
    var = ((y - mean) ** 2).mean(axis=(0, 2, 3), keepdims=True)
    yn = (y - mean) / jnp.sqrt(var + eps)
    yn = yn * gamma.reshape(1, -1, 1, 1) + beta.reshape(1, -1, 1, 1)
    return jnp.maximum(yn, 0.0)


if __name__ == "__main__":
    key = jax.random.PRNGKey(0)
    N, C_in, H, W = 2, 4, 16, 16
    C_out = 8  # must be even (module assertion)

    k1, k2, k3 = jax.random.split(key, 3)
    x = jax.random.normal(k1, (N, C_in, H, W), jnp.float32)
    w_deconv = jax.random.normal(k2, (C_in, C_out, 4, 4), jnp.float32) * 0.1
    b_deconv = jax.random.normal(k3, (C_out,), jnp.float32) * 0.1
    gamma = jnp.ones((C_out,), jnp.float32)   # BatchNorm2d default weight
    beta = jnp.zeros((C_out,), jnp.float32)   # BatchNorm2d default bias

    fe2 = jax.jit(factorized_expansion2)
    out = fe2(x, w_deconv, b_deconv, gamma, beta)
    out = jax.block_until_ready(out)
    assert out.shape == (N, C_out, 2 * H, 2 * W), out.shape

    ref = _reference(x, w_deconv, b_deconv, gamma, beta)
    assert jnp.allclose(out, ref, atol=1e-4, rtol=1e-4), float(jnp.abs(out - ref).max())

    print("KERNEL_OK")
</pallas_src>

<mosaic_0001>
module attributes {stable_mosaic.version = 11 : i64} {
  func.func @_bn_relu_kernel(%arg0: i32, %arg1: memref<16x1024xf32, #tpu.memory_space<vmem>>, %arg2: memref<16x1xf32, #tpu.memory_space<vmem>>, %arg3: memref<16x1xf32, #tpu.memory_space<vmem>>, %arg4: memref<16x1xf32, #tpu.memory_space<vmem>>, %arg5: memref<16x1xf32, #tpu.memory_space<vmem>>, %arg6: memref<16x1024xf32, #tpu.memory_space<vmem>>) attributes {dimension_semantics = [#tpu.dimension_semantics<parallel>], iteration_bounds = array<i64: 1>, scalar_prefetch = 0 : i64, scratch_operands = 0 : i64, tpu.core_type = #tpu.core_type<tc>, window_params = [{transform_indices = @transform_0, window_bounds = array<i64: 16, 1024>}, {transform_indices = @transform_1, window_bounds = array<i64: 16, 1>}, {transform_indices = @transform_2, window_bounds = array<i64: 16, 1>}, {transform_indices = @transform_3, window_bounds = array<i64: 16, 1>}, {transform_indices = @transform_4, window_bounds = array<i64: 16, 1>}, {transform_indices = @transform_5, window_bounds = array<i64: 16, 1024>}]} {
    %c0 = arith.constant 0 : index
    %c0_0 = arith.constant 0 : index
    %0 = vector.load %arg2[%c0, %c0_0] : memref<16x1xf32, #tpu.memory_space<vmem>>, vector<16x1xf32>
    %cst = arith.constant 4.8828125E-4 : f32
    %1 = vector.broadcast %cst : f32 to vector<16x1xf32>
    %2 = arith.mulf %0, %1 : vector<16x1xf32>
    %c0_1 = arith.constant 0 : index
    %c0_2 = arith.constant 0 : index
    %3 = vector.load %arg3[%c0_1, %c0_2] : memref<16x1xf32, #tpu.memory_space<vmem>>, vector<16x1xf32>
    %cst_3 = arith.constant 4.8828125E-4 : f32
    %4 = vector.broadcast %cst_3 : f32 to vector<16x1xf32>
    %5 = arith.mulf %3, %4 : vector<16x1xf32>
    %6 = arith.mulf %2, %2 : vector<16x1xf32>
    %7 = arith.subf %5, %6 : vector<16x1xf32>
    %cst_4 = arith.constant 9.99999974E-6 : f32
    %8 = vector.broadcast %cst_4 : f32 to vector<16x1xf32>
    %9 = arith.addf %7, %8 : vector<16x1xf32>
    %10 = math.rsqrt %9 : vector<16x1xf32>
    %c0_5 = arith.constant 0 : index
    %c0_6 = arith.constant 0 : index
    %11 = vector.load %arg4[%c0_5, %c0_6] : memref<16x1xf32, #tpu.memory_space<vmem>>, vector<16x1xf32>
    %12 = arith.mulf %10, %11 : vector<16x1xf32>
    %c0_7 = arith.constant 0 : index
    %c0_8 = arith.constant 0 : index
    %13 = vector.load %arg1[%c0_7, %c0_8] : memref<16x1024xf32, #tpu.memory_space<vmem>>, vector<16x1024xf32>
    %14 = vector.broadcast %2 : vector<16x1xf32> to vector<16x1024xf32>
    %15 = arith.subf %13, %14 : vector<16x1024xf32>
    %16 = vector.broadcast %12 : vector<16x1xf32> to vector<16x1024xf32>
    %17 = arith.mulf %15, %16 : vector<16x1024xf32>
    %c0_9 = arith.constant 0 : index
    %c0_10 = arith.constant 0 : index
    %18 = vector.load %arg5[%c0_9, %c0_10] : memref<16x1xf32, #tpu.memory_space<vmem>>, vector<16x1xf32>
    %19 = vector.broadcast %18 : vector<16x1xf32> to vector<16x1024xf32>
    %20 = arith.addf %17, %19 : vector<16x1024xf32>
    %cst_11 = arith.constant 0.000000e+00 : f32
    %21 = vector.broadcast %cst_11 : f32 to vector<16x1024xf32>
    %22 = arith.maximumf %20, %21 : vector<16x1024xf32>
    %c0_12 = arith.constant 0 : index
    %c0_13 = arith.constant 0 : index
    %23 = vector.load %arg6[%c0_12, %c0_13] : memref<16x1024xf32, #tpu.memory_space<vmem>>, vector<16x1024xf32>
    tpu.vector_store %arg6[%c0_12, %c0_13], %22 {strides = array<i32>} : memref<16x1024xf32, #tpu.memory_space<vmem>>, vector<16x1024xf32>,
    return
  }
  func.func @transform_0(%arg0: i32) -> (i32, i32) {
    %c0_i32 = arith.constant 0 : i32
    %c0_i32_0 = arith.constant 0 : i32
    return %arg0, %c0_i32 : i32, i32
  }
  func.func @transform_1(%arg0: i32) -> (i32, i32) {
    %c0_i32 = arith.constant 0 : i32
    %c0_i32_0 = arith.constant 0 : i32
    return %arg0, %c0_i32 : i32, i32
  }
  func.func @transform_2(%arg0: i32) -> (i32, i32) {
    %c0_i32 = arith.constant 0 : i32
    %c0_i32_0 = arith.constant 0 : i32
    return %arg0, %c0_i32 : i32, i32
  }
  func.func @transform_3(%arg0: i32) -> (i32, i32) {
    %c0_i32 = arith.constant 0 : i32
    %c0_i32_0 = arith.constant 0 : i32
    return %arg0, %c0_i32 : i32, i32
  }
  func.func @transform_4(%arg0: i32) -> (i32, i32) {
    %c0_i32 = arith.constant 0 : i32
    %c0_i32_0 = arith.constant 0 : i32
    return %arg0, %c0_i32 : i32, i32
  }
  func.func @transform_5(%arg0: i32) -> (i32, i32) {
    %c0_i32 = arith.constant 0 : i32
    %c0_i32_0 = arith.constant 0 : i32
    return %arg0, %c0_i32 : i32, i32
  }
}

module attributes {stable_mosaic.version = 11 : i64} {
  func.func @_deconv_kernel(%arg0: i32, %arg1: memref<1x4x4x576xf32, #tpu.memory_space<vmem>>, %arg2: memref<2x2x4x8x4xf32, #tpu.memory_space<vmem>>, %arg3: memref<8x1xf32, #tpu.memory_space<vmem>>, %arg4: memref<1x8x1024xf32, #tpu.memory_space<vmem>>, %arg5: memref<1x8x1xf32, #tpu.memory_space<vmem>>, %arg6: memref<1x8x1xf32, #tpu.memory_space<vmem>>) attributes {dimension_semantics = [#tpu.dimension_semantics<parallel>], iteration_bounds = array<i64: 2>, scalar_prefetch = 0 : i64, scratch_operands = 0 : i64, tpu.core_type = #tpu.core_type<tc>, window_params = [{transform_indices = @transform_0, window_bounds = array<i64: 1, 4, 4, 576>}, {pipeline_mode = #tpu.pipeline_mode<synchronous>, transform_indices = @transform_1, window_bounds = array<i64: 2, 2, 4, 8, 4>}, {pipeline_mode = #tpu.pipeline_mode<synchronous>, transform_indices = @transform_2, window_bounds = array<i64: 8, 1>}, {transform_indices = @transform_3, window_bounds = array<i64: 1, 8, 1024>}, {transform_indices = @transform_4, window_bounds = array<i64: 1, 8, 1>}, {transform_indices = @transform_5, window_bounds = array<i64: 1, 8, 1>}]} {
    %cst = arith.constant 0.000000e+00 : f32
    %0 = vector.broadcast %cst : f32 to vector<8x1xf32>
    %cst_0 = arith.constant 0.000000e+00 : f32
    %1 = vector.broadcast %cst_0 : f32 to vector<8x1xf32>
    %cst_1 = arith.constant 0.000000e+00 : f32
    %2 = vector.broadcast %cst_1 : f32 to vector<8x512xf32>
    %c0 = arith.constant 0 : index
    %c0_2 = arith.constant 0 : index
    %c0_3 = arith.constant 0 : index
    %c0_4 = arith.constant 0 : index
    %c0_5 = arith.constant 0 : index
    %3 = vector.load %arg2[%c0, %c0_2, %c0_3, %c0_4, %c0_5] : memref<2x2x4x8x4xf32, #tpu.memory_space<vmem>>, vector<1x1x1x8x4xf32>
    %4 = vector.shape_cast %3 : vector<1x1x1x8x4xf32> to vector<8x4xf32>
    %c0_6 = arith.constant 0 : index
    %c0_7 = arith.constant 0 : index
    %c0_8 = arith.constant 0 : index
    %c0_9 = arith.constant 0 : index
    %5 = vector.load %arg1[%c0_6, %c0_7, %c0_8, %c0_9] : memref<1x4x4x576xf32, #tpu.memory_space<vmem>>, vector<1x1x4x512xf32>
    %6 = vector.shape_cast %5 : vector<1x1x4x512xf32> to vector<4x512xf32>
    %cst_10 = arith.constant dense<0.000000e+00> : vector<8x512xf32>
    %7 = tpu.matmul %4, %6, %cst_10 {dimension_numbers = #tpu.dot_dimension_numbers<[1], [0], [0], [1], [0, 0, 1, 1], [], []>} : vector<8x4xf32>, vector<4x512xf32>, vector<8x512xf32> -> vector<8x512xf32>
    %8 = arith.addf %2, %7 : vector<8x512xf32>
    %c0_11 = arith.constant 0 : index
    %c0_12 = arith.constant 0 : index
    %c1 = arith.constant 1 : index
    %c0_13 = arith.constant 0 : index
    %c0_14 = arith.constant 0 : index
    %9 = vector.load %arg2[%c0_11, %c0_12, %c1, %c0_13, %c0_14] : memref<2x2x4x8x4xf32, #tpu.memory_space<vmem>>, vector<1x1x1x8x4xf32>
    %10 = vector.shape_cast %9 : vector<1x1x1x8x4xf32> to vector<8x4xf32>
    %c0_15 = arith.constant 0 : index
    %c1_16 = arith.constant 1 : index
    %c0_17 = arith.constant 0 : index
    %c0_18 = arith.constant 0 : index
    %11 = vector.load %arg1[%c0_15, %c1_16, %c0_17, %c0_18] : memref<1x4x4x576xf32, #tpu.memory_space<vmem>>, vector<1x1x4x512xf32>
    %12 = vector.shape_cast %11 : vector<1x1x4x512xf32> to vector<4x512xf32>
    %cst_19 = arith.constant dense<0.000000e+00> : vector<8x512xf32>
    %13 = tpu.matmul %10, %12, %cst_19 {dimension_numbers = #tpu.dot_dimension_numbers<[1], [0], [0], [1], [0, 0, 1, 1], [], []>} : vector<8x4xf32>, vector<4x512xf32>, vector<8x512xf32> -> vector<8x512xf32>
    %14 = arith.addf %8, %13 : vector<8x512xf32>
    %c0_20 = arith.constant 0 : index
    %c0_21 = arith.constant 0 : index
    %c2 = arith.constant 2 : index
    %c0_22 = arith.constant 0 : index
    %c0_23 = arith.constant 0 : index
    %15 = vector.load %arg2[%c0_20, %c0_21, %c2, %c0_22, %c0_23] : memref<2x2x4x8x4xf32, #tpu.memory_space<vmem>>, vector<1x1x1x8x4xf32>
    %16 = vector.shape_cast %15 : vector<1x1x1x8x4xf32> to vector<8x4xf32>
    %c0_24 = arith.constant 0 : index
    %c2_25 = arith.constant 2 : index
    %c0_26 = arith.constant 0 : index
    %c0_27 = arith.constant 0 : index
    %17 = vector.load %arg1[%c0_24, %c2_25, %c0_26, %c0_27] : memref<1x4x4x576xf32, #tpu.memory_space<vmem>>, vector<1x1x4x512xf32>
    %18 = vector.shape_cast %17 : vector<1x1x4x512xf32> to vector<4x512xf32>
    %cst_28 = arith.constant dense<0.000000e+00> : vector<8x512xf32>
    %19 = tpu.matmul %16, %18, %cst_28 {dimension_numbers = #tpu.dot_dimension_numbers<[1], [0], [0], [1], [0, 0, 1, 1], [], []>} : vector<8x4xf32>, vector<4x512xf32>, vector<8x512xf32> -> vector<8x512xf32>
    %20 = arith.addf %14, %19 : vector<8x512xf32>
    %c0_29 = arith.constant 0 : index
    %c0_30 = arith.constant 0 : index
    %c3 = arith.constant 3 : index
    %c0_31 = arith.constant 0 : index
    %c0_32 = arith.constant 0 : index
    %21 = vector.load %arg2[%c0_29, %c0_30, %c3, %c0_31, %c0_32] : memref<2x2x4x8x4xf32, #tpu.memory_space<vmem>>, vector<1x1x1x8x4xf32>
    %22 = vector.shape_cast %21 : vector<1x1x1x8x4xf32> to vector<8x4xf32>
    %c0_33 = arith.constant 0 : index
    %c3_34 = arith.constant 3 : index
    %c0_35 = arith.constant 0 : index
    %c0_36 = arith.constant 0 : index
    %23 = vector.load %arg1[%c0_33, %c3_34, %c0_35, %c0_36] : memref<1x4x4x576xf32, #tpu.memory_space<vmem>>, vector<1x1x4x512xf32>
    %24 = vector.shape_cast %23 : vector<1x1x4x512xf32> to vector<4x512xf32>
    %cst_37 = arith.constant dense<0.000000e+00> : vector<8x512xf32>
    %25 = tpu.matmul %22, %24, %cst_37 {dimension_numbers = #tpu.dot_dimension_numbers<[1], [0], [0], [1], [0, 0, 1, 1], [], []>} : vector<8x4xf32>, vector<4x512xf32>, vector<8x512xf32> -> vector<8x512xf32>
    %26 = arith.addf %20, %25 : vector<8x512xf32>
    %c1_38 = arith.constant 1 : index
    %c0_39 = arith.constant 0 : index
    %c0_40 = arith.constant 0 : index
    %c0_41 = arith.constant 0 : index
    %c0_42 = arith.constant 0 : index
    %27 = vector.load %arg2[%c1_38, %c0_39, %c0_40, %c0_41, %c0_42] : memref<2x2x4x8x4xf32, #tpu.memory_space<vmem>>, vector<1x1x1x8x4xf32>
    %28 = vector.shape_cast %27 : vector<1x1x1x8x4xf32> to vector<8x4xf32>
    %c0_43 = arith.constant 0 : index
    %c0_44 = arith.constant 0 : index
    %c0_45 = arith.constant 0 : index
    %c32 = arith.constant 32 : index
    %29 = vector.load %arg1[%c0_43, %c0_44, %c0_45, %c32] : memref<1x4x4x576xf32, #tpu.memory_space<vmem>>, vector<1x1x4x512xf32>
    %30 = vector.shape_cast %29 : vector<1x1x4x512xf32> to vector<4x512xf32>
    %cst_46 = arith.constant dense<0.000000e+00> : vector<8x512xf32>
    %31 = tpu.matmul %28, %30, %cst_46 {dimension_numbers = #tpu.dot_dimension_numbers<[1], [0], [0], [1], [0, 0, 1, 1], [], []>} : vector<8x4xf32>, vector<4x512xf32>, vector<8x512xf32> -> vector<8x512xf32>
    %32 = arith.addf %26, %31 : vector<8x512xf32>
    %c1_47 = arith.constant 1 : index
    %c0_48 = arith.constant 0 : index
    %c1_49 = arith.constant 1 : index
    %c0_50 = arith.constant 0 : index
    %c0_51 = arith.constant 0 : index
    %33 = vector.load %arg2[%c1_47, %c0_48, %c1_49, %c0_50, %c0_51] : memref<2x2x4x8x4xf32, #tpu.memory_space<vmem>>, vector<1x1x1x8x4xf32>
    %34 = vector.shape_cast %33 : vector<1x1x1x8x4xf32> to vector<8x4xf32>
    %c0_52 = arith.constant 0 : index
    %c1_53 = arith.constant 1 : index
    %c0_54 = arith.constant 0 : index
    %c32_55 = arith.constant 32 : index
    %35 = vector.load %arg1[%c0_52, %c1_53, %c0_54, %c32_55] : memref<1x4x4x576xf32, #tpu.memory_space<vmem>>, vector<1x1x4x512xf32>
    %36 = vector.shape_cast %35 : vector<1x1x4x512xf32> to vector<4x512xf32>
    %cst_56 = arith.constant dense<0.000000e+00> : vector<8x512xf32>
    %37 = tpu.matmul %34, %36, %cst_56 {dimension_numbers = #tpu.dot_dimension_numbers<[1], [0], [0], [1], [0, 0, 1, 1], [], []>} : vector<8x4xf32>, vector<4x512xf32>, vector<8x512xf32> -> vector<8x512xf32>
    %38 = arith.addf %32, %37 : vector<8x512xf32>
    %c1_57 = arith.constant 1 : index
    %c0_58 = arith.constant 0 : index
    %c2_59 = arith.constant 2 : index
    %c0_60 = arith.constant 0 : index
    %c0_61 = arith.constant 0 : index
    %39 = vector.load %arg2[%c1_57, %c0_58, %c2_59, %c0_60, %c0_61] : memref<2x2x4x8x4xf32, #tpu.memory_space<vmem>>, vector<1x1x1x8x4xf32>
    %40 = vector.shape_cast %39 : vector<1x1x1x8x4xf32> to vector<8x4xf32>
    %c0_62 = arith.constant 0 : index
    %c2_63 = arith.constant 2 : index
    %c0_64 = arith.constant 0 : index
    %c32_65 = arith.constant 32 : index
    %41 = vector.load %arg1[%c0_62, %c2_63, %c0_64, %c32_65] : memref<1x4x4x576xf32, #tpu.memory_space<vmem>>, vector<1x1x4x512xf32>
    %42 = vector.shape_cast %41 : vector<1x1x4x512xf32> to vector<4x512xf32>
    %cst_66 = arith.constant dense<0.000000e+00> : vector<8x512xf32>
    %43 = tpu.matmul %40, %42, %cst_66 {dimension_numbers = #tpu.dot_dimension_numbers<[1], [0], [0], [1], [0, 0, 1, 1], [], []>} : vector<8x4xf32>, vector<4x512xf32>, vector<8x512xf32> -> vector<8x512xf32>
    %44 = arith.addf %38, %43 : vector<8x512xf32>
    %c1_67 = arith.constant 1 : index
    %c0_68 = arith.constant 0 : index
    %c3_69 = arith.constant 3 : index
    %c0_70 = arith.constant 0 : index
    %c0_71 = arith.constant 0 : index
    %45 = vector.load %arg2[%c1_67, %c0_68, %c3_69, %c0_70, %c0_71] : memref<2x2x4x8x4xf32, #tpu.memory_space<vmem>>, vector<1x1x1x8x4xf32>
    %46 = vector.shape_cast %45 : vector<1x1x1x8x4xf32> to vector<8x4xf32>
    %c0_72 = arith.constant 0 : index
    %c3_73 = arith.constant 3 : index
    %c0_74 = arith.constant 0 : index
    %c32_75 = arith.constant 32 : index
    %47 = vector.load %arg1[%c0_72, %c3_73, %c0_74, %c32_75] : memref<1x4x4x576xf32, #tpu.memory_space<vmem>>, vector<1x1x4x512xf32>
    %48 = vector.shape_cast %47 : vector<1x1x4x512xf32> to vector<4x512xf32>
    %cst_76 = arith.constant dense<0.000000e+00> : vector<8x512xf32>
    %49 = tpu.matmul %46, %48, %cst_76 {dimension_numbers = #tpu.dot_dimension_numbers<[1], [0], [0], [1], [0, 0, 1, 1], [], []>} : vector<8x4xf32>, vector<4x512xf32>, vector<8x512xf32> -> vector<8x512xf32>
    %50 = arith.addf %44, %49 : vector<8x512xf32>
    %c0_77 = arith.constant 0 : index
    %c0_78 = arith.constant 0 : index
    %51 = vector.load %arg3[%c0_77, %c0_78] : memref<8x1xf32, #tpu.memory_space<vmem>>, vector<8x1xf32>
    %52 = vector.broadcast %51 : vector<8x1xf32> to vector<8x512xf32>
    %53 = arith.addf %50, %52 : vector<8x512xf32>
    %cst_79 = arith.constant dense<0.000000e+00> : vector<8xf32>
    %54 = vector.multi_reduction <add>, %53, %cst_79 [1] : vector<8x512xf32> to vector<8xf32>
    %55 = vector.shape_cast %54 : vector<8xf32> to vector<8x1xf32>
    %56 = arith.addf %0, %55 : vector<8x1xf32>
    %57 = arith.mulf %53, %53 : vector<8x512xf32>
    %cst_80 = arith.constant dense<0.000000e+00> : vector<8xf32>
    %58 = vector.multi_reduction <add>, %57, %cst_80 [1] : vector<8x512xf32> to vector<8xf32>
    %59 = vector.shape_cast %58 : vector<8xf32> to vector<8x1xf32>
    %60 = arith.addf %1, %59 : vector<8x1xf32>
    %61 = vector.extract_strided_slice %53 {offsets = [0, 0], sizes = [8, 32], strides = [1, 1]} : vector<8x512xf32> to vector<8x32xf32>
    %c0_81 = arith.constant 0 : index
    %c0_82 = arith.constant 0 : index
    %c0_83 = arith.constant 0 : index
    %62 = vector.load %arg4[%c0_81, %c0_82, %c0_83] : memref<1x8x1024xf32, #tpu.memory_space<vmem>>, vector<1x8x32xf32>
    %63 = vector.shape_cast %62 : vector<1x8x32xf32> to vector<8x32xf32>
    %64 = vector.shape_cast %61 : vector<8x32xf32> to vector<1x8x32xf32>
    tpu.vector_store %arg4[%c0_81, %c0_82, %c0_83], %64 {strides = array<i32>} : memref<1x8x1024xf32, #tpu.memory_space<vmem>>, vector<1x8x32xf32>,
    %65 = vector.extract_strided_slice %53 {offsets = [0, 32], sizes = [8, 32], strides = [1, 1]} : vector<8x512xf32> to vector<8x32xf32>
    %c0_84 = arith.constant 0 : index
    %c0_85 = arith.constant 0 : index
    %c64 = arith.constant 64 : index
    %66 = vector.load %arg4[%c0_84, %c0_85, %c64] : memref<1x8x1024xf32, #tpu.memory_space<vmem>>, vector<1x8x32xf32>
    %67 = vector.shape_cast %66 : vector<1x8x32xf32> to vector<8x32xf32>
    %68 = vector.shape_cast %65 : vector<8x32xf32> to vector<1x8x32xf32>
    tpu.vector_store %arg4[%c0_84, %c0_85, %c64], %68 {strides = array<i32>} : memref<1x8x1024xf32, #tpu.memory_space<vmem>>, vector<1x8x32xf32>,
    %69 = vector.extract_strided_slice %53 {offsets = [0, 64], sizes = [8, 32], strides = [1, 1]} : vector<8x512xf32> to vector<8x32xf32>
    %c0_86 = arith.constant 0 : index
    %c0_87 = arith.constant 0 : index
    %c128 = arith.constant 128 : index
    %70 = vector.load %arg4[%c0_86, %c0_87, %c128] : memref<1x8x1024xf32, #tpu.memory_space<vmem>>, vector<1x8x32xf32>
    %71 = vector.shape_cast %70 : vector<1x8x32xf32> to vector<8x32xf32>
    %72 = vector.shape_cast %69 : vector<8x32xf32> to vector<1x8x32xf32>
    tpu.vector_store %arg4[%c0_86, %c0_87, %c128], %72 {strides = array<i32>} : memref<1x8x1024xf32, #tpu.memory_space<vmem>>, vector<1x8x32xf32>,
    %73 = vector.extract_strided_slice %53 {offsets = [0, 96], sizes = [8, 32], strides = [1, 1]} : vector<8x512xf32> to vector<8x32xf32>
    %c0_88 = arith.constant 0 : index
    %c0_89 = arith.constant 0 : index
    %c192 = arith.constant 192 : index
    %74 = vector.load %arg4[%c0_88, %c0_89, %c192] : memref<1x8x1024xf32, #tpu.memory_space<vmem>>, vector<1x8x32xf32>
    %75 = vector.shape_cast %74 : vector<1x8x32xf32> to vector<8x32xf32>
    %76 = vector.shape_cast %73 : vector<8x32xf32> to vector<1x8x32xf32>
    tpu.vector_store %arg4[%c0_88, %c0_89, %c192], %76 {strides = array<i32>} : memref<1x8x1024xf32, #tpu.memory_space<vmem>>, vector<1x8x32xf32>,
    %77 = vector.extract_strided_slice %53 {offsets = [0, 128], sizes = [8, 32], strides = [1, 1]} : vector<8x512xf32> to vector<8x32xf32>
    %c0_90 = arith.constant 0 : index
    %c0_91 = arith.constant 0 : index
    %c256 = arith.constant 256 : index
    %78 = vector.load %arg4[%c0_90, %c0_91, %c256] : memref<1x8x1024xf32, #tpu.memory_space<vmem>>, vector<1x8x32xf32>
    %79 = vector.shape_cast %78 : vector<1x8x32xf32> to vector<8x32xf32>
    %80 = vector.shape_cast %77 : vector<8x32xf32> to vector<1x8x32xf32>
    tpu.vector_store %arg4[%c0_90, %c0_91, %c256], %80 {strides = array<i32>} : memref<1x8x1024xf32, #tpu.memory_space<vmem>>, vector<1x8x32xf32>,
    %81 = vector.extract_strided_slice %53 {offsets = [0, 160], sizes = [8, 32], strides = [1, 1]} : vector<8x512xf32> to vector<8x32xf32>
    %c0_92 = arith.constant 0 : index
    %c0_93 = arith.constant 0 : index
    %c320 = arith.constant 320 : index
    %82 = vector.load %arg4[%c0_92, %c0_93, %c320] : memref<1x8x1024xf32, #tpu.memory_space<vmem>>, vector<1x8x32xf32>
    %83 = vector.shape_cast %82 : vector<1x8x32xf32> to vector<8x32xf32>
    %84 = vector.shape_cast %81 : vector<8x32xf32> to vector<1x8x32xf32>
    tpu.vector_store %arg4[%c0_92, %c0_93, %c320], %84 {strides = array<i32>} : memref<1x8x1024xf32, #tpu.memory_space<vmem>>, vector<1x8x32xf32>,
    %85 = vector.extract_strided_slice %53 {offsets = [0, 192], sizes = [8, 32], strides = [1, 1]} : vector<8x512xf32> to vector<8x32xf32>
    %c0_94 = arith.constant 0 : index
    %c0_95 = arith.constant 0 : index
    %c384 = arith.constant 384 : index
    %86 = vector.load %arg4[%c0_94, %c0_95, %c384] : memref<1x8x1024xf32, #tpu.memory_space<vmem>>, vector<1x8x32xf32>
    %87 = vector.shape_cast %86 : vector<1x8x32xf32> to vector<8x32xf32>
    %88 = vector.shape_cast %85 : vector<8x32xf32> to vector<1x8x32xf32>
    tpu.vector_store %arg4[%c0_94, %c0_95, %c384], %88 {strides = array<i32>} : memref<1x8x1024xf32, #tpu.memory_space<vmem>>, vector<1x8x32xf32>,
    %89 = vector.extract_strided_slice %53 {offsets = [0, 224], sizes = [8, 32], strides = [1, 1]} : vector<8x512xf32> to vector<8x32xf32>
    %c0_96 = arith.constant 0 : index
    %c0_97 = arith.constant 0 : index
    %c448 = arith.constant 448 : index
    %90 = vector.load %arg4[%c0_96, %c0_97, %c448] : memref<1x8x1024xf32, #tpu.memory_space<vmem>>, vector<1x8x32xf32>
    %91 = vector.shape_cast %90 : vector<1x8x32xf32> to vector<8x32xf32>
    %92 = vector.shape_cast %89 : vector<8x32xf32> to vector<1x8x32xf32>
    tpu.vector_store %arg4[%c0_96, %c0_97, %c448], %92 {strides = array<i32>} : memref<1x8x1024xf32, #tpu.memory_space<vmem>>, vector<1x8x32xf32>,
    %93 = vector.extract_strided_slice %53 {offsets = [0, 256], sizes = [8, 32], strides = [1, 1]} : vector<8x512xf32> to vector<8x32xf32>
    %c0_98 = arith.constant 0 : index
    %c0_99 = arith.constant 0 : index
    %c512 = arith.constant 512 : index
    %94 = vector.load %arg4[%c0_98, %c0_99, %c512] : memref<1x8x1024xf32, #tpu.memory_space<vmem>>, vector<1x8x32xf32>
    %95 = vector.shape_cast %94 : vector<1x8x32xf32> to vector<8x32xf32>
    %96 = vector.shape_cast %93 : vector<8x32xf32> to vector<1x8x32xf32>
    tpu.vector_store %arg4[%c0_98, %c0_99, %c512], %96 {strides = array<i32>} : memref<1x8x1024xf32, #tpu.memory_space<vmem>>, vector<1x8x32xf32>,
    %97 = vector.extract_strided_slice %53 {offsets = [0, 288], sizes = [8, 32], strides = [1, 1]} : vector<8x512xf32> to vector<8x32xf32>
    %c0_100 = arith.constant 0 : index
    %c0_101 = arith.constant 0 : index
    %c576 = arith.constant 576 : index
    %98 = vector.load %arg4[%c0_100, %c0_101, %c576] : memref<1x8x1024xf32, #tpu.memory_space<vmem>>, vector<1x8x32xf32>
    %99 = vector.shape_cast %98 : vector<1x8x32xf32> to vector<8x32xf32>
    %100 = vector.shape_cast %97 : vector<8x32xf32> to vector<1x8x32xf32>
    tpu.vector_store %arg4[%c0_100, %c0_101, %c576], %100 {strides = array<i32>} : memref<1x8x1024xf32, #tpu.memory_space<vmem>>, vector<1x8x32xf32>,
    %101 = vector.extract_strided_slice %53 {offsets = [0, 320], sizes = [8, 32], strides = [1, 1]} : vector<8x512xf32> to vector<8x32xf32>
    %c0_102 = arith.constant 0 : index
    %c0_103 = arith.constant 0 : index
    %c640 = arith.constant 640 : index
    %102 = vector.load %arg4[%c0_102, %c0_103, %c640] : memref<1x8x1024xf32, #tpu.memory_space<vmem>>, vector<1x8x32xf32>
    %103 = vector.shape_cast %102 : vector<1x8x32xf32> to vector<8x32xf32>
    %104 = vector.shape_cast %101 : vector<8x32xf32> to vector<1x8x32xf32>
    tpu.vector_store %arg4[%c0_102, %c0_103, %c640], %104 {strides = array<i32>} : memref<1x8x1024xf32, #tpu.memory_space<vmem>>, vector<1x8x32xf32>,
    %105 = vector.extract_strided_slice %53 {offsets = [0, 352], sizes = [8, 32], strides = [1, 1]} : vector<8x512xf32> to vector<8x32xf32>
    %c0_104 = arith.constant 0 : index
    %c0_105 = arith.constant 0 : index
    %c704 = arith.constant 704 : index
    %106 = vector.load %arg4[%c0_104, %c0_105, %c704] : memref<1x8x1024xf32, #tpu.memory_space<vmem>>, vector<1x8x32xf32>
    %107 = vector.shape_cast %106 : vector<1x8x32xf32> to vector<8x32xf32>
    %108 = vector.shape_cast %105 : vector<8x32xf32> to vector<1x8x32xf32>
    tpu.vector_store %arg4[%c0_104, %c0_105, %c704], %108 {strides = array<i32>} : memref<1x8x1024xf32, #tpu.memory_space<vmem>>, vector<1x8x32xf32>,
    %109 = vector.extract_strided_slice %53 {offsets = [0, 384], sizes = [8, 32], strides = [1, 1]} : vector<8x512xf32> to vector<8x32xf32>
    %c0_106 = arith.constant 0 : index
    %c0_107 = arith.constant 0 : index
    %c768 = arith.constant 768 : index
    %110 = vector.load %arg4[%c0_106, %c0_107, %c768] : memref<1x8x1024xf32, #tpu.memory_space<vmem>>, vector<1x8x32xf32>
    %111 = vector.shape_cast %110 : vector<1x8x32xf32> to vector<8x32xf32>
    %112 = vector.shape_cast %109 : vector<8x32xf32> to vector<1x8x32xf32>
    tpu.vector_store %arg4[%c0_106, %c0_107, %c768], %112 {strides = array<i32>} : memref<1x8x1024xf32, #tpu.memory_space<vmem>>, vector<1x8x32xf32>,
    %113 = vector.extract_strided_slice %53 {offsets = [0, 416], sizes = [8, 32], strides = [1, 1]} : vector<8x512xf32> to vector<8x32xf32>
    %c0_108 = arith.constant 0 : index
    %c0_109 = arith.constant 0 : index
    %c832 = arith.constant 832 : index
    %114 = vector.load %arg4[%c0_108, %c0_109, %c832] : memref<1x8x1024xf32, #tpu.memory_space<vmem>>, vector<1x8x32xf32>
    %115 = vector.shape_cast %114 : vector<1x8x32xf32> to vector<8x32xf32>
    %116 = vector.shape_cast %113 : vector<8x32xf32> to vector<1x8x32xf32>
    tpu.vector_store %arg4[%c0_108, %c0_109, %c832], %116 {strides = array<i32>} : memref<1x8x1024xf32, #tpu.memory_space<vmem>>, vector<1x8x32xf32>,
    %117 = vector.extract_strided_slice %53 {offsets = [0, 448], sizes = [8, 32], strides = [1, 1]} : vector<8x512xf32> to vector<8x32xf32>
    %c0_110 = arith.constant 0 : index
    %c0_111 = arith.constant 0 : index
    %c896 = arith.constant 896 : index
    %118 = vector.load %arg4[%c0_110, %c0_111, %c896] : memref<1x8x1024xf32, #tpu.memory_space<vmem>>, vector<1x8x32xf32>
    %119 = vector.shape_cast %118 : vector<1x8x32xf32> to vector<8x32xf32>
    %120 = vector.shape_cast %117 : vector<8x32xf32> to vector<1x8x32xf32>
    tpu.vector_store %arg4[%c0_110, %c0_111, %c896], %120 {strides = array<i32>} : memref<1x8x1024xf32, #tpu.memory_space<vmem>>, vector<1x8x32xf32>,
    %121 = vector.extract_strided_slice %53 {offsets = [0, 480], sizes = [8, 32], strides = [1, 1]} : vector<8x512xf32> to vector<8x32xf32>
    %c0_112 = arith.constant 0 : index
    %c0_113 = arith.constant 0 : index
    %c960 = arith.constant 960 : index
    %122 = vector.load %arg4[%c0_112, %c0_113, %c960] : memref<1x8x1024xf32, #tpu.memory_space<vmem>>, vector<1x8x32xf32>
    %123 = vector.shape_cast %122 : vector<1x8x32xf32> to vector<8x32xf32>
    %124 = vector.shape_cast %121 : vector<8x32xf32> to vector<1x8x32xf32>
    tpu.vector_store %arg4[%c0_112, %c0_113, %c960], %124 {strides = array<i32>} : memref<1x8x1024xf32, #tpu.memory_space<vmem>>, vector<1x8x32xf32>,
    %cst_114 = arith.constant 0.000000e+00 : f32
    %125 = vector.broadcast %cst_114 : f32 to vector<8x512xf32>
    %c0_115 = arith.constant 0 : index
    %c1_116 = arith.constant 1 : index
    %c0_117 = arith.constant 0 : index
    %c0_118 = arith.constant 0 : index
    %c0_119 = arith.constant 0 : index
    %126 = vector.load %arg2[%c0_115, %c1_116, %c0_117, %c0_118, %c0_119] : memref<2x2x4x8x4xf32, #tpu.memory_space<vmem>>, vector<1x1x1x8x4xf32>
    %127 = vector.shape_cast %126 : vector<1x1x1x8x4xf32> to vector<8x4xf32>
    %c0_120 = arith.constant 0 : index
    %c0_121 = arith.constant 0 : index
    %c0_122 = arith.constant 0 : index
    %c32_123 = arith.constant 32 : index
    %128 = vector.load %arg1[%c0_120, %c0_121, %c0_122, %c32_123] : memref<1x4x4x576xf32, #tpu.memory_space<vmem>>, vector<1x1x4x512xf32>
    %129 = vector.shape_cast %128 : vector<1x1x4x512xf32> to vector<4x512xf32>
    %cst_124 = arith.constant dense<0.000000e+00> : vector<8x512xf32>
    %130 = tpu.matmul %127, %129, %cst_124 {dimension_numbers = #tpu.dot_dimension_numbers<[1], [0], [0], [1], [0, 0, 1, 1], [], []>} : vector<8x4xf32>, vector<4x512xf32>, vector<8x512xf32> -> vector<8x512xf32>
    %131 = arith.addf %125, %130 : vector<8x512xf32>
    %c0_125 = arith.constant 0 : index
    %c1_126 = arith.constant 1 : index
    %c1_127 = arith.constant 1 : index
    %c0_128 = arith.constant 0 : index
    %c0_129 = arith.constant 0 : index
    %132 = vector.load %arg2[%c0_125, %c1_126, %c1_127, %c0_128, %c0_129] : memref<2x2x4x8x4xf32, #tpu.memory_space<vmem>>, vector<1x1x1x8x4xf32>
    %133 = vector.shape_cast %132 : vector<1x1x1x8x4xf32> to vector<8x4xf32>
    %c0_130 = arith.constant 0 : index
    %c1_131 = arith.constant 1 : index
    %c0_132 = arith.constant 0 : index
    %c32_133 = arith.constant 32 : index
    %134 = vector.load %arg1[%c0_130, %c1_131, %c0_132, %c32_133] : memref<1x4x4x576xf32, #tpu.memory_space<vmem>>, vector<1x1x4x512xf32>
    %135 = vector.shape_cast %134 : vector<1x1x4x512xf32> to vector<4x512xf32>
    %cst_134 = arith.constant dense<0.000000e+00> : vector<8x512xf32>
    %136 = tpu.matmul %133, %135, %cst_134 {dimension_numbers = #tpu.dot_dimension_numbers<[1], [0], [0], [1], [0, 0, 1, 1], [], []>} : vector<8x4xf32>, vector<4x512xf32>, vector<8x512xf32> -> vector<8x512xf32>
    %137 = arith.addf %131, %136 : vector<8x512xf32>
    %c0_135 = arith.constant 0 : index
    %c1_136 = arith.constant 1 : index
    %c2_137 = arith.constant 2 : index
    %c0_138 = arith.constant 0 : index
    %c0_139 = arith.constant 0 : index
    %138 = vector.load %arg2[%c0_135, %c1_136, %c2_137, %c0_138, %c0_139] : memref<2x2x4x8x4xf32, #tpu.memory_space<vmem>>, vector<1x1x1x8x4xf32>
    %139 = vector.shape_cast %138 : vector<1x1x1x8x4xf32> to vector<8x4xf32>
    %c0_140 = arith.constant 0 : index
    %c2_141 = arith.constant 2 : index
    %c0_142 = arith.constant 0 : index
    %c32_143 = arith.constant 32 : index
    %140 = vector.load %arg1[%c0_140, %c2_141, %c0_142, %c32_143] : memref<1x4x4x576xf32, #tpu.memory_space<vmem>>, vector<1x1x4x512xf32>
    %141 = vector.shape_cast %140 : vector<1x1x4x512xf32> to vector<4x512xf32>
    %cst_144 = arith.constant dense<0.000000e+00> : vector<8x512xf32>
    %142 = tpu.matmul %139, %141, %cst_144 {dimension_numbers = #tpu.dot_dimension_numbers<[1], [0], [0], [1], [0, 0, 1, 1], [], []>} : vector<8x4xf32>, vector<4x512xf32>, vector<8x512xf32> -> vector<8x512xf32>
    %143 = arith.addf %137, %142 : vector<8x512xf32>
    %c0_145 = arith.constant 0 : index
    %c1_146 = arith.constant 1 : index
    %c3_147 = arith.constant 3 : index
    %c0_148 = arith.constant 0 : index
    %c0_149 = arith.constant 0 : index
    %144 = vector.load %arg2[%c0_145, %c1_146, %c3_147, %c0_148, %c0_149] : memref<2x2x4x8x4xf32, #tpu.memory_space<vmem>>, vector<1x1x1x8x4xf32>
    %145 = vector.shape_cast %144 : vector<1x1x1x8x4xf32> to vector<8x4xf32>
    %c0_150 = arith.constant 0 : index
    %c3_151 = arith.constant 3 : index
    %c0_152 = arith.constant 0 : index
    %c32_153 = arith.constant 32 : index
    %146 = vector.load %arg1[%c0_150, %c3_151, %c0_152, %c32_153] : memref<1x4x4x576xf32, #tpu.memory_space<vmem>>, vector<1x1x4x512xf32>
    %147 = vector.shape_cast %146 : vector<1x1x4x512xf32> to vector<4x512xf32>
    %cst_154 = arith.constant dense<0.000000e+00> : vector<8x512xf32>
    %148 = tpu.matmul %145, %147, %cst_154 {dimension_numbers = #tpu.dot_dimension_numbers<[1], [0], [0], [1], [0, 0, 1, 1], [], []>} : vector<8x4xf32>, vector<4x512xf32>, vector<8x512xf32> -> vector<8x512xf32>
    %149 = arith.addf %143, %148 : vector<8x512xf32>
    %c1_155 = arith.constant 1 : index
    %c1_156 = arith.constant 1 : index
    %c0_157 = arith.constant 0 : index
    %c0_158 = arith.constant 0 : index
    %c0_159 = arith.constant 0 : index
    %150 = vector.load %arg2[%c1_155, %c1_156, %c0_157, %c0_158, %c0_159] : memref<2x2x4x8x4xf32, #tpu.memory_space<vmem>>, vector<1x1x1x8x4xf32>
    %151 = vector.shape_cast %150 : vector<1x1x1x8x4xf32> to vector<8x4xf32>
    %c0_160 = arith.constant 0 : index
    %c0_161 = arith.constant 0 : index
    %c0_162 = arith.constant 0 : index
    %c64_163 = arith.constant 64 : index
    %152 = vector.load %arg1[%c0_160, %c0_161, %c0_162, %c64_163] : memref<1x4x4x576xf32, #tpu.memory_space<vmem>>, vector<1x1x4x512xf32>
    %153 = vector.shape_cast %152 : vector<1x1x4x512xf32> to vector<4x512xf32>
    %cst_164 = arith.constant dense<0.000000e+00> : vector<8x512xf32>
    %154 = tpu.matmul %151, %153, %cst_164 {dimension_numbers = #tpu.dot_dimension_numbers<[1], [0], [0], [1], [0, 0, 1, 1], [], []>} : vector<8x4xf32>, vector<4x512xf32>, vector<8x512xf32> -> vector<8x512xf32>
    %155 = arith.addf %149, %154 : vector<8x512xf32>
    %c1_165 = arith.constant 1 : index
    %c1_166 = arith.constant 1 : index
    %c1_167 = arith.constant 1 : index
    %c0_168 = arith.constant 0 : index
    %c0_169 = arith.constant 0 : index
    %156 = vector.load %arg2[%c1_165, %c1_166, %c1_167, %c0_168, %c0_169] : memref<2x2x4x8x4xf32, #tpu.memory_space<vmem>>, vector<1x1x1x8x4xf32>
    %157 = vector.shape_cast %156 : vector<1x1x1x8x4xf32> to vector<8x4xf32>
    %c0_170 = arith.constant 0 : index
    %c1_171 = arith.constant 1 : index
    %c0_172 = arith.constant 0 : index
    %c64_173 = arith.constant 64 : index
    %158 = vector.load %arg1[%c0_170, %c1_171, %c0_172, %c64_173] : memref<1x4x4x576xf32, #tpu.memory_space<vmem>>, vector<1x1x4x512xf32>
    %159 = vector.shape_cast %158 : vector<1x1x4x512xf32> to vector<4x512xf32>
    %cst_174 = arith.constant dense<0.000000e+00> : vector<8x512xf32>
    %160 = tpu.matmul %157, %159, %cst_174 {dimension_numbers = #tpu.dot_dimension_numbers<[1], [0], [0], [1], [0, 0, 1, 1], [], []>} : vector<8x4xf32>, vector<4x512xf32>, vector<8x512xf32> -> vector<8x512xf32>
    %161 = arith.addf %155, %160 : vector<8x512xf32>
    %c1_175 = arith.constant 1 : index
    %c1_176 = arith.constant 1 : index
    %c2_177 = arith.constant 2 : index
    %c0_178 = arith.constant 0 : index
    %c0_179 = arith.constant 0 : index
    %162 = vector.load %arg2[%c1_175, %c1_176, %c2_177, %c0_178, %c0_179] : memref<2x2x4x8x4xf32, #tpu.memory_space<vmem>>, vector<1x1x1x8x4xf32>
    %163 = vector.shape_cast %162 : vector<1x1x1x8x4xf32> to vector<8x4xf32>
    %c0_180 = arith.constant 0 : index
    %c2_181 = arith.constant 2 : index
    %c0_182 = arith.constant 0 : index
    %c64_183 = arith.constant 64 : index
    %164 = vector.load %arg1[%c0_180, %c2_181, %c0_182, %c64_183] : memref<1x4x4x576xf32, #tpu.memory_space<vmem>>, vector<1x1x4x512xf32>
    %165 = vector.shape_cast %164 : vector<1x1x4x512xf32> to vector<4x512xf32>
    %cst_184 = arith.constant dense<0.000000e+00> : vector<8x512xf32>
    %166 = tpu.matmul %163, %165, %cst_184 {dimension_numbers = #tpu.dot_dimension_numbers<[1], [0], [0], [1], [0, 0, 1, 1], [], []>} : vector<8x4xf32>, vector<4x512xf32>, vector<8x512xf32> -> vector<8x512xf32>
    %167 = arith.addf %161, %166 : vector<8x512xf32>
    %c1_185 = arith.constant 1 : index
    %c1_186 = arith.constant 1 : index
    %c3_187 = arith.constant 3 : index
    %c0_188 = arith.constant 0 : index
    %c0_189 = arith.constant 0 : index
    %168 = vector.load %arg2[%c1_185, %c1_186, %c3_187, %c0_188, %c0_189] : memref<2x2x4x8x4xf32, #tpu.memory_space<vmem>>, vector<1x1x1x8x4xf32>
    %169 = vector.shape_cast %168 : vector<1x1x1x8x4xf32> to vector<8x4xf32>
    %c0_190 = arith.constant 0 : index
    %c3_191 = arith.constant 3 : index
    %c0_192 = arith.constant 0 : index
    %c64_193 = arith.constant 64 : index
    %170 = vector.load %arg1[%c0_190, %c3_191, %c0_192, %c64_193] : memref<1x4x4x576xf32, #tpu.memory_space<vmem>>, vector<1x1x4x512xf32>
    %171 = vector.shape_cast %170 : vector<1x1x4x512xf32> to vector<4x512xf32>
    %cst_194 = arith.constant dense<0.000000e+00> : vector<8x512xf32>
    %172 = tpu.matmul %169, %171, %cst_194 {dimension_numbers = #tpu.dot_dimension_numbers<[1], [0], [0], [1], [0, 0, 1, 1], [], []>} : vector<8x4xf32>, vector<4x512xf32>, vector<8x512xf32> -> vector<8x512xf32>
    %173 = arith.addf %167, %172 : vector<8x512xf32>
    %c0_195 = arith.constant 0 : index
    %c0_196 = arith.constant 0 : index
    %174 = vector.load %arg3[%c0_195, %c0_196] : memref<8x1xf32, #tpu.memory_space<vmem>>, vector<8x1xf32>
    %175 = vector.broadcast %174 : vector<8x1xf32> to vector<8x512xf32>
    %176 = arith.addf %173, %175 : vector<8x512xf32>
    %cst_197 = arith.constant dense<0.000000e+00> : vector<8xf32>
    %177 = vector.multi_reduction <add>, %176, %cst_197 [1] : vector<8x512xf32> to vector<8xf32>
    %178 = vector.shape_cast %177 : vector<8xf32> to vector<8x1xf32>
    %179 = arith.addf %56, %178 : vector<8x1xf32>
    %180 = arith.mulf %176, %176 : vector<8x512xf32>
    %cst_198 = arith.constant dense<0.000000e+00> : vector<8xf32>
    %181 = vector.multi_reduction <add>, %180, %cst_198 [1] : vector<8x512xf32> to vector<8xf32>
    %182 = vector.shape_cast %181 : vector<8xf32> to vector<8x1xf32>
    %183 = arith.addf %60, %182 : vector<8x1xf32>
    %184 = vector.extract_strided_slice %176 {offsets = [0, 0], sizes = [8, 32], strides = [1, 1]} : vector<8x512xf32> to vector<8x32xf32>
    %c0_199 = arith.constant 0 : index
    %c0_200 = arith.constant 0 : index
    %c32_201 = arith.constant 32 : index
    %185 = vector.load %arg4[%c0_199, %c0_200, %c32_201] : memref<1x8x1024xf32, #tpu.memory_space<vmem>>, vector<1x8x32xf32>
    %186 = vector.shape_cast %185 : vector<1x8x32xf32> to vector<8x32xf32>
    %187 = vector.shape_cast %184 : vector<8x32xf32> to vector<1x8x32xf32>
    tpu.vector_store %arg4[%c0_199, %c0_200, %c32_201], %187 {strides = array<i32>} : memref<1x8x1024xf32, #tpu.memory_space<vmem>>, vector<1x8x32xf32>,
    %188 = vector.extract_strided_slice %176 {offsets = [0, 32], sizes = [8, 32], strides = [1, 1]} : vector<8x512xf32> to vector<8x32xf32>
    %c0_202 = arith.constant 0 : index
    %c0_203 = arith.constant 0 : index
    %c96 = arith.constant 96 : index
    %189 = vector.load %arg4[%c0_202, %c0_203, %c96] : memref<1x8x1024xf32, #tpu.memory_space<vmem>>, vector<1x8x32xf32>
    %190 = vector.shape_cast %189 : vector<1x8x32xf32> to vector<8x32xf32>
    %191 = vector.shape_cast %188 : vector<8x32xf32> to vector<1x8x32xf32>
    tpu.vector_store %arg4[%c0_202, %c0_203, %c96], %191 {strides = array<i32>} : memref<1x8x1024xf32, #tpu.memory_space<vmem>>, vector<1x8x32xf32>,
    %192 = vector.extract_strided_slice %176 {offsets = [0, 64], sizes = [8, 32], strides = [1, 1]} : vector<8x512xf32> to vector<8x32xf32>
    %c0_204 = arith.constant 0 : index
    %c0_205 = arith.constant 0 : index
    %c160 = arith.constant 160 : index
    %193 = vector.load %arg4[%c0_204, %c0_205, %c160] : memref<1x8x1024xf32, #tpu.memory_space<vmem>>, vector<1x8x32xf32>
    %194 = vector.shape_cast %193 : vector<1x8x32xf32> to vector<8x32xf32>
    %195 = vector.shape_cast %192 : vector<8x32xf32> to vector<1x8x32xf32>
    tpu.vector_store %arg4[%c0_204, %c0_205, %c160], %195 {strides = array<i32>} : memref<1x8x1024xf32, #tpu.memory_space<vmem>>, vector<1x8x32xf32>,
    %196 = vector.extract_strided_slice %176 {offsets = [0, 96], sizes = [8, 32], strides = [1, 1]} : vector<8x512xf32> to vector<8x32xf32>
    %c0_206 = arith.constant 0 : index
    %c0_207 = arith.constant 0 : index
    %c224 = arith.constant 224 : index
    %197 = vector.load %arg4[%c0_206, %c0_207, %c224] : memref<1x8x1024xf32, #tpu.memory_space<vmem>>, vector<1x8x32xf32>
    %198 = vector.shape_cast %197 : vector<1x8x32xf32> to vector<8x32xf32>
    %199 = vector.shape_cast %196 : vector<8x32xf32> to vector<1x8x32xf32>
    tpu.vector_store %arg4[%c0_206, %c0_207, %c224], %199 {strides = array<i32>} : memref<1x8x1024xf32, #tpu.memory_space<vmem>>, vector<1x8x32xf32>,
    %200 = vector.extract_strided_slice %176 {offsets = [0, 128], sizes = [8, 32], strides = [1, 1]} : vector<8x512xf32> to vector<8x32xf32>
    %c0_208 = arith.constant 0 : index
    %c0_209 = arith.constant 0 : index
    %c288 = arith.constant 288 : index
    %201 = vector.load %arg4[%c0_208, %c0_209, %c288] : memref<1x8x1024xf32, #tpu.memory_space<vmem>>, vector<1x8x32xf32>
    %202 = vector.shape_cast %201 : vector<1x8x32xf32> to vector<8x32xf32>
    %203 = vector.shape_cast %200 : vector<8x32xf32> to vector<1x8x32xf32>
    tpu.vector_store %arg4[%c0_208, %c0_209, %c288], %203 {strides = array<i32>} : memref<1x8x1024xf32, #tpu.memory_space<vmem>>, vector<1x8x32xf32>,
    %204 = vector.extract_strided_slice %176 {offsets = [0, 160], sizes = [8, 32], strides = [1, 1]} : vector<8x512xf32> to vector<8x32xf32>
    %c0_210 = arith.constant 0 : index
    %c0_211 = arith.constant 0 : index
    %c352 = arith.constant 352 : index
    %205 = vector.load %arg4[%c0_210, %c0_211, %c352] : memref<1x8x1024xf32, #tpu.memory_space<vmem>>, vector<1x8x32xf32>
    %206 = vector.shape_cast %205 : vector<1x8x32xf32> to vector<8x32xf32>
    %207 = vector.shape_cast %204 : vector<8x32xf32> to vector<1x8x32xf32>
    tpu.vector_store %arg4[%c0_210, %c0_211, %c352], %207 {strides = array<i32>} : memref<1x8x1024xf32, #tpu.memory_space<vmem>>, vector<1x8x32xf32>,
    %208 = vector.extract_strided_slice %176 {offsets = [0, 192], sizes = [8, 32], strides = [1, 1]} : vector<8x512xf32> to vector<8x32xf32>
    %c0_212 = arith.constant 0 : index
    %c0_213 = arith.constant 0 : index
    %c416 = arith.constant 416 : index
    %209 = vector.load %arg4[%c0_212, %c0_213, %c416] : memref<1x8x1024xf32, #tpu.memory_space<vmem>>, vector<1x8x32xf32>
    %210 = vector.shape_cast %209 : vector<1x8x32xf32> to vector<8x32xf32>
    %211 = vector.shape_cast %208 : vector<8x32xf32> to vector<1x8x32xf32>
    tpu.vector_store %arg4[%c0_212, %c0_213, %c416], %211 {strides = array<i32>} : memref<1x8x1024xf32, #tpu.memory_space<vmem>>, vector<1x8x32xf32>,
    %212 = vector.extract_strided_slice %176 {offsets = [0, 224], sizes = [8, 32], strides = [1, 1]} : vector<8x512xf32> to vector<8x32xf32>
    %c0_214 = arith.constant 0 : index
    %c0_215 = arith.constant 0 : index
    %c480 = arith.constant 480 : index
    %213 = vector.load %arg4[%c0_214, %c0_215, %c480] : memref<1x8x1024xf32, #tpu.memory_space<vmem>>, vector<1x8x32xf32>
    %214 = vector.shape_cast %213 : vector<1x8x32xf32> to vector<8x32xf32>
    %215 = vector.shape_cast %212 : vector<8x32xf32> to vector<1x8x32xf32>
    tpu.vector_store %arg4[%c0_214, %c0_215, %c480], %215 {strides = array<i32>} : memref<1x8x1024xf32, #tpu.memory_space<vmem>>, vector<1x8x32xf32>,
    %216 = vector.extract_strided_slice %176 {offsets = [0, 256], sizes = [8, 32], strides = [1, 1]} : vector<8x512xf32> to vector<8x32xf32>
    %c0_216 = arith.constant 0 : index
    %c0_217 = arith.constant 0 : index
    %c544 = arith.constant 544 : index
    %217 = vector.load %arg4[%c0_216, %c0_217, %c544] : memref<1x8x1024xf32, #tpu.memory_space<vmem>>, vector<1x8x32xf32>
    %218 = vector.shape_cast %217 : vector<1x8x32xf32> to vector<8x32xf32>
    %219 = vector.shape_cast %216 : vector<8x32xf32> to vector<1x8x32xf32>
    tpu.vector_store %arg4[%c0_216, %c0_217, %c544], %219 {strides = array<i32>} : memref<1x8x1024xf32, #tpu.memory_space<vmem>>, vector<1x8x32xf32>,
    %220 = vector.extract_strided_slice %176 {offsets = [0, 288], sizes = [8, 32], strides = [1, 1]} : vector<8x512xf32> to vector<8x32xf32>
    %c0_218 = arith.constant 0 : index
    %c0_219 = arith.constant 0 : index
    %c608 = arith.constant 608 : index
    %221 = vector.load %arg4[%c0_218, %c0_219, %c608] : memref<1x8x1024xf32, #tpu.memory_space<vmem>>, vector<1x8x32xf32>
    %222 = vector.shape_cast %221 : vector<1x8x32xf32> to vector<8x32xf32>
    %223 = vector.shape_cast %220 : vector<8x32xf32> to vector<1x8x32xf32>
    tpu.vector_store %arg4[%c0_218, %c0_219, %c608], %223 {strides = array<i32>} : memref<1x8x1024xf32, #tpu.memory_space<vmem>>, vector<1x8x32xf32>,
    %224 = vector.extract_strided_slice %176 {offsets = [0, 320], sizes = [8, 32], strides = [1, 1]} : vector<8x512xf32> to vector<8x32xf32>
    %c0_220 = arith.constant 0 : index
    %c0_221 = arith.constant 0 : index
    %c672 = arith.constant 672 : index
    %225 = vector.load %arg4[%c0_220, %c0_221, %c672] : memref<1x8x1024xf32, #tpu.memory_space<vmem>>, vector<1x8x32xf32>
    %226 = vector.shape_cast %225 : vector<1x8x32xf32> to vector<8x32xf32>
    %227 = vector.shape_cast %224 : vector<8x32xf32> to vector<1x8x32xf32>
    tpu.vector_store %arg4[%c0_220, %c0_221, %c672], %227 {strides = array<i32>} : memref<1x8x1024xf32, #tpu.memory_space<vmem>>, vector<1x8x32xf32>,
    %228 = vector.extract_strided_slice %176 {offsets = [0, 352], sizes = [8, 32], strides = [1, 1]} : vector<8x512xf32> to vector<8x32xf32>
    %c0_222 = arith.constant 0 : index
    %c0_223 = arith.constant 0 : index
    %c736 = arith.constant 736 : index
    %229 = vector.load %arg4[%c0_222, %c0_223, %c736] : memref<1x8x1024xf32, #tpu.memory_space<vmem>>, vector<1x8x32xf32>
    %230 = vector.shape_cast %229 : vector<1x8x32xf32> to vector<8x32xf32>
    %231 = vector.shape_cast %228 : vector<8x32xf32> to vector<1x8x32xf32>
    tpu.vector_store %arg4[%c0_222, %c0_223, %c736], %231 {strides = array<i32>} : memref<1x8x1024xf32, #tpu.memory_space<vmem>>, vector<1x8x32xf32>,
    %232 = vector.extract_strided_slice %176 {offsets = [0, 384], sizes = [8, 32], strides = [1, 1]} : vector<8x512xf32> to vector<8x32xf32>
    %c0_224 = arith.constant 0 : index
    %c0_225 = arith.constant 0 : index
    %c800 = arith.constant 800 : index
    %233 = vector.load %arg4[%c0_224, %c0_225, %c800] : memref<1x8x1024xf32, #tpu.memory_space<vmem>>, vector<1x8x32xf32>
    %234 = vector.shape_cast %233 : vector<1x8x32xf32> to vector<8x32xf32>
    %235 = vector.shape_cast %232 : vector<8x32xf32> to vector<1x8x32xf32>
    tpu.vector_store %arg4[%c0_224, %c0_225, %c800], %235 {strides = array<i32>} : memref<1x8x1024xf32, #tpu.memory_space<vmem>>, vector<1x8x32xf32>,
    %236 = vector.extract_strided_slice %176 {offsets = [0, 416], sizes = [8, 32], strides = [1, 1]} : vector<8x512xf32> to vector<8x32xf32>
    %c0_226 = arith.constant 0 : index
    %c0_227 = arith.constant 0 : index
    %c864 = arith.constant 864 : index
    %237 = vector.load %arg4[%c0_226, %c0_227, %c864] : memref<1x8x1024xf32, #tpu.memory_space<vmem>>, vector<1x8x32xf32>
    %238 = vector.shape_cast %237 : vector<1x8x32xf32> to vector<8x32xf32>
    %239 = vector.shape_cast %236 : vector<8x32xf32> to vector<1x8x32xf32>
    tpu.vector_store %arg4[%c0_226, %c0_227, %c864], %239 {strides = array<i32>} : memref<1x8x1024xf32, #tpu.memory_space<vmem>>, vector<1x8x32xf32>,
    %240 = vector.extract_strided_slice %176 {offsets = [0, 448], sizes = [8, 32], strides = [1, 1]} : vector<8x512xf32> to vector<8x32xf32>
    %c0_228 = arith.constant 0 : index
    %c0_229 = arith.constant 0 : index
    %c928 = arith.constant 928 : index
    %241 = vector.load %arg4[%c0_228, %c0_229, %c928] : memref<1x8x1024xf32, #tpu.memory_space<vmem>>, vector<1x8x32xf32>
    %242 = vector.shape_cast %241 : vector<1x8x32xf32> to vector<8x32xf32>
    %243 = vector.shape_cast %240 : vector<8x32xf32> to vector<1x8x32xf32>
    tpu.vector_store %arg4[%c0_228, %c0_229, %c928], %243 {strides = array<i32>} : memref<1x8x1024xf32, #tpu.memory_space<vmem>>, vector<1x8x32xf32>,
    %244 = vector.extract_strided_slice %176 {offsets = [0, 480], sizes = [8, 32], strides = [1, 1]} : vector<8x512xf32> to vector<8x32xf32>
    %c0_230 = arith.constant 0 : index
    %c0_231 = arith.constant 0 : index
    %c992 = arith.constant 992 : index
    %245 = vector.load %arg4[%c0_230, %c0_231, %c992] : memref<1x8x1024xf32, #tpu.memory_space<vmem>>, vector<1x8x32xf32>
    %246 = vector.shape_cast %245 : vector<1x8x32xf32> to vector<8x32xf32>
    %247 = vector.shape_cast %244 : vector<8x32xf32> to vector<1x8x32xf32>
    tpu.vector_store %arg4[%c0_230, %c0_231, %c992], %247 {strides = array<i32>} : memref<1x8x1024xf32, #tpu.memory_space<vmem>>, vector<1x8x32xf32>,
    %c0_232 = arith.constant 0 : index
    %c0_233 = arith.constant 0 : index
    %c0_234 = arith.constant 0 : index
    %248 = vector.load %arg5[%c0_232, %c0_233, %c0_234] : memref<1x8x1xf32, #tpu.memory_space<vmem>>, vector<1x8x1xf32>
    %249 = vector.shape_cast %248 : vector<1x8x1xf32> to vector<8x1xf32>
    %250 = vector.shape_cast %179 : vector<8x1xf32> to vector<1x8x1xf32>
    tpu.vector_store %arg5[%c0_232, %c0_233, %c0_234], %250 {strides = array<i32>} : memref<1x8x1xf32, #tpu.memory_space<vmem>>, vector<1x8x1xf32>,
    %c0_235 = arith.constant 0 : index
    %c0_236 = arith.constant 0 : index
    %c0_237 = arith.constant 0 : index
    %251 = vector.load %arg6[%c0_235, %c0_236, %c0_237] : memref<1x8x1xf32, #tpu.memory_space<vmem>>, vector<1x8x1xf32>
    %252 = vector.shape_cast %251 : vector<1x8x1xf32> to vector<8x1xf32>
    %253 = vector.shape_cast %183 : vector<8x1xf32> to vector<1x8x1xf32>
    tpu.vector_store %arg6[%c0_235, %c0_236, %c0_237], %253 {strides = array<i32>} : memref<1x8x1xf32, #tpu.memory_space<vmem>>, vector<1x8x1xf32>,
    return
  }
  func.func @transform_0(%arg0: i32) -> (i32, i32, i32, i32) {
    %c0_i32 = arith.constant 0 : i32
    %c0_i32_0 = arith.constant 0 : i32
    %c0_i32_1 = arith.constant 0 : i32
    %c0_i32_2 = arith.constant 0 : i32
    return %arg0, %c0_i32, %c0_i32_0, %c0_i32_1 : i32, i32, i32, i32
  }
  func.func @transform_1(%arg0: i32) -> (i32, i32, i32, i32, i32) {
    %c0_i32 = arith.constant 0 : i32
    %c0_i32_0 = arith.constant 0 : i32
    %c0_i32_1 = arith.constant 0 : i32
    %c0_i32_2 = arith.constant 0 : i32
    %c0_i32_3 = arith.constant 0 : i32
    %c0_i32_4 = arith.constant 0 : i32
    return %c0_i32, %c0_i32_0, %c0_i32_1, %c0_i32_2, %c0_i32_3 : i32, i32, i32, i32, i32
  }
  func.func @transform_2(%arg0: i32) -> (i32, i32) {
    %c0_i32 = arith.constant 0 : i32
    %c0_i32_0 = arith.constant 0 : i32
    %c0_i32_1 = arith.constant 0 : i32
    return %c0_i32, %c0_i32_0 : i32, i32
  }
  func.func @transform_3(%arg0: i32) -> (i32, i32, i32) {
    %c0_i32 = arith.constant 0 : i32
    %c0_i32_0 = arith.constant 0 : i32
    %c0_i32_1 = arith.constant 0 : i32
    return %arg0, %c0_i32, %c0_i32_0 : i32, i32, i32
  }
  func.func @transform_4(%arg0: i32) -> (i32, i32, i32) {
    %c0_i32 = arith.constant 0 : i32
    %c0_i32_0 = arith.constant 0 : i32
    %c0_i32_1 = arith.constant 0 : i32
    return %arg0, %c0_i32, %c0_i32_0 : i32, i32, i32
  }
  func.func @transform_5(%arg0: i32) -> (i32, i32, i32) {
    %c0_i32 = arith.constant 0 : i32
    %c0_i32_0 = arith.constant 0 : i32
    %c0_i32_1 = arith.constant 0 : i32
    return %arg0, %c0_i32, %c0_i32_0 : i32, i32, i32
  }
}

</mosaic_0001>

<llo_original>
// kernel: tile.23
$region0: #{tile.23}
  #allocation0 [shape = 's32[1]{0}', space=sflag, size = 0x4, scoped, tag = 'scoped memory for tile.23']
  %s0 = inlined_call_operand.vmem [shape: f32[8], index: 0, kind: input, shape index: {}]
  %s1 = inlined_call_operand.vmem [shape: f32[2,8], index: 1, kind: output, shape index: {}]
  // Predicated region
  $region2: #{tile.23} parent=0 // pred_check
    _
  $region3: #{tile.23} parent=0 // pred_check_branch
    %3 = sbr.rel (0) target = $region5
  $region4: #{tile.23} parent=0 // pred_region
    _
  $region5: #{tile.23} parent=0 // pred_fallthru
    _
  %v4 = vld [vmem:[%s0] ss:$0 sm:$0xff]
  %5 = vst [vmem:[%s1] sm:$0x3] %v4

// kernel: tile.0
$region0: #{tile.0}
  %s0 = inlined_call_operand.vmem [shape: f32[2,8], index: 0, kind: input, shape index: {}]
  %s1 = inlined_call_operand.vmem [shape: f32[16,1], index: 1, kind: output, shape index: {}]
  $region1: #{tile.0} parent=0
    #allocation0 [shape = 'u8[4096]{0}', space=vmem, size = 0x1000, scoped, tag = 'scoped mem for input reshape']
    %s3 = sshllo.u32 0, 2
    %v4 = vld [vmem:[%s0] sm:%s3]
    %5 = vst [vmem:[#allocation0] sm:%s3] %v4
    %v6 = vld [vmem:[#allocation0] sm:$0x3]
    %vm7 = vcmask 7168
    %8 = vst.msk [vmem:[%s1] ss:$8 sm:$0x3] %vm7, %v6
    %v9 = vld [vmem:[#allocation0] sm:$0x3]
    %10 = vrot.lane.b32.xlu0 %v9, 127
    %v11 = vpop.permute.xlu0 %10
    %vm12 = vcmask 7168
    %s13 = scalar_lea.vmem %s1, 1
    %14 = vst.msk [vmem:[%s13] ss:$8 sm:$0x3] %vm12, %v11
    %v15 = vld [vmem:[#allocation0] sm:$0x3]
    %16 = vrot.lane.b32.xlu0 %v15, 126
    %v17 = vpop.permute.xlu0 %16
    %vm18 = vcmask 7168
    %s19 = scalar_lea.vmem %s1, 2
    %20 = vst.msk [vmem:[%s19] ss:$8 sm:$0x3] %vm18, %v17
    %v21 = vld [vmem:[#allocation0] sm:$0x3]
    %22 = vrot.lane.b32.xlu0 %v21, 125
    %v23 = vpop.permute.xlu0 %22
    %vm24 = vcmask 7168
    %s25 = scalar_lea.vmem %s1, 3
    %26 = vst.msk [vmem:[%s25] ss:$8 sm:$0x3] %vm24, %v23
    %v27 = vld [vmem:[#allocation0] sm:$0x3]
    %28 = vrot.lane.b32.xlu0 %v27, 124
    %v29 = vpop.permute.xlu0 %28
    %vm30 = vcmask 7168
    %s31 = scalar_lea.vmem %s1, 4
    %32 = vst.msk [vmem:[%s31] ss:$8 sm:$0x3] %vm30, %v29
    %v33 = vld [vmem:[#allocation0] sm:$0x3]
    %34 = vrot.lane.b32.xlu0 %v33, 123
    %v35 = vpop.permute.xlu0 %34
    %vm36 = vcmask 7168
    %s37 = scalar_lea.vmem %s1, 5
    %38 = vst.msk [vmem:[%s37] ss:$8 sm:$0x3] %vm36, %v35
    %v39 = vld [vmem:[#allocation0] sm:$0x3]
    %40 = vrot.lane.b32.xlu0 %v39, 122
    %v41 = vpop.permute.xlu0 %40
    %vm42 = vcmask 7168
    %s43 = scalar_lea.vmem %s1, 6
    %44 = vst.msk [vmem:[%s43] ss:$8 sm:$0x3] %vm42, %v41
    %v45 = vld [vmem:[#allocation0] sm:$0x3]
    %46 = vrot.lane.b32.xlu0 %v45, 121
    %v47 = vpop.permute.xlu0 %46
    %vm48 = vcmask 7168
    %s49 = scalar_lea.vmem %s1, 7
    %50 = vst.msk [vmem:[%s49] ss:$8 sm:$0x3] %vm48, %v47

// kernel: factorized_expansion2.3
$region0: #{factorized_expansion2.3}
  #allocation0 [shape = 'u32[]', space=smem, size = 0x4, offset = 0x4, fixed_abs, tag = 'smem constant byte address 0x4 - core index']
  #allocation1 [shape = 'u32[144,128]{1,0:T(1,128)}', space=vmem, size = 0x12000, scoped, tag = 'internal scratch']
  %s0 = inlined_call_operand.vmem [shape: f32[16,1024], index: 0, kind: input, shape index: {}]
  %s1 = inlined_call_operand.vmem [shape: f32[16,1], index: 1, kind: input, shape index: {}]
  %s2 = inlined_call_operand.vmem [shape: f32[16,1], index: 2, kind: input, shape index: {}]
  %s3 = inlined_call_operand.vmem [shape: f32[16,1], index: 3, kind: input, shape index: {}]
  %s4 = inlined_call_operand.vmem [shape: f32[16,1], index: 4, kind: input, shape index: {}]
  %s5 = inlined_call_operand.vmem [shape: f32[16,1024], index: 5, kind: output, shape index: {}]
  %s6 = sld [smem:[#allocation0]]
  $region30: #{factorized_expansion2.3} parent=0
    _
  %s8 = ssub.s32 1, %s6
  %s9 = scalar_select 0, %s8, %s6
  // Predicated region
  $region2: #{factorized_expansion2.3} parent=0 // pred_check
    _
  $region3: #{factorized_expansion2.3} parent=0 // pred_check_branch
    %11 = sbr.rel (0) target = $region5
  $region4: #{factorized_expansion2.3} parent=0 // pred_region
    _
  $region5: #{factorized_expansion2.3} parent=0 // pred_fallthru
    _
  // Predicated region
  $region6: #{factorized_expansion2.3} parent=0 // pred_check
    _
  $region7: #{factorized_expansion2.3} parent=0 // pred_check_branch
    %13 = sbr.rel (0) target = $region9
  $region8: #{factorized_expansion2.3} parent=0 // pred_region
    _
  $region9: #{factorized_expansion2.3} parent=0 // pred_fallthru
    _
  // Predicated region
  $region10: #{factorized_expansion2.3} parent=0 // pred_check
    _
  $region11: #{factorized_expansion2.3} parent=0 // pred_check_branch
    %15 = sbr.rel (0) target = $region13
  $region12: #{factorized_expansion2.3} parent=0 // pred_region
    _
  $region13: #{factorized_expansion2.3} parent=0 // pred_fallthru
    _
  // Predicated region
  $region14: #{factorized_expansion2.3} parent=0 // pred_check
    _
  $region15: #{factorized_expansion2.3} parent=0 // pred_check_branch
    %17 = sbr.rel (0) target = $region17
  $region16: #{factorized_expansion2.3} parent=0 // pred_region
    _
  $region17: #{factorized_expansion2.3} parent=0 // pred_fallthru
    _
  // Predicated region
  $region18: #{factorized_expansion2.3} parent=0 // pred_check
    _
  $region19: #{factorized_expansion2.3} parent=0 // pred_check_branch
    %19 = sbr.rel (0) target = $region21
  $region20: #{factorized_expansion2.3} parent=0 // pred_region
    _
  $region21: #{factorized_expansion2.3} parent=0 // pred_fallthru
    _
  %v20 = vld [vmem:[%s1] sm:$0xff]
  %v21 = vld [vmem:[%s1 + $0x8] sm:$0xff]
  %v22 = vmul.f32 %v20, 0.00048828125
  %v23 = vmul.f32 %v21, 0.00048828125
  %v24 = vld [vmem:[%s2] sm:$0xff]
  %v25 = vld [vmem:[%s2 + $0x8] sm:$0xff]
  %v26 = vmul.f32 %v24, 0.00048828125
  %v27 = vmul.f32 %v25, 0.00048828125
  %v28 = vmul.f32 %v22, %v22
  %v29 = vmul.f32 %v23, %v23
  %v30 = vsub.f32 %v26, %v28
  %v31 = vsub.f32 %v27, %v29
  %v32 = vadd.f32 %v30, 1e-05
  %v33 = vadd.f32 %v31, 1e-05
  %v34 = vrsqrt.pop %v32
  %v35 = vrsqrt.pop %v33
  %v36 = vld [vmem:[%s3] sm:$0xff]
  %v37 = vld [vmem:[%s3 + $0x8] sm:$0xff]
  %v38 = vmul.f32 %v34, %v36
  %v39 = vmul.f32 %v35, %v37
  %v40 = vld [vmem:[%s0] sm:$0xff]
  %v41 = vld [vmem:[%s0 + $0x8] sm:$0xff]
  %v42 = vld [vmem:[%s0 + $0x10] sm:$0xff]
  %v43 = vld [vmem:[%s0 + $0x18] sm:$0xff]
  %v44 = vld [vmem:[%s0 + $0x20] sm:$0xff]
  %v45 = vld [vmem:[%s0 + $0x28] sm:$0xff]
  %v46 = vld [vmem:[%s0 + $0x30] sm:$0xff]
  %v47 = vld [vmem:[%s0 + $0x38] sm:$0xff]
  %v48 = vld [vmem:[%s0 + $0x40] sm:$0xff]
  %v49 = vld [vmem:[%s0 + $0x48] sm:$0xff]
  %v50 = vld [vmem:[%s0 + $0x50] sm:$0xff]
  %v51 = vld [vmem:[%s0 + $0x58] sm:$0xff]
  %v52 = vld [vmem:[%s0 + $0x60] sm:$0xff]
  %v53 = vld [vmem:[%s0 + $0x68] sm:$0xff]
  %v54 = vld [vmem:[%s0 + $0x70] sm:$0xff]
  %v55 = vld [vmem:[%s0 + $0x78] sm:$0xff]
  %57 = vset.pattern.permute.xlu0 0
  %58 = vperm.xlu0 %57, %v22
  %v59 = vpop.permute.xlu0 %58
  %62 = vset.pattern.permute.xlu0 0
  %63 = vperm.xlu0 %62, %v23
  %v64 = vpop.permute.xlu0 %63
  %v66 = vsub.f32 %v40, %v59
  %v67 = vsub.f32 %v41, %v59
  %v68 = vsub.f32 %v42, %v59
  %v69 = vsub.f32 %v43, %v59
  %v70 = vsub.f32 %v44, %v59
  %v71 = vsub.f32 %v45, %v59
  %v72 = vsub.f32 %v46, %v59
  %v73 = vsub.f32 %v47, %v59
  %v74 = vsub.f32 %v48, %v64
  %v75 = vsub.f32 %v49, %v64
  %v76 = vsub.f32 %v50, %v64
  %v77 = vsub.f32 %v51, %v64
  %v78 = vsub.f32 %v52, %v64
  %v79 = vsub.f32 %v53, %v64
  %v80 = vsub.f32 %v54, %v64
  %v81 = vsub.f32 %v55, %v64
  %83 = vset.pattern.permute.xlu0 0
  %84 = vperm.xlu0 %83, %v38
  %v85 = vpop.permute.xlu0 %84
  %88 = vset.pattern.permute.xlu0 0
  %89 = vperm.xlu0 %88, %v39
  %v90 = vpop.permute.xlu0 %89
  %v92 = vmul.f32 %v66, %v85
  %v93 = vmul.f32 %v67, %v85
  %v94 = vmul.f32 %v68, %v85
  %v95 = vmul.f32 %v69, %v85
  %v96 = vmul.f32 %v70, %v85
  %v97 = vmul.f32 %v71, %v85
  %v98 = vmul.f32 %v72, %v85
  %v99 = vmul.f32 %v73, %v85
  %v100 = vmul.f32 %v74, %v90
  %v101 = vmul.f32 %v75, %v90
  %v102 = vmul.f32 %v76, %v90
  %v103 = vmul.f32 %v77, %v90
  %v104 = vmul.f32 %v78, %v90
  %v105 = vmul.f32 %v79, %v90
  %v106 = vmul.f32 %v80, %v90
  %v107 = vmul.f32 %v81, %v90
  %v108 = vld [vmem:[%s4] sm:$0xff]
  %v109 = vld [vmem:[%s4 + $0x8] sm:$0xff]
  %111 = vset.pattern.permute.xlu0 0
  %112 = vperm.xlu0 %111, %v108
  %v113 = vpop.permute.xlu0 %112
  %116 = vset.pattern.permute.xlu0 0
  %117 = vperm.xlu0 %116, %v109
  %v118 = vpop.permute.xlu0 %117
  %v120 = vadd.f32 %v92, %v113
  %v121 = vadd.f32 %v93, %v113
  %v122 = vadd.f32 %v94, %v113
  %v123 = vadd.f32 %v95, %v113
  %v124 = vadd.f32 %v96, %v113
  %v125 = vadd.f32 %v97, %v113
  %v126 = vadd.f32 %v98, %v113
  %v127 = vadd.f32 %v99, %v113
  %v128 = vadd.f32 %v100, %v118
  %v129 = vadd.f32 %v101, %v118
  %v130 = vadd.f32 %v102, %v118
  %v131 = vadd.f32 %v103, %v118
  %v132 = vadd.f32 %v104, %v118
  %v133 = vadd.f32 %v105, %v118
  %v134 = vadd.f32 %v106, %v118
  %v135 = vadd.f32 %v107, %v118
  %v136 = vmax.f32 %v120, 0.0
  %v137 = vmax.f32 %v121, 0.0
  %v138 = vmax.f32 %v122, 0.0
  %v139 = vmax.f32 %v123, 0.0
  %v140 = vmax.f32 %v124, 0.0
  %v141 = vmax.f32 %v125, 0.0
  %v142 = vmax.f32 %v126, 0.0
  %v143 = vmax.f32 %v127, 0.0
  %v144 = vmax.f32 %v128, 0.0
  %v145 = vmax.f32 %v129, 0.0
  %v146 = vmax.f32 %v130, 0.0
  %v147 = vmax.f32 %v131, 0.0
  %v148 = vmax.f32 %v132, 0.0
  %v149 = vmax.f32 %v133, 0.0
  %v150 = vmax.f32 %v134, 0.0
  %v151 = vmax.f32 %v135, 0.0
  %152 = vst [vmem:[%s5] sm:$0xff] %v136
  %153 = vst [vmem:[%s5 + $0x8] sm:$0xff] %v137
  %154 = vst [vmem:[%s5 + $0x10] sm:$0xff] %v138
  %155 = vst [vmem:[%s5 + $0x18] sm:$0xff] %v139
  %156 = vst [vmem:[%s5 + $0x20] sm:$0xff] %v140
  %157 = vst [vmem:[%s5 + $0x28] sm:$0xff] %v141
  %158 = vst [vmem:[%s5 + $0x30] sm:$0xff] %v142
  %159 = vst [vmem:[%s5 + $0x38] sm:$0xff] %v143
  %160 = vst [vmem:[%s5 + $0x40] sm:$0xff] %v144
  %161 = vst [vmem:[%s5 + $0x48] sm:$0xff] %v145
  %162 = vst [vmem:[%s5 + $0x50] sm:$0xff] %v146
  %163 = vst [vmem:[%s5 + $0x58] sm:$0xff] %v147
  %164 = vst [vmem:[%s5 + $0x60] sm:$0xff] %v148
  %165 = vst [vmem:[%s5 + $0x68] sm:$0xff] %v149
  %166 = vst [vmem:[%s5 + $0x70] sm:$0xff] %v150
  %167 = vst [vmem:[%s5 + $0x78] sm:$0xff] %v151
  // Predicated region
  $region22: #{factorized_expansion2.3} parent=0 // pred_check
    _
  $region23: #{factorized_expansion2.3} parent=0 // pred_check_branch
    %169 = sbr.rel (0) target = $region25
  $region24: #{factorized_expansion2.3} parent=0 // pred_region
    _
  $region25: #{factorized_expansion2.3} parent=0 // pred_fallthru
    _
  // Predicated region
  $region26: #{factorized_expansion2.3} parent=0 // pred_check
    _
  $region27: #{factorized_expansion2.3} parent=0 // pred_check_branch
    %171 = sbr.rel (0) target = $region29
  $region28: #{factorized_expansion2.3} parent=0 // pred_region
    _
  $region29: #{factorized_expansion2.3} parent=0 // pred_fallthru
    _

// kernel: factorized_expansion2.2
$region0: #{factorized_expansion2.2}
  #allocation0 [shape = 'u32[]', space=smem, size = 0x4, offset = 0x4, fixed_abs, tag = 'smem constant byte address 0x4 - core index']
  #allocation1 [shape = 'u32[144,128]{1,0:T(1,128)}', space=vmem, size = 0x12000, scoped, tag = 'internal scratch']
  %s0 = inlined_call_operand.vmem [shape: f32[2,4,4,576], index: 0, kind: input, shape index: {}]
  %s1 = inlined_call_operand.vmem [shape: f32[2,2,4,8,4], index: 1, kind: input, shape index: {}]
  %s2 = inlined_call_operand.vmem [shape: f32[8,1], index: 2, kind: input, shape index: {}]
  %s3 = inlined_call_operand.vmem [shape: f32[2,8,1024], index: 3, kind: output, shape index: {0}]
  %s4 = inlined_call_operand.vmem [shape: f32[2,8,1], index: 4, kind: output, shape index: {1}]
  %s5 = inlined_call_operand.vmem [shape: f32[2,8,1], index: 5, kind: output, shape index: {2}]
  %6 = xla_tuple %s3, %s4, %s5
  %s7 = sld [smem:[#allocation0]]
  $region61: #{factorized_expansion2.2} parent=0
    _
  %s9 = ssub.s32 1, %s7
  %s10 = scalar_select 0, %s9, %s7
  loop: start=0, step=1, limit=4
  $region2: #{factorized_expansion2.2} parent=0 // loop_pre_header
    _
  $region3: #{factorized_expansion2.2} parent=0 // loop_header
    %s12 = sphi 0, %s16
    %p13 = scmp.ge.s32.totalorder %s12, 4
    %s22 = sphi 0, %s24
    %s25 = sphi 0, %s22
    %s26 = sphi 0, %s25
    %s42 = sphi 0, %s26
    %s46 = sphi 0, %s46
    %s48 = sphi 0, %s46
    %s49 = sphi 0, %s48
    %s63 = sphi 0, %s49
    %s67 = sphi 0, %s67
    %s69 = sphi 0, %s67
    %s70 = sphi 0, %s69
    %s84 = sphi 0, %s70
    %s90 = sphi 0, %s92
    %s93 = sphi 0, %s90
    %s94 = sphi 0, %s93
    %s110 = sphi 0, %s94
    %s116 = sphi 0, %s118
    %s119 = sphi 0, %s116
    %s120 = sphi 0, %s119
    %s136 = sphi 0, %s120
    %s142 = sphi 0, %s144
    %s145 = sphi 0, %s142
    %s146 = sphi 0, %s145
    %s162 = sphi 0, %s146
  $region4: #{factorized_expansion2.2} parent=0 // loop_header_branch
    %15 = sbr.rel (%p13) target = $region8
  $region5: #{factorized_expansion2.2} parent=0 // loop_body
    %s17 = ssub.s32 %s12, 1
    %s18 = ssub.s32 %s12, 2
    %s19 = sadd.s32 %s12, 1
    %s20 = ssub.s32 %s12, %s19
    %p21 = scmp.eq.s32.totalorder %s20, 0
    %s23 = sadd.s32 %s22, 1
    %s24 = scalar_select %p21, %s22, %s23
    %p27 = pneg %p21
    %p28 = scmp.eq.s32.totalorder %s12, 1
    %p29 = por %p27, %p28
    %p30 = scmp.ne.s32.totalorder %s22, %s25
    %p31 = scmp.eq.s32.totalorder %s12, 0
    %p32 = por %p30, %p31
    %p33 = scmp.ne.s32.totalorder %s22, %s25
    %p34 = scmp.eq.s32.totalorder %s17, 1
    %p35 = por %p33, %p34
    %p36 = scmp.ne.s32.totalorder %s25, %s26
    %p37 = scmp.eq.s32.totalorder %s17, 0
    %p38 = por %p36, %p37
    %p39 = scmp.ne.s32.totalorder %s25, %s26
    %p40 = scmp.eq.s32.totalorder %s18, 1
    %p41 = por %p39, %p40
    %p43 = scmp.ne.s32.totalorder %s26, %s42
    %p44 = scmp.eq.s32.totalorder %s18, 0
    %p45 = por %p43, %p44
    %s47 = sadd.s32 %s46, 1
    %p50 = scmp.eq.s32.totalorder %s12, 1
    %p51 = scmp.ne.s32.totalorder %s46, %s48
    %p52 = scmp.eq.s32.totalorder %s12, 0
    %p53 = por %p51, %p52
    %p54 = scmp.ne.s32.totalorder %s46, %s48
    %p55 = scmp.eq.s32.totalorder %s17, 1
    %p56 = por %p54, %p55
    %p57 = scmp.ne.s32.totalorder %s48, %s49
    %p58 = scmp.eq.s32.totalorder %s17, 0
    %p59 = por %p57, %p58
    %p60 = scmp.ne.s32.totalorder %s48, %s49
    %p61 = scmp.eq.s32.totalorder %s18, 1
    %p62 = por %p60, %p61
    %p64 = scmp.ne.s32.totalorder %s49, %s63
    %p65 = scmp.eq.s32.totalorder %s18, 0
    %p66 = por %p64, %p65
    %s68 = sadd.s32 %s67, 1
    %p71 = scmp.eq.s32.totalorder %s12, 1
    %p72 = scmp.ne.s32.totalorder %s67, %s69
    %p73 = scmp.eq.s32.totalorder %s12, 0
    %p74 = por %p72, %p73
    %p75 = scmp.ne.s32.totalorder %s67, %s69
    %p76 = scmp.eq.s32.totalorder %s17, 1
    %p77 = por %p75, %p76
    %p78 = scmp.ne.s32.totalorder %s69, %s70
    %p79 = scmp.eq.s32.totalorder %s17, 0
    %p80 = por %p78, %p79
    %p81 = scmp.ne.s32.totalorder %s69, %s70
    %p82 = scmp.eq.s32.totalorder %s18, 1
    %p83 = por %p81, %p82
    %p85 = scmp.ne.s32.totalorder %s70, %s84
    %p86 = scmp.eq.s32.totalorder %s18, 0
    %p87 = por %p85, %p86
    %s88 = ssub.s32 %s12, %s19
    %p89 = scmp.eq.s32.totalorder %s88, 0
    %s91 = sadd.s32 %s90, 1
    %s92 = scalar_select %p89, %s90, %s91
    %p95 = pneg %p89
    %p96 = scmp.eq.s32.totalorder %s12, 1
    %p97 = por %p95, %p96
    %p98 = scmp.ne.s32.totalorder %s90, %s93
    %p99 = scmp.eq.s32.totalorder %s12, 0
    %p100 = por %p98, %p99
    %p101 = scmp.ne.s32.totalorder %s90, %s93
    %p102 = scmp.eq.s32.totalorder %s17, 1
    %p103 = por %p101, %p102
    %p104 = scmp.ne.s32.totalorder %s93, %s94
    %p105 = scmp.eq.s32.totalorder %s17, 0
    %p106 = por %p104, %p105
    %p107 = scmp.ne.s32.totalorder %s93, %s94
    %p108 = scmp.eq.s32.totalorder %s18, 1
    %p109 = por %p107, %p108
    %p111 = scmp.ne.s32.totalorder %s94, %s110
    %p112 = scmp.eq.s32.totalorder %s18, 0
    %p113 = por %p111, %p112
    %s114 = ssub.s32 %s12, %s19
    %p115 = scmp.eq.s32.totalorder %s114, 0
    %s117 = sadd.s32 %s116, 1
    %s118 = scalar_select %p115, %s116, %s117
    %p121 = pneg %p115
    %p122 = scmp.eq.s32.totalorder %s12, 1
    %p123 = por %p121, %p122
    %p124 = scmp.ne.s32.totalorder %s116, %s119
    %p125 = scmp.eq.s32.totalorder %s12, 0
    %p126 = por %p124, %p125
    %p127 = scmp.ne.s32.totalorder %s116, %s119
    %p128 = scmp.eq.s32.totalorder %s17, 1
    %p129 = por %p127, %p128
    %p130 = scmp.ne.s32.totalorder %s119, %s120
    %p131 = scmp.eq.s32.totalorder %s17, 0
    %p132 = por %p130, %p131
    %p133 = scmp.ne.s32.totalorder %s119, %s120
    %p134 = scmp.eq.s32.totalorder %s18, 1
    %p135 = por %p133, %p134
    %p137 = scmp.ne.s32.totalorder %s120, %s136
    %p138 = scmp.eq.s32.totalorder %s18, 0
    %p139 = por %p137, %p138
    %s140 = ssub.s32 %s12, %s19
    %p141 = scmp.eq.s32.totalorder %s140, 0
    %s143 = sadd.s32 %s142, 1
    %s144 = scalar_select %p141, %s142, %s143
    %p147 = pneg %p141
    %p148 = scmp.eq.s32.totalorder %s12, 1
    %p149 = por %p147, %p148
    %p150 = scmp.ne.s32.totalorder %s142, %s145
    %p151 = scmp.eq.s32.totalorder %s12, 0
    %p152 = por %p150, %p151
    %p153 = scmp.ne.s32.totalorder %s142, %s145
    %p154 = scmp.eq.s32.totalorder %s17, 1
    %p155 = por %p153, %p154
    %p156 = scmp.ne.s32.totalorder %s145, %s146
    %p157 = scmp.eq.s32.totalorder %s17, 0
    %p158 = por %p156, %p157
    %p159 = scmp.ne.s32.totalorder %s145, %s146
    %p160 = scmp.eq.s32.totalorder %s18, 1
    %p161 = por %p159, %p160
    %p163 = scmp.ne.s32.totalorder %s146, %s162
    %p164 = scmp.eq.s32.totalorder %s18, 0
    %p165 = por %p163, %p164
    %p166 = scmp.le.s32.totalorder 1, %s12
    %p167 = scmp.lt.s32.totalorder %s12, 3
    %p168 = pnand %p166, %p167
    %p169 = pneg %p168
    // Predicated region
    $region9: #{factorized_expansion2.2} parent=5 // pred_check
      _
    $region10: #{factorized_expansion2.2} parent=5 // pred_check_branch
      %171 = sbr.rel (%p168) target = $region12
    $region11: #{factorized_expansion2.2} parent=5 // pred_region
      %s172 = ssub.s32 %s12, 1
      // Predicated region
      $region13: #{factorized_expansion2.2} parent=11 // pred_check
        %p173 = pneg %p59
      $region14: #{factorized_expansion2.2} parent=11 // pred_check_branch
        %175 = sbr.rel (%p173) target = $region16
      $region15: #{factorized_expansion2.2} parent=11 // pred_region
        _
      $region16: #{factorized_expansion2.2} parent=11 // pred_fallthru
        _
      // Predicated region
      $region17: #{factorized_expansion2.2} parent=11 // pred_check
        %p176 = pneg %p80
      $region18: #{factorized_expansion2.2} parent=11 // pred_check_branch
        %178 = sbr.rel (%p176) target = $region20
      $region19: #{factorized_expansion2.2} parent=11 // pred_region
        _
      $region20: #{factorized_expansion2.2} parent=11 // pred_fallthru
        _
    $region12: #{factorized_expansion2.2} parent=5 // pred_fallthru
      _
    %p179 = scmp.lt.s32.totalorder %s12, 2
    // Predicated region
    $region21: #{factorized_expansion2.2} parent=5 // pred_check
      %p180 = pneg %p179
    $region22: #{factorized_expansion2.2} parent=5 // pred_check_branch
      %182 = sbr.rel (%p180) target = $region24
    $region23: #{factorized_expansion2.2} parent=5 // pred_region
      // Predicated region
      $region25: #{factorized_expansion2.2} parent=23 // pred_check
        %p183 = pneg %p32
      $region26: #{factorized_expansion2.2} parent=23 // pred_check_branch
        %185 = sbr.rel (%p183) target = $region28
      $region27: #{factorized_expansion2.2} parent=23 // pred_region
        %p186 = scmp.lt.s32.totalorder %s12, 1
        %s187 = scalar_select %p186, %s12, 1
        %s188 = smul.addr %s187, 20
        %s189 = smul.addr %s188, 4
        %s190 = scalar_lea.vmem %s0, %s189
      $region28: #{factorized_expansion2.2} parent=23 // pred_fallthru
        _
    $region24: #{factorized_expansion2.2} parent=5 // pred_fallthru
      _
    %p191 = scmp.le.s32.totalorder 1, %s12
    %p192 = scmp.lt.s32.totalorder %s12, 3
    %p193 = pnand %p191, %p192
    %p194 = pneg %p193
    // Predicated region
    $region29: #{factorized_expansion2.2} parent=5 // pred_check
      _
    $region30: #{factorized_expansion2.2} parent=5 // pred_check_branch
      %196 = sbr.rel (%p193) target = $region32
    $region31: #{factorized_expansion2.2} parent=5 // pred_region
      %s197 = ssub.s32 %s12, 1
      %p198 = scmp.lt.s32.totalorder %s17, 1
      %s199 = scalar_select %p198, %s17, 1
      %s200 = smul.addr %s199, 20
      %s201 = smul.addr %s200, 4
      %s202 = scalar_lea.vmem %s0, %s201
      %p203 = pneg %p38
      %p204 = pneg %p35
      %p205 = pneg %p59
      %p206 = pneg %p56
      %p207 = pneg %p80
      %p208 = pneg %p77
      %p209 = pneg %p106
      %p210 = pneg %p103
      %p211 = scmp.lt.s32.totalorder %s17, 1
      %s212 = scalar_select %p211, %s17, 1
      %s213 = smul.addr %s212, 8
      %s214 = smul.addr %s213, 8
      %s215 = scalar_lea.vmem %s3, %s214
      %p216 = pneg %p132
      %p217 = pneg %p129
      %p218 = scmp.lt.s32.totalorder %s17, 1
      %s219 = scalar_select %p218, %s17, 1
      %s220 = smul.addr %s219, 8
      %s221 = scalar_lea.vmem %s4, %s220
      %p222 = pneg %p158
      %p223 = pneg %p155
      %p224 = scmp.lt.s32.totalorder %s17, 1
      %s225 = scalar_select %p224, %s17, 1
      %s226 = smul.addr %s225, 8
      %s227 = scalar_lea.vmem %s5, %s226
      %p228 = scmp.lt.s32.totalorder %s17, 1
      %s229 = scalar_select %p228, %s17, 1
      %s230 = smul.addr %s229, 20
      %s231 = smul.addr %s230, 4
      %s232 = scalar_lea.vmem %s0, %s231
      %p233 = scmp.lt.s32.totalorder %s17, 1
      %s234 = scalar_select %p233, %s17, 1
      %s235 = smul.addr %s234, 8
      %s236 = smul.addr %s235, 8
      %s237 = scalar_lea.vmem %s3, %s236
      %p238 = scmp.lt.s32.totalorder %s17, 1
      %s239 = scalar_select %p238, %s17, 1
      %s240 = smul.addr %s239, 8
      %s241 = scalar_lea.vmem %s4, %s240
      %p242 = scmp.lt.s32.totalorder %s17, 1
      %s243 = scalar_select %p242, %s17, 1
      %s244 = smul.addr %s243, 8
      %s245 = scalar_lea.vmem %s5, %s244
      %v246 = vld [vmem:[%s1] sm:$0xff]
      %v247 = vld [vmem:[%s232] sm:$0xff]
      %v248 = vld [vmem:[%s232 + $0x8] sm:$0xff]
      %s249 = scalar_lea.vmem %s1, 8
      %v250 = vld [vmem:[%s249] sm:$0xff]
      %s251 = scalar_lea.vmem %s232, 20
      %v252 = vld [vmem:[%s251] sm:$0xff]
      %v253 = vld [vmem:[%s251 + $0x8] sm:$0xff]
      %v256 = vcombine.high %v252, %v252
      %v257 = vcombine.high %v253, %v253
      %vm258 = vcmask 31744
      %v260 = vsel %vm258, %v250, 0
      %vm262 = vcmask 1043456
      %v263 = vsel %vm262, %v252, 0
      %v265 = vsel %vm262, %v256, 0
      %v267 = vsel %vm262, %v253, 0
      %v269 = vsel %vm262, %v257, 0
      %271 = vmatprep.subr.mxu0 %v265
      %272 = vmatpush1.msra.mxu0 %v263
      %273 = vmatprep.subr.mxu0 0.0
      %274 = vmatpush1.msra.mxu0 0.0
      %275 = vmatprep.subr.mxu0 0.0
      %276 = vmatpush1.msra.mxu0 0.0
      %277 = vmatprep.subr.mxu0 0.0
      %278 = vmatpush1.msra.mxu0 0.0
      %279 = vmatprep.subr.mxu0 0.0
      %280 = vmatpush1.msra.mxu0 0.0
      %281 = vmatprep.subr.mxu0 0.0
      %282 = vmatpush1.msra.mxu0 0.0
      %283 = vmatprep.subr.mxu0 0.0
      %284 = vmatpush1.msra.mxu0 0.0
      %285 = vmatprep.subr.mxu0 0.0
      %286 = vmatpush1.msra.mxu0 0.0
      %287 = vmatprep.subr.mxu0 0.0
      %288 = vmatpush1.msra.mxu0 0.0
      %289 = vmatprep.subr.mxu0 0.0
      %290 = vmatpush1.msra.mxu0 0.0
      %291 = vmatprep.subr.mxu0 0.0
      %292 = vmatpush1.msra.mxu0 0.0
      %293 = vmatprep.subr.mxu0 0.0
      %294 = vmatpush1.msra.mxu0 0.0
      %295 = vmatprep.subr.mxu0 0.0
      %296 = vmatpush1.msra.mxu0 0.0
      %297 = vmatprep.subr.mxu0 0.0
      %298 = vmatpush1.msra.mxu0 0.0
      %299 = vmatprep.subr.mxu0 0.0
      %300 = vmatpush1.msra.mxu0 0.0
      %301 = vmatprep.subr.mxu0 0.0
      %302 = vmatpush1.msra.mxu0 0.0
      %303 = vmatprep.subr.mxu0 0.0
      %304 = vmatpush1.msra.mxu0 0.0
      %305 = vmatprep.subr.mxu0 0.0
      %306 = vmatpush1.msra.mxu0 0.0
      %307 = vmatprep.subr.mxu0 0.0
      %308 = vmatpush1.msra.mxu0 0.0
      %309 = vmatprep.subr.mxu0 0.0
      %310 = vmatpush1.msra.mxu0 0.0
      %311 = vmatprep.subr.mxu0 0.0
      %312 = vmatpush1.msra.mxu0 0.0
      %313 = vmatprep.subr.mxu0 0.0
      %314 = vmatpush1.msra.mxu0 0.0
      %315 = vmatprep.subr.mxu0 0.0
      %316 = vmatpush1.msra.mxu0 0.0
      %317 = vmatprep.subr.mxu0 0.0
      %318 = vmatpush1.msra.mxu0 0.0
      %319 = vmatprep.subr.mxu0 0.0
      %320 = vmatpush1.msra.mxu0 0.0
      %321 = vmatprep.subr.mxu0 0.0
      %322 = vmatpush1.msra.mxu0 0.0
      %323 = vmatprep.subr.mxu0 0.0
      %324 = vmatpush1.msra.mxu0 0.0
      %325 = vmatprep.subr.mxu0 0.0
      %326 = vmatpush1.msra.mxu0 0.0
      %327 = vmatprep.subr.mxu0 0.0
      %328 = vmatpush1.msra.mxu0 0.0
      %329 = vmatprep.subr.mxu0 0.0
      %330 = vmatpush1.msra.mxu0 0.0
      %331 = vmatprep.subr.mxu0 0.0
      %332 = vmatpush1.msra.mxu0 0.0
      %333 = vmatprep.subr.mxu0 0.0
      %334 = vmatpush1.msra.mxu0 0.0
      %335 = vmatprep.mubr.f32.mxu0 0.0
      %336 = vmatmul.mubr.f32.gmra.mrb[0].mxu0 %v260
      %v337 = vpop.f32.mrb[0].mxu0
      %v338 = vadd.f32 0.0, %v337
      %v339 = vpop.f32.mrb[0].mxu0
      %v340 = vadd.f32 0.0, %v339
      %341 = vdwg.mxu0
      %342 = vmatprep.subr.mxu0 %v269
      %343 = vmatpush1.msra.mxu0 %v267
      %344 = vmatprep.subr.mxu0 0.0
      %345 = vmatpush1.msra.mxu0 0.0
      %346 = vmatprep.subr.mxu0 0.0
      %347 = vmatpush1.msra.mxu0 0.0
      %348 = vmatprep.subr.mxu0 0.0
      %349 = vmatpush1.msra.mxu0 0.0
      %350 = vmatprep.subr.mxu0 0.0
      %351 = vmatpush1.msra.mxu0 0.0
      %352 = vmatprep.subr.mxu0 0.0
      %353 = vmatpush1.msra.mxu0 0.0
      %354 = vmatprep.subr.mxu0 0.0
      %355 = vmatpush1.msra.mxu0 0.0
      %356 = vmatprep.subr.mxu0 0.0
      %357 = vmatpush1.msra.mxu0 0.0
      %358 = vmatprep.subr.mxu0 0.0
      %359 = vmatpush1.msra.mxu0 0.0
      %360 = vmatprep.subr.mxu0 0.0
      %361 = vmatpush1.msra.mxu0 0.0
      %362 = vmatprep.subr.mxu0 0.0
      %363 = vmatpush1.msra.mxu0 0.0
      %364 = vmatprep.subr.mxu0 0.0
      %365 = vmatpush1.msra.mxu0 0.0
      %366 = vmatprep.subr.mxu0 0.0
      %367 = vmatpush1.msra.mxu0 0.0
      %368 = vmatprep.subr.mxu0 0.0
      %369 = vmatpush1.msra.mxu0 0.0
      %370 = vmatprep.subr.mxu0 0.0
      %371 = vmatpush1.msra.mxu0 0.0
      %372 = vmatprep.subr.mxu0 0.0
      %373 = vmatpush1.msra.mxu0 0.0
      %374 = vmatprep.subr.mxu0 0.0
      %375 = vmatpush1.msra.mxu0 0.0
      %376 = vmatprep.subr.mxu0 0.0
      %377 = vmatpush1.msra.mxu0 0.0
      %378 = vmatprep.subr.mxu0 0.0
      %379 = vmatpush1.msra.mxu0 0.0
      %380 = vmatprep.subr.mxu0 0.0
      %381 = vmatpush1.msra.mxu0 0.0
      %382 = vmatprep.subr.mxu0 0.0
      %383 = vmatpush1.msra.mxu0 0.0
      %384 = vmatprep.subr.mxu0 0.0
      %385 = vmatpush1.msra.mxu0 0.0
      %386 = vmatprep.subr.mxu0 0.0
      %387 = vmatpush1.msra.mxu0 0.0
      %388 = vmatprep.subr.mxu0 0.0
      %389 = vmatpush1.msra.mxu0 0.0
      %390 = vmatprep.subr.mxu0 0.0
      %391 = vmatpush1.msra.mxu0 0.0
      %392 = vmatprep.subr.mxu0 0.0
      %393 = vmatpush1.msra.mxu0 0.0
      %394 = vmatprep.subr.mxu0 0.0
      %395 = vmatpush1.msra.mxu0 0.0
      %396 = vmatprep.subr.mxu0 0.0
      %397 = vmatpush1.msra.mxu0 0.0
      %398 = vmatprep.subr.mxu0 0.0
      %399 = vmatpush1.msra.mxu0 0.0
      %400 = vmatprep.subr.mxu0 0.0
      %401 = vmatpush1.msra.mxu0 0.0
      %402 = vmatprep.subr.mxu0 0.0
      %403 = vmatpush1.msra.mxu0 0.0
      %404 = vmatprep.subr.mxu0 0.0
      %405 = vmatpush1.msra.mxu0 0.0
      %406 = vmatprep.mubr.f32.mxu0 0.0
      %407 = vmatmul.mubr.f32.gmra.mrb[0].mxu0 %v260
      %v408 = vpop.f32.mrb[0].mxu0
      %v409 = vadd.f32 0.0, %v408
      %v410 = vpop.f32.mrb[0].mxu0
      %v411 = vadd.f32 0.0, %v410
      %412 = vdwg.mxu0
      %v415 = vcombine.high %v247, %v247
      %v416 = vcombine.high %v248, %v248
      %v418 = vsel %vm258, %v246, 0
      %v420 = vsel %vm262, %v247, 0
      %v422 = vsel %vm262, %v415, 0
      %v424 = vsel %vm262, %v248, 0
      %v426 = vsel %vm262, %v416, 0
      %428 = vmatprep.subr.mxu0 %v422
      %429 = vmatpush1.msra.mxu0 %v420
      %430 = vmatprep.subr.mxu0 0.0
      %431 = vmatpush1.msra.mxu0 0.0
      %432 = vmatprep.subr.mxu0 0.0
      %433 = vmatpush1.msra.mxu0 0.0
      %434 = vmatprep.subr.mxu0 0.0
      %435 = vmatpush1.msra.mxu0 0.0
      %436 = vmatprep.subr.mxu0 0.0
      %437 = vmatpush1.msra.mxu0 0.0
      %438 = vmatprep.subr.mxu0 0.0
      %439 = vmatpush1.msra.mxu0 0.0
      %440 = vmatprep.subr.mxu0 0.0
      %441 = vmatpush1.msra.mxu0 0.0
      %442 = vmatprep.subr.mxu0 0.0
      %443 = vmatpush1.msra.mxu0 0.0
      %444 = vmatprep.subr.mxu0 0.0
      %445 = vmatpush1.msra.mxu0 0.0
      %446 = vmatprep.subr.mxu0 0.0
      %447 = vmatpush1.msra.mxu0 0.0
      %448 = vmatprep.subr.mxu0 0.0
      %449 = vmatpush1.msra.mxu0 0.0
      %450 = vmatprep.subr.mxu0 0.0
      %451 = vmatpush1.msra.mxu0 0.0
      %452 = vmatprep.subr.mxu0 0.0
      %453 = vmatpush1.msra.mxu0 0.0
      %454 = vmatprep.subr.mxu0 0.0
      %455 = vmatpush1.msra.mxu0 0.0
      %456 = vmatprep.subr.mxu0 0.0
      %457 = vmatpush1.msra.mxu0 0.0
      %458 = vmatprep.subr.mxu0 0.0
      %459 = vmatpush1.msra.mxu0 0.0
      %460 = vmatprep.subr.mxu0 0.0
      %461 = vmatpush1.msra.mxu0 0.0
      %462 = vmatprep.subr.mxu0 0.0
      %463 = vmatpush1.msra.mxu0 0.0
      %464 = vmatprep.subr.mxu0 0.0
      %465 = vmatpush1.msra.mxu0 0.0
      %466 = vmatprep.subr.mxu0 0.0
      %467 = vmatpush1.msra.mxu0 0.0
      %468 = vmatprep.subr.mxu0 0.0
      %469 = vmatpush1.msra.mxu0 0.0
      %470 = vmatprep.subr.mxu0 0.0
      %471 = vmatpush1.msra.mxu0 0.0
      %472 = vmatprep.subr.mxu0 0.0
      %473 = vmatpush1.msra.mxu0 0.0
      %474 = vmatprep.subr.mxu0 0.0
      %475 = vmatpush1.msra.mxu0 0.0
      %476 = vmatprep.subr.mxu0 0.0
      %477 = vmatpush1.msra.mxu0 0.0
      %478 = vmatprep.subr.mxu0 0.0
      %479 = vmatpush1.msra.mxu0 0.0
      %480 = vmatprep.subr.mxu0 0.0
      %481 = vmatpush1.msra.mxu0 0.0
      %482 = vmatprep.subr.mxu0 0.0
      %483 = vmatpush1.msra.mxu0 0.0
      %484 = vmatprep.subr.mxu0 0.0
      %485 = vmatpush1.msra.mxu0 0.0
      %486 = vmatprep.subr.mxu0 0.0
      %487 = vmatpush1.msra.mxu0 0.0
      %488 = vmatprep.subr.mxu0 0.0
      %489 = vmatpush1.msra.mxu0 0.0
      %490 = vmatprep.subr.mxu0 0.0
      %491 = vmatpush1.msra.mxu0 0.0
      %492 = vmatprep.mubr.f32.mxu0 0.0
      %493 = vmatmul.mubr.f32.gmra.mrb[0].mxu0 %v418
      %v494 = vpop.f32.mrb[0].mxu0
      %v495 = vadd.f32 %v338, %v494
      %v496 = vpop.f32.mrb[0].mxu0
      %v497 = vadd.f32 %v340, %v496
      %498 = vdwg.mxu0
      %499 = vmatprep.subr.mxu0 %v426
      %500 = vmatpush1.msra.mxu0 %v424
      %501 = vmatprep.subr.mxu0 0.0
      %502 = vmatpush1.msra.mxu0 0.0
      %503 = vmatprep.subr.mxu0 0.0
      %504 = vmatpush1.msra.mxu0 0.0
      %505 = vmatprep.subr.mxu0 0.0
      %506 = vmatpush1.msra.mxu0 0.0
      %507 = vmatprep.subr.mxu0 0.0
      %508 = vmatpush1.msra.mxu0 0.0
      %509 = vmatprep.subr.mxu0 0.0
      %510 = vmatpush1.msra.mxu0 0.0
      %511 = vmatprep.subr.mxu0 0.0
      %512 = vmatpush1.msra.mxu0 0.0
      %513 = vmatprep.subr.mxu0 0.0
      %514 = vmatpush1.msra.mxu0 0.0
      %515 = vmatprep.subr.mxu0 0.0
      %516 = vmatpush1.msra.mxu0 0.0
      %517 = vmatprep.subr.mxu0 0.0
      %518 = vmatpush1.msra.mxu0 0.0
      %519 = vmatprep.subr.mxu0 0.0
      %520 = vmatpush1.msra.mxu0 0.0
      %521 = vmatprep.subr.mxu0 0.0
      %522 = vmatpush1.msra.mxu0 0.0
      %523 = vmatprep.subr.mxu0 0.0
      %524 = vmatpush1.msra.mxu0 0.0
      %525 = vmatprep.subr.mxu0 0.0
      %526 = vmatpush1.msra.mxu0 0.0
      %527 = vmatprep.subr.mxu0 0.0
      %528 = vmatpush1.msra.mxu0 0.0
      %529 = vmatprep.subr.mxu0 0.0
      %530 = vmatpush1.msra.mxu0 0.0
      %531 = vmatprep.subr.mxu0 0.0
      %532 = vmatpush1.msra.mxu0 0.0
      %533 = vmatprep.subr.mxu0 0.0
      %534 = vmatpush1.msra.mxu0 0.0
      %535 = vmatprep.subr.mxu0 0.0
      %536 = vmatpush1.msra.mxu0 0.0
      %537 = vmatprep.subr.mxu0 0.0
      %538 = vmatpush1.msra.mxu0 0.0
      %539 = vmatprep.subr.mxu0 0.0
      %540 = vmatpush1.msra.mxu0 0.0
      %541 = vmatprep.subr.mxu0 0.0
      %542 = vmatpush1.msra.mxu0 0.0
      %543 = vmatprep.subr.mxu0 0.0
      %544 = vmatpush1.msra.mxu0 0.0
      %545 = vmatprep.subr.mxu0 0.0
      %546 = vmatpush1.msra.mxu0 0.0
      %547 = vmatprep.subr.mxu0 0.0
      %548 = vmatpush1.msra.mxu0 0.0
      %549 = vmatprep.subr.mxu0 0.0
      %550 = vmatpush1.msra.mxu0 0.0
      %551 = vmatprep.subr.mxu0 0.0
      %552 = vmatpush1.msra.mxu0 0.0
      %553 = vmatprep.subr.mxu0 0.0
      %554 = vmatpush1.msra.mxu0 0.0
      %555 = vmatprep.subr.mxu0 0.0
      %556 = vmatpush1.msra.mxu0 0.0
      %557 = vmatprep.subr.mxu0 0.0
      %558 = vmatpush1.msra.mxu0 0.0
      %559 = vmatprep.subr.mxu0 0.0
      %560 = vmatpush1.msra.mxu0 0.0
      %561 = vmatprep.subr.mxu0 0.0
      %562 = vmatpush1.msra.mxu0 0.0
      %563 = vmatprep.mubr.f32.mxu0 0.0
      %564 = vmatmul.mubr.f32.gmra.mrb[0].mxu0 %v418
      %v565 = vpop.f32.mrb[0].mxu0
      %v566 = vadd.f32 %v409, %v565
      %v567 = vpop.f32.mrb[0].mxu0
      %v568 = vadd.f32 %v411, %v567
      %569 = vdwg.mxu0
      %s570 = scalar_lea.vmem %s1, 16
      %v571 = vld [vmem:[%s570] sm:$0xff]
      %s572 = scalar_lea.vmem %s232, 40
      %v573 = vld [vmem:[%s572] sm:$0xff]
      %v574 = vld [vmem:[%s572 + $0x8] sm:$0xff]
      %v577 = vcombine.high %v573, %v573
      %v578 = vcombine.high %v574, %v574
      %v580 = vsel %vm258, %v571, 0
      %v582 = vsel %vm262, %v573, 0
      %v584 = vsel %vm262, %v577, 0
      %v586 = vsel %vm262, %v574, 0
      %v588 = vsel %vm262, %v578, 0
      %590 = vmatprep.subr.mxu0 %v584
      %591 = vmatpush1.msra.mxu0 %v582
      %592 = vmatprep.subr.mxu0 0.0
      %593 = vmatpush1.msra.mxu0 0.0
      %594 = vmatprep.subr.mxu0 0.0
      %595 = vmatpush1.msra.mxu0 0.0
      %596 = vmatprep.subr.mxu0 0.0
      %597 = vmatpush1.msra.mxu0 0.0
      %598 = vmatprep.subr.mxu0 0.0
      %599 = vmatpush1.msra.mxu0 0.0
      %600 = vmatprep.subr.mxu0 0.0
      %601 = vmatpush1.msra.mxu0 0.0
      %602 = vmatprep.subr.mxu0 0.0
      %603 = vmatpush1.msra.mxu0 0.0
      %604 = vmatprep.subr.mxu0 0.0
      %605 = vmatpush1.msra.mxu0 0.0
      %606 = vmatprep.subr.mxu0 0.0
      %607 = vmatpush1.msra.mxu0 0.0
      %608 = vmatprep.subr.mxu0 0.0
      %609 = vmatpush1.msra.mxu0 0.0
      %610 = vmatprep.subr.mxu0 0.0
      %611 = vmatpush1.msra.mxu0 0.0
      %612 = vmatprep.subr.mxu0 0.0
      %613 = vmatpush1.msra.mxu0 0.0
      %614 = vmatprep.subr.mxu0 0.0
      %615 = vmatpush1.msra.mxu0 0.0
      %616 = vmatprep.subr.mxu0 0.0
      %617 = vmatpush1.msra.mxu0 0.0
      %618 = vmatprep.subr.mxu0 0.0
      %619 = vmatpush1.msra.mxu0 0.0
      %620 = vmatprep.subr.mxu0 0.0
      %621 = vmatpush1.msra.mxu0 0.0
      %622 = vmatprep.subr.mxu0 0.0
      %623 = vmatpush1.msra.mxu0 0.0
      %624 = vmatprep.subr.mxu0 0.0
      %625 = vmatpush1.msra.mxu0 0.0
      %626 = vmatprep.subr.mxu0 0.0
      %627 = vmatpush1.msra.mxu0 0.0
      %628 = vmatprep.subr.mxu0 0.0
      %629 = vmatpush1.msra.mxu0 0.0
      %630 = vmatprep.subr.mxu0 0.0
      %631 = vmatpush1.msra.mxu0 0.0
      %632 = vmatprep.subr.mxu0 0.0
      %633 = vmatpush1.msra.mxu0 0.0
      %634 = vmatprep.subr.mxu0 0.0
      %635 = vmatpush1.msra.mxu0 0.0
      %636 = vmatprep.subr.mxu0 0.0
      %637 = vmatpush1.msra.mxu0 0.0
      %638 = vmatprep.subr.mxu0 0.0
      %639 = vmatpush1.msra.mxu0 0.0
      %640 = vmatprep.subr.mxu0 0.0
      %641 = vmatpush1.msra.mxu0 0.0
      %642 = vmatprep.subr.mxu0 0.0
      %643 = vmatpush1.msra.mxu0 0.0
      %644 = vmatprep.subr.mxu0 0.0
      %645 = vmatpush1.msra.mxu0 0.0
      %646 = vmatprep.subr.mxu0 0.0
      %647 = vmatpush1.msra.mxu0 0.0
      %648 = vmatprep.subr.mxu0 0.0
      %649 = vmatpush1.msra.mxu0 0.0
      %650 = vmatprep.subr.mxu0 0.0
      %651 = vmatpush1.msra.mxu0 0.0
      %652 = vmatprep.subr.mxu0 0.0
      %653 = vmatpush1.msra.mxu0 0.0
      %654 = vmatprep.mubr.f32.mxu0 0.0
      %655 = vmatmul.mubr.f32.gmra.mrb[0].mxu0 %v580
      %v656 = vpop.f32.mrb[0].mxu0
      %v657 = vadd.f32 0.0, %v656
      %v658 = vpop.f32.mrb[0].mxu0
      %v659 = vadd.f32 0.0, %v658
      %660 = vdwg.mxu0
      %661 = vmatprep.subr.mxu0 %v588
      %662 = vmatpush1.msra.mxu0 %v586
      %663 = vmatprep.subr.mxu0 0.0
      %664 = vmatpush1.msra.mxu0 0.0
      %665 = vmatprep.subr.mxu0 0.0
      %666 = vmatpush1.msra.mxu0 0.0
      %667 = vmatprep.subr.mxu0 0.0
      %668 = vmatpush1.msra.mxu0 0.0
      %669 = vmatprep.subr.mxu0 0.0
      %670 = vmatpush1.msra.mxu0 0.0
      %671 = vmatprep.subr.mxu0 0.0
      %672 = vmatpush1.msra.mxu0 0.0
      %673 = vmatprep.subr.mxu0 0.0
      %674 = vmatpush1.msra.mxu0 0.0
      %675 = vmatprep.subr.mxu0 0.0
      %676 = vmatpush1.msra.mxu0 0.0
      %677 = vmatprep.subr.mxu0 0.0
      %678 = vmatpush1.msra.mxu0 0.0
      %679 = vmatprep.subr.mxu0 0.0
      %680 = vmatpush1.msra.mxu0 0.0
      %681 = vmatprep.subr.mxu0 0.0
      %682 = vmatpush1.msra.mxu0 0.0
      %683 = vmatprep.subr.mxu0 0.0
      %684 = vmatpush1.msra.mxu0 0.0
      %685 = vmatprep.subr.mxu0 0.0
      %686 = vmatpush1.msra.mxu0 0.0
      %687 = vmatprep.subr.mxu0 0.0
      %688 = vmatpush1.msra.mxu0 0.0
      %689 = vmatprep.subr.mxu0 0.0
      %690 = vmatpush1.msra.mxu0 0.0
      %691 = vmatprep.subr.mxu0 0.0
      %692 = vmatpush1.msra.mxu0 0.0
      %693 = vmatprep.subr.mxu0 0.0
      %694 = vmatpush1.msra.mxu0 0.0
      %695 = vmatprep.subr.mxu0 0.0
      %696 = vmatpush1.msra.mxu0 0.0
      %697 = vmatprep.subr.mxu0 0.0
      %698 = vmatpush1.msra.mxu0 0.0
      %699 = vmatprep.subr.mxu0 0.0
      %700 = vmatpush1.msra.mxu0 0.0
      %701 = vmatprep.subr.mxu0 0.0
      %702 = vmatpush1.msra.mxu0 0.0
      %703 = vmatprep.subr.mxu0 0.0
      %704 = vmatpush1.msra.mxu0 0.0
      %705 = vmatprep.subr.mxu0 0.0
      %706 = vmatpush1.msra.mxu0 0.0
      %707 = vmatprep.subr.mxu0 0.0
      %708 = vmatpush1.msra.mxu0 0.0
      %709 = vmatprep.subr.mxu0 0.0
      %710 = vmatpush1.msra.mxu0 0.0
      %711 = vmatprep.subr.mxu0 0.0
      %712 = vmatpush1.msra.mxu0 0.0
      %713 = vmatprep.subr.mxu0 0.0
      %714 = vmatpush1.msra.mxu0 0.0
      %715 = vmatprep.subr.mxu0 0.0
      %716 = vmatpush1.msra.mxu0 0.0
      %717 = vmatprep.subr.mxu0 0.0
      %718 = vmatpush1.msra.mxu0 0.0
      %719 = vmatprep.subr.mxu0 0.0
      %720 = vmatpush1.msra.mxu0 0.0
      %721 = vmatprep.subr.mxu0 0.0
      %722 = vmatpush1.msra.mxu0 0.0
      %723 = vmatprep.subr.mxu0 0.0
      %724 = vmatpush1.msra.mxu0 0.0
      %725 = vmatprep.mubr.f32.mxu0 0.0
      %726 = vmatmul.mubr.f32.gmra.mrb[0].mxu0 %v580
      %v727 = vpop.f32.mrb[0].mxu0
      %v728 = vadd.f32 0.0, %v727
      %v729 = vpop.f32.mrb[0].mxu0
      %v730 = vadd.f32 0.0, %v729
      %731 = vdwg.mxu0
      %v732 = vadd.f32 %v495, %v657
      %v733 = vadd.f32 %v497, %v659
      %v734 = vadd.f32 %v566, %v728
      %v735 = vadd.f32 %v568, %v730
      %s736 = scalar_lea.vmem %s1, 24
      %v737 = vld [vmem:[%s736] sm:$0xff]
      %s738 = scalar_lea.vmem %s232, 60
      %v739 = vld [vmem:[%s738] sm:$0xff]
      %v740 = vld [vmem:[%s738 + $0x8] sm:$0xff]
      %v743 = vcombine.high %v739, %v739
      %v744 = vcombine.high %v740, %v740
      %v746 = vsel %vm258, %v737, 0
      %v748 = vsel %vm262, %v739, 0
      %v750 = vsel %vm262, %v743, 0
      %v752 = vsel %vm262, %v740, 0
      %v754 = vsel %vm262, %v744, 0
      %756 = vmatprep.subr.mxu0 %v750
      %757 = vmatpush1.msra.mxu0 %v748
      %758 = vmatprep.subr.mxu0 0.0
      %759 = vmatpush1.msra.mxu0 0.0
      %760 = vmatprep.subr.mxu0 0.0
      %761 = vmatpush1.msra.mxu0 0.0
      %762 = vmatprep.subr.mxu0 0.0
      %763 = vmatpush1.msra.mxu0 0.0
      %764 = vmatprep.subr.mxu0 0.0
      %765 = vmatpush1.msra.mxu0 0.0
      %766 = vmatprep.subr.mxu0 0.0
      %767 = vmatpush1.msra.mxu0 0.0
      %768 = vmatprep.subr.mxu0 0.0
      %769 = vmatpush1.msra.mxu0 0.0
      %770 = vmatprep.subr.mxu0 0.0
      %771 = vmatpush1.msra.mxu0 0.0
      %772 = vmatprep.subr.mxu0 0.0
      %773 = vmatpush1.msra.mxu0 0.0
      %774 = vmatprep.subr.mxu0 0.0
      %775 = vmatpush1.msra.mxu0 0.0
      %776 = vmatprep.subr.mxu0 0.0
      %777 = vmatpush1.msra.mxu0 0.0
      %778 = vmatprep.subr.mxu0 0.0
      %779 = vmatpush1.msra.mxu0 0.0
      %780 = vmatprep.subr.mxu0 0.0
      %781 = vmatpush1.msra.mxu0 0.0
      %782 = vmatprep.subr.mxu0 0.0
      %783 = vmatpush1.msra.mxu0 0.0
      %784 = vmatprep.subr.mxu0 0.0
      %785 = vmatpush1.msra.mxu0 0.0
      %786 = vmatprep.subr.mxu0 0.0
      %787 = vmatpush1.msra.mxu0 0.0
      %788 = vmatprep.subr.mxu0 0.0
      %789 = vmatpush1.msra.mxu0 0.0
      %790 = vmatprep.subr.mxu0 0.0
      %791 = vmatpush1.msra.mxu0 0.0
      %792 = vmatprep.subr.mxu0 0.0
      %793 = vmatpush1.msra.mxu0 0.0
      %794 = vmatprep.subr.mxu0 0.0
      %795 = vmatpush1.msra.mxu0 0.0
      %796 = vmatprep.subr.mxu0 0.0
      %797 = vmatpush1.msra.mxu0 0.0
      %798 = vmatprep.subr.mxu0 0.0
      %799 = vmatpush1.msra.mxu0 0.0
      %800 = vmatprep.subr.mxu0 0.0
      %801 = vmatpush1.msra.mxu0 0.0
      %802 = vmatprep.subr.mxu0 0.0
      %803 = vmatpush1.msra.mxu0 0.0
      %804 = vmatprep.subr.mxu0 0.0
      %805 = vmatpush1.msra.mxu0 0.0
      %806 = vmatprep.subr.mxu0 0.0
      %807 = vmatpush1.msra.mxu0 0.0
      %808 = vmatprep.subr.mxu0 0.0
      %809 = vmatpush1.msra.mxu0 0.0
      %810 = vmatprep.subr.mxu0 0.0
      %811 = vmatpush1.msra.mxu0 0.0
      %812 = vmatprep.subr.mxu0 0.0
      %813 = vmatpush1.msra.mxu0 0.0
      %814 = vmatprep.subr.mxu0 0.0
      %815 = vmatpush1.msra.mxu0 0.0
      %816 = vmatprep.subr.mxu0 0.0
      %817 = vmatpush1.msra.mxu0 0.0
      %818 = vmatprep.subr.mxu0 0.0
      %819 = vmatpush1.msra.mxu0 0.0
      %820 = vmatprep.mubr.f32.mxu0 0.0
      %821 = vmatmul.mubr.f32.gmra.mrb[0].mxu0 %v746
      %v822 = vpop.f32.mrb[0].mxu0
      %v823 = vadd.f32 0.0, %v822
      %v824 = vpop.f32.mrb[0].mxu0
      %v825 = vadd.f32 0.0, %v824
      %826 = vdwg.mxu0
      %827 = vmatprep.subr.mxu0 %v754
      %828 = vmatpush1.msra.mxu0 %v752
      %829 = vmatprep.subr.mxu0 0.0
      %830 = vmatpush1.msra.mxu0 0.0
      %831 = vmatprep.subr.mxu0 0.0
      %832 = vmatpush1.msra.mxu0 0.0
      %833 = vmatprep.subr.mxu0 0.0
      %834 = vmatpush1.msra.mxu0 0.0
      %835 = vmatprep.subr.mxu0 0.0
      %836 = vmatpush1.msra.mxu0 0.0
      %837 = vmatprep.subr.mxu0 0.0
      %838 = vmatpush1.msra.mxu0 0.0
      %839 = vmatprep.subr.mxu0 0.0
      %840 = vmatpush1.msra.mxu0 0.0
      %841 = vmatprep.subr.mxu0 0.0
      %842 = vmatpush1.msra.mxu0 0.0
      %843 = vmatprep.subr.mxu0 0.0
      %844 = vmatpush1.msra.mxu0 0.0
      %845 = vmatprep.subr.mxu0 0.0
      %846 = vmatpush1.msra.mxu0 0.0
      %847 = vmatprep.subr.mxu0 0.0
      %848 = vmatpush1.msra.mxu0 0.0
      %849 = vmatprep.subr.mxu0 0.0
      %850 = vmatpush1.msra.mxu0 0.0
      %851 = vmatprep.subr.mxu0 0.0
      %852 = vmatpush1.msra.mxu0 0.0
      %853 = vmatprep.subr.mxu0 0.0
      %854 = vmatpush1.msra.mxu0 0.0
      %855 = vmatprep.subr.mxu0 0.0
      %856 = vmatpush1.msra.mxu0 0.0
      %857 = vmatprep.subr.mxu0 0.0
      %858 = vmatpush1.msra.mxu0 0.0
      %859 = vmatprep.subr.mxu0 0.0
      %860 = vmatpush1.msra.mxu0 0.0
      %861 = vmatprep.subr.mxu0 0.0
      %862 = vmatpush1.msra.mxu0 0.0
      %863 = vmatprep.subr.mxu0 0.0
      %864 = vmatpush1.msra.mxu0 0.0
      %865 = vmatprep.subr.mxu0 0.0
      %866 = vmatpush1.msra.mxu0 0.0
      %867 = vmatprep.subr.mxu0 0.0
      %868 = vmatpush1.msra.mxu0 0.0
      %869 = vmatprep.subr.mxu0 0.0
      %870 = vmatpush1.msra.mxu0 0.0
      %871 = vmatprep.subr.mxu0 0.0
      %872 = vmatpush1.msra.mxu0 0.0
      %873 = vmatprep.subr.mxu0 0.0
      %874 = vmatpush1.msra.mxu0 0.0
      %875 = vmatprep.subr.mxu0 0.0
      %876 = vmatpush1.msra.mxu0 0.0
      %877 = vmatprep.subr.mxu0 0.0
      %878 = vmatpush1.msra.mxu0 0.0
      %879 = vmatprep.subr.mxu0 0.0
      %880 = vmatpush1.msra.mxu0 0.0
      %881 = vmatprep.subr.mxu0 0.0
      %882 = vmatpush1.msra.mxu0 0.0
      %883 = vmatprep.subr.mxu0 0.0
      %884 = vmatpush1.msra.mxu0 0.0
      %885 = vmatprep.subr.mxu0 0.0
      %886 = vmatpush1.msra.mxu0 0.0
      %887 = vmatprep.subr.mxu0 0.0
      %888 = vmatpush1.msra.mxu0 0.0
      %889 = vmatprep.subr.mxu0 0.0
      %890 = vmatpush1.msra.mxu0 0.0
      %891 = vmatprep.mubr.f32.mxu0 0.0
      %892 = vmatmul.mubr.f32.gmra.mrb[0].mxu0 %v746
      %v893 = vpop.f32.mrb[0].mxu0
      %v894 = vadd.f32 0.0, %v893
      %v895 = vpop.f32.mrb[0].mxu0
      %v896 = vadd.f32 0.0, %v895
      %897 = vdwg.mxu0
      %v898 = vadd.f32 %v732, %v823
      %v899 = vadd.f32 %v733, %v825
      %v900 = vadd.f32 %v734, %v894
      %v901 = vadd.f32 %v735, %v896
      %s902 = scalar_lea.vmem %s1, 64
      %v903 = vld [vmem:[%s902] sm:$0xff]
      %v904 = vld [vmem:[%s232] sm:$0xff]
      %v905 = vld [vmem:[%s232 + $0x8] sm:$0xff]
      %v906 = vld [vmem:[%s232 + $0x10] sm:$0xf]
      %v910 = vcombine.high %v904, %v904
      %v911 = vcombine.high %v905, %v905
      %912 = vrot.lane.b32.xlu0 %v904, 96
      %v913 = vpop.permute.xlu0 %912
      %914 = vrot.lane.b32.xlu0 %v910, 96
      %v915 = vpop.permute.xlu0 %914
      %916 = vrot.lane.b32.xlu0 %v905, 96
      %v917 = vpop.permute.xlu0 %916
      %918 = vrot.lane.b32.xlu0 %v911, 96
      %v919 = vpop.permute.xlu0 %918
      %920 = vrot.lane.b32.xlu0 %v906, 96
      %v921 = vpop.permute.xlu0 %920
      %vm922 = vcmask 785408
      %v923 = vsel %vm922, %v913, %v915
      %v924 = vsel %vm922, %v915, %v917
      %v925 = vsel %vm922, %v917, %v919
      %v926 = vsel %vm922, %v919, %v921
      %v928 = vsel %vm258, %v903, 0
      %v930 = vsel %vm262, %v923, 0
      %v932 = vsel %vm262, %v924, 0
      %v934 = vsel %vm262, %v925, 0
      %v936 = vsel %vm262, %v926, 0
      %938 = vmatprep.subr.mxu0 %v932
      %939 = vmatpush1.msra.mxu0 %v930
      %940 = vmatprep.subr.mxu0 0.0
      %941 = vmatpush1.msra.mxu0 0.0
      %942 = vmatprep.subr.mxu0 0.0
      %943 = vmatpush1.msra.mxu0 0.0
      %944 = vmatprep.subr.mxu0 0.0
      %945 = vmatpush1.msra.mxu0 0.0
      %946 = vmatprep.subr.mxu0 0.0
      %947 = vmatpush1.msra.mxu0 0.0
      %948 = vmatprep.subr.mxu0 0.0
      %949 = vmatpush1.msra.mxu0 0.0
      %950 = vmatprep.subr.mxu0 0.0
      %951 = vmatpush1.msra.mxu0 0.0
      %952 = vmatprep.subr.mxu0 0.0
      %953 = vmatpush1.msra.mxu0 0.0
      %954 = vmatprep.subr.mxu0 0.0
      %955 = vmatpush1.msra.mxu0 0.0
      %956 = vmatprep.subr.mxu0 0.0
      %957 = vmatpush1.msra.mxu0 0.0
      %958 = vmatprep.subr.mxu0 0.0
      %959 = vmatpush1.msra.mxu0 0.0
      %960 = vmatprep.subr.mxu0 0.0
      %961 = vmatpush1.msra.mxu0 0.0
      %962 = vmatprep.subr.mxu0 0.0
      %963 = vmatpush1.msra.mxu0 0.0
      %964 = vmatprep.subr.mxu0 0.0
      %965 = vmatpush1.msra.mxu0 0.0
      %966 = vmatprep.subr.mxu0 0.0
      %967 = vmatpush1.msra.mxu0 0.0
      %968 = vmatprep.subr.mxu0 0.0
      %969 = vmatpush1.msra.mxu0 0.0
      %970 = vmatprep.subr.mxu0 0.0
      %971 = vmatpush1.msra.mxu0 0.0
      %972 = vmatprep.subr.mxu0 0.0
      %973 = vmatpush1.msra.mxu0 0.0
      %974 = vmatprep.subr.mxu0 0.0
      %975 = vmatpush1.msra.mxu0 0.0
      %976 = vmatprep.subr.mxu0 0.0
      %977 = vmatpush1.msra.mxu0 0.0
      %978 = vmatprep.subr.mxu0 0.0
      %979 = vmatpush1.msra.mxu0 0.0
      %980 = vmatprep.subr.mxu0 0.0
      %981 = vmatpush1.msra.mxu0 0.0
      %982 = vmatprep.subr.mxu0 0.0
      %983 = vmatpush1.msra.mxu0 0.0
      %984 = vmatprep.subr.mxu0 0.0
      %985 = vmatpush1.msra.mxu0 0.0
      %986 = vmatprep.subr.mxu0 0.0
      %987 = vmatpush1.msra.mxu0 0.0
      %988 = vmatprep.subr.mxu0 0.0
      %989 = vmatpush1.msra.mxu0 0.0
      %990 = vmatprep.subr.mxu0 0.0
      %991 = vmatpush1.msra.mxu0 0.0
      %992 = vmatprep.subr.mxu0 0.0
      %993 = vmatpush1.msra.mxu0 0.0
      %994 = vmatprep.subr.mxu0 0.0
      %995 = vmatpush1.msra.mxu0 0.0
      %996 = vmatprep.subr.mxu0 0.0
      %997 = vmatpush1.msra.mxu0 0.0
      %998 = vmatprep.subr.mxu0 0.0
      %999 = vmatpush1.msra.mxu0 0.0
      %1000 = vmatprep.subr.mxu0 0.0
      %1001 = vmatpush1.msra.mxu0 0.0
      %1002 = vmatprep.mubr.f32.mxu0 0.0
      %1003 = vmatmul.mubr.f32.gmra.mrb[0].mxu0 %v928
      %v1004 = vpop.f32.mrb[0].mxu0
      %v1005 = vadd.f32 0.0, %v1004
      %v1006 = vpop.f32.mrb[0].mxu0
      %v1007 = vadd.f32 0.0, %v1006
      %1008 = vdwg.mxu0
      %1009 = vmatprep.subr.mxu0 %v936
      %1010 = vmatpush1.msra.mxu0 %v934
      %1011 = vmatprep.subr.mxu0 0.0
      %1012 = vmatpush1.msra.mxu0 0.0
      %1013 = vmatprep.subr.mxu0 0.0
      %1014 = vmatpush1.msra.mxu0 0.0
      %1015 = vmatprep.subr.mxu0 0.0
      %1016 = vmatpush1.msra.mxu0 0.0
      %1017 = vmatprep.subr.mxu0 0.0
      %1018 = vmatpush1.msra.mxu0 0.0
      %1019 = vmatprep.subr.mxu0 0.0
      %1020 = vmatpush1.msra.mxu0 0.0
      %1021 = vmatprep.subr.mxu0 0.0
      %1022 = vmatpush1.msra.mxu0 0.0
      %1023 = vmatprep.subr.mxu0 0.0
      %1024 = vmatpush1.msra.mxu0 0.0
      %1025 = vmatprep.subr.mxu0 0.0
      %1026 = vmatpush1.msra.mxu0 0.0
      %1027 = vmatprep.subr.mxu0 0.0
      %1028 = vmatpush1.msra.mxu0 0.0
      %1029 = vmatprep.subr.mxu0 0.0
      %1030 = vmatpush1.msra.mxu0 0.0
      %1031 = vmatprep.subr.mxu0 0.0
      %1032 = vmatpush1.msra.mxu0 0.0
      %1033 = vmatprep.subr.mxu0 0.0
      %1034 = vmatpush1.msra.mxu0 0.0
      %1035 = vmatprep.subr.mxu0 0.0
      %1036 = vmatpush1.msra.mxu0 0.0
      %1037 = vmatprep.subr.mxu0 0.0
      %1038 = vmatpush1.msra.mxu0 0.0
      %1039 = vmatprep.subr.mxu0 0.0
      %1040 = vmatpush1.msra.mxu0 0.0
      %1041 = vmatprep.subr.mxu0 0.0
      %1042 = vmatpush1.msra.mxu0 0.0
      %1043 = vmatprep.subr.mxu0 0.0
      %1044 = vmatpush1.msra.mxu0 0.0
      %1045 = vmatprep.subr.mxu0 0.0
      %1046 = vmatpush1.msra.mxu0 0.0
      %1047 = vmatprep.subr.mxu0 0.0
      %1048 = vmatpush1.msra.mxu0 0.0
      %1049 = vmatprep.subr.mxu0 0.0
      %1050 = vmatpush1.msra.mxu0 0.0
      %1051 = vmatprep.subr.mxu0 0.0
      %1052 = vmatpush1.msra.mxu0 0.0
      %1053 = vmatprep.subr.mxu0 0.0
      %1054 = vmatpush1.msra.mxu0 0.0
      %1055 = vmatprep.subr.mxu0 0.0
      %1056 = vmatpush1.msra.mxu0 0.0
      %1057 = vmatprep.subr.mxu0 0.0
      %1058 = vmatpush1.msra.mxu0 0.0
      %1059 = vmatprep.subr.mxu0 0.0
      %1060 = vmatpush1.msra.mxu0 0.0
      %1061 = vmatprep.subr.mxu0 0.0
      %1062 = vmatpush1.msra.mxu0 0.0
      %1063 = vmatprep.subr.mxu0 0.0
      %1064 = vmatpush1.msra.mxu0 0.0
      %1065 = vmatprep.subr.mxu0 0.0
      %1066 = vmatpush1.msra.mxu0 0.0
      %1067 = vmatprep.subr.mxu0 0.0
      %1068 = vmatpush1.msra.mxu0 0.0
      %1069 = vmatprep.subr.mxu0 0.0
      %1070 = vmatpush1.msra.mxu0 0.0
      %1071 = vmatprep.subr.mxu0 0.0
      %1072 = vmatpush1.msra.mxu0 0.0
      %1073 = vmatprep.mubr.f32.mxu0 0.0
      %1074 = vmatmul.mubr.f32.gmra.mrb[0].mxu0 %v928
      %v1075 = vpop.f32.mrb[0].mxu0
      %v1076 = vadd.f32 0.0, %v1075
      %v1077 = vpop.f32.mrb[0].mxu0
      %v1078 = vadd.f32 0.0, %v1077
      %1079 = vdwg.mxu0
      %v1080 = vadd.f32 %v898, %v1005
      %v1081 = vadd.f32 %v899, %v1007
      %v1082 = vadd.f32 %v900, %v1076
      %v1083 = vadd.f32 %v901, %v1078
      %s1084 = scalar_lea.vmem %s1, 72
      %v1085 = vld [vmem:[%s1084] sm:$0xff]
      %v1086 = vld [vmem:[%s251] sm:$0xff]
      %v1087 = vld [vmem:[%s251 + $0x8] sm:$0xff]
      %v1088 = vld [vmem:[%s251 + $0x10] sm:$0xf]
      %v1092 = vcombine.high %v1086, %v1086
      %v1093 = vcombine.high %v1087, %v1087
      %1094 = vrot.lane.b32.xlu0 %v1086, 96
      %v1095 = vpop.permute.xlu0 %1094
      %1096 = vrot.lane.b32.xlu0 %v1092, 96
      %v1097 = vpop.permute.xlu0 %1096
      %1098 = vrot.lane.b32.xlu0 %v1087, 96
      %v1099 = vpop.permute.xlu0 %1098
      %1100 = vrot.lane.b32.xlu0 %v1093, 96
      %v1101 = vpop.permute.xlu0 %1100
      %1102 = vrot.lane.b32.xlu0 %v1088, 96
      %v1103 = vpop.permute.xlu0 %1102
      %v1104 = vsel %vm922, %v1095, %v1097
      %v1105 = vsel %vm922, %v1097, %v1099
      %v1106 = vsel %vm922, %v1099, %v1101
      %v1107 = vsel %vm922, %v1101, %v1103
      %v1109 = vsel %vm258, %v1085, 0
      %v1111 = vsel %vm262, %v1104, 0
      %v1113 = vsel %vm262, %v1105, 0
      %v1115 = vsel %vm262, %v1106, 0
      %v1117 = vsel %vm262, %v1107, 0
      %1119 = vmatprep.subr.mxu0 %v1113
      %1120 = vmatpush1.msra.mxu0 %v1111
      %1121 = vmatprep.subr.mxu0 0.0
      %1122 = vmatpush1.msra.mxu0 0.0
      %1123 = vmatprep.subr.mxu0 0.0
      %1124 = vmatpush1.msra.mxu0 0.0
      %1125 = vmatprep.subr.mxu0 0.0
      %1126 = vmatpush1.msra.mxu0 0.0
      %1127 = vmatprep.subr.mxu0 0.0
      %1128 = vmatpush1.msra.mxu0 0.0
      %1129 = vmatprep.subr.mxu0 0.0
      %1130 = vmatpush1.msra.mxu0 0.0
      %1131 = vmatprep.subr.mxu0 0.0
      %1132 = vmatpush1.msra.mxu0 0.0
      %1133 = vmatprep.subr.mxu0 0.0
      %1134 = vmatpush1.msra.mxu0 0.0
      %1135 = vmatprep.subr.mxu0 0.0
      %1136 = vmatpush1.msra.mxu0 0.0
      %1137 = vmatprep.subr.mxu0 0.0
      %1138 = vmatpush1.msra.mxu0 0.0
      %1139 = vmatprep.subr.mxu0 0.0
      %1140 = vmatpush1.msra.mxu0 0.0
      %1141 = vmatprep.subr.mxu0 0.0
      %1142 = vmatpush1.msra.mxu0 0.0
      %1143 = vmatprep.subr.mxu0 0.0
      %1144 = vmatpush1.msra.mxu0 0.0
      %1145 = vmatprep.subr.mxu0 0.0
      %1146 = vmatpush1.msra.mxu0 0.0
      %1147 = vmatprep.subr.mxu0 0.0
      %1148 = vmatpush1.msra.mxu0 0.0
      %1149 = vmatprep.subr.mxu0 0.0
      %1150 = vmatpush1.msra.mxu0 0.0
      %1151 = vmatprep.subr.mxu0 0.0
      %1152 = vmatpush1.msra.mxu0 0.0
      %1153 = vmatprep.subr.mxu0 0.0
      %1154 = vmatpush1.msra.mxu0 0.0
      %1155 = vmatprep.subr.mxu0 0.0
      %1156 = vmatpush1.msra.mxu0 0.0
      %1157 = vmatprep.subr.mxu0 0.0
      %1158 = vmatpush1.msra.mxu0 0.0
      %1159 = vmatprep.subr.mxu0 0.0
      %1160 = vmatpush1.msra.mxu0 0.0
      %1161 = vmatprep.subr.mxu0 0.0
      %1162 = vmatpush1.msra.mxu0 0.0
      %1163 = vmatprep.subr.mxu0 0.0
      %1164 = vmatpush1.msra.mxu0 0.0
      %1165 = vmatprep.subr.mxu0 0.0
      %1166 = vmatpush1.msra.mxu0 0.0
      %1167 = vmatprep.subr.mxu0 0.0
      %1168 = vmatpush1.msra.mxu0 0.0
      %1169 = vmatprep.subr.mxu0 0.0
      %1170 = vmatpush1.msra.mxu0 0.0
      %1171 = vmatprep.subr.mxu0 0.0
      %1172 = vmatpush1.msra.mxu0 0.0
      %1173 = vmatprep.subr.mxu0 0.0
      %1174 = vmatpush1.msra.mxu0 0.0
      %1175 = vmatprep.subr.mxu0 0.0
      %1176 = vmatpush1.msra.mxu0 0.0
      %1177 = vmatprep.subr.mxu0 0.0
      %1178 = vmatpush1.msra.mxu0 0.0
      %1179 = vmatprep.subr.mxu0 0.0
      %1180 = vmatpush1.msra.mxu0 0.0
      %1181 = vmatprep.subr.mxu0 0.0
      %1182 = vmatpush1.msra.mxu0 0.0
      %1183 = vmatprep.mubr.f32.mxu0 0.0
      %1184 = vmatmul.mubr.f32.gmra.mrb[0].mxu0 %v1109
      %v1185 = vpop.f32.mrb[0].mxu0
      %v1186 = vadd.f32 0.0, %v1185
      %v1187 = vpop.f32.mrb[0].mxu0
      %v1188 = vadd.f32 0.0, %v1187
      %1189 = vdwg.mxu0
      %1190 = vmatprep.subr.mxu0 %v1117
      %1191 = vmatpush1.msra.mxu0 %v1115
      %1192 = vmatprep.subr.mxu0 0.0
      %1193 = vmatpush1.msra.mxu0 0.0
      %1194 = vmatprep.subr.mxu0 0.0
      %1195 = vmatpush1.msra.mxu0 0.0
      %1196 = vmatprep.subr.mxu0 0.0
      %1197 = vmatpush1.msra.mxu0 0.0
      %1198 = vmatprep.subr.mxu0 0.0
      %1199 = vmatpush1.msra.mxu0 0.0
      %1200 = vmatprep.subr.mxu0 0.0
      %1201 = vmatpush1.msra.mxu0 0.0
      %1202 = vmatprep.subr.mxu0 0.0
      %1203 = vmatpush1.msra.mxu0 0.0
      %1204 = vmatprep.subr.mxu0 0.0
      %1205 = vmatpush1.msra.mxu0 0.0
      %1206 = vmatprep.subr.mxu0 0.0
      %1207 = vmatpush1.msra.mxu0 0.0
      %1208 = vmatprep.subr.mxu0 0.0
      %1209 = vmatpush1.msra.mxu0 0.0
      %1210 = vmatprep.subr.mxu0 0.0
      %1211 = vmatpush1.msra.mxu0 0.0
      %1212 = vmatprep.subr.mxu0 0.0
      %1213 = vmatpush1.msra.mxu0 0.0
      %1214 = vmatprep.subr.mxu0 0.0
      %1215 = vmatpush1.msra.mxu0 0.0
      %1216 = vmatprep.subr.mxu0 0.0
      %1217 = vmatpush1.msra.mxu0 0.0
      %1218 = vmatprep.subr.mxu0 0.0
      %1219 = vmatpush1.msra.mxu0 0.0
      %1220 = vmatprep.subr.mxu0 0.0
      %1221 = vmatpush1.msra.mxu0 0.0
      %1222 = vmatprep.subr.mxu0 0.0
      %1223 = vmatpush1.msra.mxu0 0.0
      %1224 = vmatprep.subr.mxu0 0.0
      %1225 = vmatpush1.msra.mxu0 0.0
      %1226 = vmatprep.subr.mxu0 0.0
      %1227 = vmatpush1.msra.mxu0 0.0
      %1228 = vmatprep.subr.mxu0 0.0
      %1229 = vmatpush1.msra.mxu0 0.0
      %1230 = vmatprep.subr.mxu0 0.0
      %1231 = vmatpush1.msra.mxu0 0.0
      %1232 = vmatprep.subr.mxu0 0.0
      %1233 = vmatpush1.msra.mxu0 0.0
      %1234 = vmatprep.subr.mxu0 0.0
      %1235 = vmatpush1.msra.mxu0 0.0
      %1236 = vmatprep.subr.mxu0 0.0
      %1237 = vmatpush1.msra.mxu0 0.0
      %1238 = vmatprep.subr.mxu0 0.0
      %1239 = vmatpush1.msra.mxu0 0.0
      %1240 = vmatprep.subr.mxu0 0.0
      %1241 = vmatpush1.msra.mxu0 0.0
      %1242 = vmatprep.subr.mxu0 0.0
      %1243 = vmatpush1.msra.mxu0 0.0
      %1244 = vmatprep.subr.mxu0 0.0
      %1245 = vmatpush1.msra.mxu0 0.0
      %1246 = vmatprep.subr.mxu0 0.0
      %1247 = vmatpush1.msra.mxu0 0.0
      %1248 = vmatprep.subr.mxu0 0.0
      %1249 = vmatpush1.msra.mxu0 0.0
      %1250 = vmatprep.subr.mxu0 0.0
      %1251 = vmatpush1.msra.mxu0 0.0
      %1252 = vmatprep.subr.mxu0 0.0
      %1253 = vmatpush1.msra.mxu0 0.0
      %1254 = vmatprep.mubr.f32.mxu0 0.0
      %1255 = vmatmul.mubr.f32.gmra.mrb[0].mxu0 %v1109
      %v1256 = vpop.f32.mrb[0].mxu0
      %v1257 = vadd.f32 0.0, %v1256
      %v1258 = vpop.f32.mrb[0].mxu0
      %v1259 = vadd.f32 0.0, %v1258
      %1260 = vdwg.mxu0
      %v1261 = vadd.f32 %v1080, %v1186
      %v1262 = vadd.f32 %v1081, %v1188
      %v1263 = vadd.f32 %v1082, %v1257
      %v1264 = vadd.f32 %v1083, %v1259
      %s1265 = scalar_lea.vmem %s1, 80
      %v1266 = vld [vmem:[%s1265] sm:$0xff]
      %v1267 = vld [vmem:[%s572] sm:$0xff]
      %v1268 = vld [vmem:[%s572 + $0x8] sm:$0xff]
      %v1269 = vld [vmem:[%s572 + $0x10] sm:$0xf]
      %v1273 = vcombine.high %v1267, %v1267
      %v1274 = vcombine.high %v1268, %v1268
      %1275 = vrot.lane.b32.xlu0 %v1267, 96
      %v1276 = vpop.permute.xlu0 %1275
      %1277 = vrot.lane.b32.xlu0 %v1273, 96
      %v1278 = vpop.permute.xlu0 %1277
      %1279 = vrot.lane.b32.xlu0 %v1268, 96
      %v1280 = vpop.permute.xlu0 %1279
      %1281 = vrot.lane.b32.xlu0 %v1274, 96
      %v1282 = vpop.permute.xlu0 %1281
      %1283 = vrot.lane.b32.xlu0 %v1269, 96
      %v1284 = vpop.permute.xlu0 %1283
      %v1285 = vsel %vm922, %v1276, %v1278
      %v1286 = vsel %vm922, %v1278, %v1280
      %v1287 = vsel %vm922, %v1280, %v1282
      %v1288 = vsel %vm922, %v1282, %v1284
      %v1290 = vsel %vm258, %v1266, 0
      %v1292 = vsel %vm262, %v1285, 0
      %v1294 = vsel %vm262, %v1286, 0
      %v1296 = vsel %vm262, %v1287, 0
      %v1298 = vsel %vm262, %v1288, 0
      %1300 = vmatprep.subr.mxu0 %v1294
      %1301 = vmatpush1.msra.mxu0 %v1292
      %1302 = vmatprep.subr.mxu0 0.0
      %1303 = vmatpush1.msra.mxu0 0.0
      %1304 = vmatprep.subr.mxu0 0.0
      %1305 = vmatpush1.msra.mxu0 0.0
      %1306 = vmatprep.subr.mxu0 0.0
      %1307 = vmatpush1.msra.mxu0 0.0
      %1308 = vmatprep.subr.mxu0 0.0
      %1309 = vmatpush1.msra.mxu0 0.0
      %1310 = vmatprep.subr.mxu0 0.0
      %1311 = vmatpush1.msra.mxu0 0.0
      %1312 = vmatprep.subr.mxu0 0.0
      %1313 = vmatpush1.msra.mxu0 0.0
      %1314 = vmatprep.subr.mxu0 0.0
      %1315 = vmatpush1.msra.mxu0 0.0
      %1316 = vmatprep.subr.mxu0 0.0
      %1317 = vmatpush1.msra.mxu0 0.0
      %1318 = vmatprep.subr.mxu0 0.0
      %1319 = vmatpush1.msra.mxu0 0.0
      %1320 = vmatprep.subr.mxu0 0.0
      %1321 = vmatpush1.msra.mxu0 0.0
      %1322 = vmatprep.subr.mxu0 0.0
      %1323 = vmatpush1.msra.mxu0 0.0
      %1324 = vmatprep.subr.mxu0 0.0
      %1325 = vmatpush1.msra.mxu0 0.0
      %1326 = vmatprep.subr.mxu0 0.0
      %1327 = vmatpush1.msra.mxu0 0.0
      %1328 = vmatprep.subr.mxu0 0.0
      %1329 = vmatpush1.msra.mxu0 0.0
      %1330 = vmatprep.subr.mxu0 0.0
      %1331 = vmatpush1.msra.mxu0 0.0
      %1332 = vmatprep.subr.mxu0 0.0
      %1333 = vmatpush1.msra.mxu0 0.0
      %1334 = vmatprep.subr.mxu0 0.0
      %1335 = vmatpush1.msra.mxu0 0.0
      %1336 = vmatprep.subr.mxu0 0.0
      %1337 = vmatpush1.msra.mxu0 0.0
      %1338 = vmatprep.subr.mxu0 0.0
      %1339 = vmatpush1.msra.mxu0 0.0
      %1340 = vmatprep.subr.mxu0 0.0
      %1341 = vmatpush1.msra.mxu0 0.0
      %1342 = vmatprep.subr.mxu0 0.0
      %1343 = vmatpush1.msra.mxu0 0.0
      %1344 = vmatprep.subr.mxu0 0.0
      %1345 = vmatpush1.msra.mxu0 0.0
      %1346 = vmatprep.subr.mxu0 0.0
      %1347 = vmatpush1.msra.mxu0 0.0
      %1348 = vmatprep.subr.mxu0 0.0
      %1349 = vmatpush1.msra.mxu0 0.0
      %1350 = vmatprep.subr.mxu0 0.0
      %1351 = vmatpush1.msra.mxu0 0.0
      %1352 = vmatprep.subr.mxu0 0.0
      %1353 = vmatpush1.msra.mxu0 0.0
      %1354 = vmatprep.subr.mxu0 0.0
      %1355 = vmatpush1.msra.mxu0 0.0
      %1356 = vmatprep.subr.mxu0 0.0
      %1357 = vmatpush1.msra.mxu0 0.0
      %1358 = vmatprep.subr.mxu0 0.0
      %1359 = vmatpush1.msra.mxu0 0.0
      %1360 = vmatprep.subr.mxu0 0.0
      %1361 = vmatpush1.msra.mxu0 0.0
      %1362 = vmatprep.subr.mxu0 0.0
      %1363 = vmatpush1.msra.mxu0 0.0
      %1364 = vmatprep.mubr.f32.mxu0 0.0
      %1365 = vmatmul.mubr.f32.gmra.mrb[0].mxu0 %v1290
      %v1366 = vpop.f32.mrb[0].mxu0
      %v1367 = vadd.f32 0.0, %v1366
      %v1368 = vpop.f32.mrb[0].mxu0
      %v1369 = vadd.f32 0.0, %v1368
      %1370 = vdwg.mxu0
      %1371 = vmatprep.subr.mxu0 %v1298
      %1372 = vmatpush1.msra.mxu0 %v1296
      %1373 = vmatprep.subr.mxu0 0.0
      %1374 = vmatpush1.msra.mxu0 0.0
      %1375 = vmatprep.subr.mxu0 0.0
      %1376 = vmatpush1.msra.mxu0 0.0
      %1377 = vmatprep.subr.mxu0 0.0
      %1378 = vmatpush1.msra.mxu0 0.0
      %1379 = vmatprep.subr.mxu0 0.0
      %1380 = vmatpush1.msra.mxu0 0.0
      %1381 = vmatprep.subr.mxu0 0.0
      %1382 = vmatpush1.msra.mxu0 0.0
      %1383 = vmatprep.subr.mxu0 0.0
      %1384 = vmatpush1.msra.mxu0 0.0
      %1385 = vmatprep.subr.mxu0 0.0
      %1386 = vmatpush1.msra.mxu0 0.0
      %1387 = vmatprep.subr.mxu0 0.0
      %1388 = vmatpush1.msra.mxu0 0.0
      %1389 = vmatprep.subr.mxu0 0.0
      %1390 = vmatpush1.msra.mxu0 0.0
      %1391 = vmatprep.subr.mxu0 0.0
      %1392 = vmatpush1.msra.mxu0 0.0
      %1393 = vmatprep.subr.mxu0 0.0
      %1394 = vmatpush1.msra.mxu0 0.0
      %1395 = vmatprep.subr.mxu0 0.0
      %1396 = vmatpush1.msra.mxu0 0.0
      %1397 = vmatprep.subr.mxu0 0.0
      %1398 = vmatpush1.msra.mxu0 0.0
      %1399 = vmatprep.subr.mxu0 0.0
      %1400 = vmatpush1.msra.mxu0 0.0
      %1401 = vmatprep.subr.mxu0 0.0
      %1402 = vmatpush1.msra.mxu0 0.0
      %1403 = vmatprep.subr.mxu0 0.0
      %1404 = vmatpush1.msra.mxu0 0.0
      %1405 = vmatprep.subr.mxu0 0.0
      %1406 = vmatpush1.msra.mxu0 0.0
      %1407 = vmatprep.subr.mxu0 0.0
      %1408 = vmatpush1.msra.mxu0 0.0
      %1409 = vmatprep.subr.mxu0 0.0
      %1410 = vmatpush1.msra.mxu0 0.0
      %1411 = vmatprep.subr.mxu0 0.0
      %1412 = vmatpush1.msra.mxu0 0.0
      %1413 = vmatprep.subr.mxu0 0.0
      %1414 = vmatpush1.msra.mxu0 0.0
      %1415 = vmatprep.subr.mxu0 0.0
      %1416 = vmatpush1.msra.mxu0 0.0
      %1417 = vmatprep.subr.mxu0 0.0
      %1418 = vmatpush1.msra.mxu0 0.0
      %1419 = vmatprep.subr.mxu0 0.0
      %1420 = vmatpush1.msra.mxu0 0.0
      %1421 = vmatprep.subr.mxu0 0.0
      %1422 = vmatpush1.msra.mxu0 0.0
      %1423 = vmatprep.subr.mxu0 0.0
      %1424 = vmatpush1.msra.mxu0 0.0
      %1425 = vmatprep.subr.mxu0 0.0
      %1426 = vmatpush1.msra.mxu0 0.0
      %1427 = vmatprep.subr.mxu0 0.0
      %1428 = vmatpush1.msra.mxu0 0.0
      %1429 = vmatprep.subr.mxu0 0.0
      %1430 = vmatpush1.msra.mxu0 0.0
      %1431 = vmatprep.subr.mxu0 0.0
      %1432 = vmatpush1.msra.mxu0 0.0
      %1433 = vmatprep.subr.mxu0 0.0
      %1434 = vmatpush1.msra.mxu0 0.0
      %1435 = vmatprep.mubr.f32.mxu0 0.0
      %1436 = vmatmul.mubr.f32.gmra.mrb[0].mxu0 %v1290
      %v1437 = vpop.f32.mrb[0].mxu0
      %v1438 = vadd.f32 0.0, %v1437
      %v1439 = vpop.f32.mrb[0].mxu0
      %v1440 = vadd.f32 0.0, %v1439
      %1441 = vdwg.mxu0
      %v1442 = vadd.f32 %v1261, %v1367
      %v1443 = vadd.f32 %v1262, %v1369
      %v1444 = vadd.f32 %v1263, %v1438
      %v1445 = vadd.f32 %v1264, %v1440
      %s1446 = scalar_lea.vmem %s1, 88
      %v1447 = vld [vmem:[%s1446] sm:$0xff]
      %v1448 = vld [vmem:[%s738] sm:$0xff]
      %v1449 = vld [vmem:[%s738 + $0x8] sm:$0xff]
      %v1450 = vld [vmem:[%s738 + $0x10] sm:$0xf]
      %v1454 = vcombine.high %v1448, %v1448
      %v1455 = vcombine.high %v1449, %v1449
      %1456 = vrot.lane.b32.xlu0 %v1448, 96
      %v1457 = vpop.permute.xlu0 %1456
      %1458 = vrot.lane.b32.xlu0 %v1454, 96
      %v1459 = vpop.permute.xlu0 %1458
      %1460 = vrot.lane.b32.xlu0 %v1449, 96
      %v1461 = vpop.permute.xlu0 %1460
      %1462 = vrot.lane.b32.xlu0 %v1455, 96
      %v1463 = vpop.permute.xlu0 %1462
      %1464 = vrot.lane.b32.xlu0 %v1450, 96
      %v1465 = vpop.permute.xlu0 %1464
      %v1466 = vsel %vm922, %v1457, %v1459
      %v1467 = vsel %vm922, %v1459, %v1461
      %v1468 = vsel %vm922, %v1461, %v1463
      %v1469 = vsel %vm922, %v1463, %v1465
      %v1471 = vsel %vm258, %v1447, 0
      %v1473 = vsel %vm262, %v1466, 0
      %v1475 = vsel %vm262, %v1467, 0
      %v1477 = vsel %vm262, %v1468, 0
      %v1479 = vsel %vm262, %v1469, 0
      %1481 = vmatprep.subr.mxu0 %v1475
      %1482 = vmatpush1.msra.mxu0 %v1473
      %1483 = vmatprep.subr.mxu0 0.0
      %1484 = vmatpush1.msra.mxu0 0.0
      %1485 = vmatprep.subr.mxu0 0.0
      %1486 = vmatpush1.msra.mxu0 0.0
      %1487 = vmatprep.subr.mxu0 0.0
      %1488 = vmatpush1.msra.mxu0 0.0
      %1489 = vmatprep.subr.mxu0 0.0
      %1490 = vmatpush1.msra.mxu0 0.0
      %1491 = vmatprep.subr.mxu0 0.0
      %1492 = vmatpush1.msra.mxu0 0.0
      %1493 = vmatprep.subr.mxu0 0.0
      %1494 = vmatpush1.msra.mxu0 0.0
      %1495 = vmatprep.subr.mxu0 0.0
      %1496 = vmatpush1.msra.mxu0 0.0
      %1497 = vmatprep.subr.mxu0 0.0
      %1498 = vmatpush1.msra.mxu0 0.0
      %1499 = vmatprep.subr.mxu0 0.0
      %1500 = vmatpush1.msra.mxu0 0.0
      %1501 = vmatprep.subr.mxu0 0.0
      %1502 = vmatpush1.msra.mxu0 0.0
      %1503 = vmatprep.subr.mxu0 0.0
      %1504 = vmatpush1.msra.mxu0 0.0
      %1505 = vmatprep.subr.mxu0 0.0
      %1506 = vmatpush1.msra.mxu0 0.0
      %1507 = vmatprep.subr.mxu0 0.0
      %1508 = vmatpush1.msra.mxu0 0.0
      %1509 = vmatprep.subr.mxu0 0.0
      %1510 = vmatpush1.msra.mxu0 0.0
      %1511 = vmatprep.subr.mxu0 0.0
      %1512 = vmatpush1.msra.mxu0 0.0
      %1513 = vmatprep.subr.mxu0 0.0
      %1514 = vmatpush1.msra.mxu0 0.0
      %1515 = vmatprep.subr.mxu0 0.0
      %1516 = vmatpush1.msra.mxu0 0.0
      %1517 = vmatprep.subr.mxu0 0.0
      %1518 = vmatpush1.msra.mxu0 0.0
      %1519 = vmatprep.subr.mxu0 0.0
      %1520 = vmatpush1.msra.mxu0 0.0
      %1521 = vmatprep.subr.mxu0 0.0
      %1522 = vmatpush1.msra.mxu0 0.0
      %1523 = vmatprep.subr.mxu0 0.0
      %1524 = vmatpush1.msra.mxu0 0.0
      %1525 = vmatprep.subr.mxu0 0.0
      %1526 = vmatpush1.msra.mxu0 0.0
      %1527 = vmatprep.subr.mxu0 0.0
      %1528 = vmatpush1.msra.mxu0 0.0
      %1529 = vmatprep.subr.mxu0 0.0
      %1530 = vmatpush1.msra.mxu0 0.0
      %1531 = vmatprep.subr.mxu0 0.0
      %1532 = vmatpush1.msra.mxu0 0.0
      %1533 = vmatprep.subr.mxu0 0.0
      %1534 = vmatpush1.msra.mxu0 0.0
      %1535 = vmatprep.subr.mxu0 0.0
      %1536 = vmatpush1.msra.mxu0 0.0
      %1537 = vmatprep.subr.mxu0 0.0
      %1538 = vmatpush1.msra.mxu0 0.0
      %1539 = vmatprep.subr.mxu0 0.0
      %1540 = vmatpush1.msra.mxu0 0.0
      %1541 = vmatprep.subr.mxu0 0.0
      %1542 = vmatpush1.msra.mxu0 0.0
      %1543 = vmatprep.subr.mxu0 0.0
      %1544 = vmatpush1.msra.mxu0 0.0
      %1545 = vmatprep.mubr.f32.mxu0 0.0
      %1546 = vmatmul.mubr.f32.gmra.mrb[0].mxu0 %v1471
      %v1547 = vpop.f32.mrb[0].mxu0
      %v1548 = vadd.f32 0.0, %v1547
      %v1549 = vpop.f32.mrb[0].mxu0
      %v1550 = vadd.f32 0.0, %v1549
      %1551 = vdwg.mxu0
      %1552 = vmatprep.subr.mxu0 %v1479
      %1553 = vmatpush1.msra.mxu0 %v1477
      %1554 = vmatprep.subr.mxu0 0.0
      %1555 = vmatpush1.msra.mxu0 0.0
      %1556 = vmatprep.subr.mxu0 0.0
      %1557 = vmatpush1.msra.mxu0 0.0
      %1558 = vmatprep.subr.mxu0 0.0
      %1559 = vmatpush1.msra.mxu0 0.0
      %1560 = vmatprep.subr.mxu0 0.0
      %1561 = vmatpush1.msra.mxu0 0.0
      %1562 = vmatprep.subr.mxu0 0.0
      %1563 = vmatpush1.msra.mxu0 0.0
      %1564 = vmatprep.subr.mxu0 0.0
      %1565 = vmatpush1.msra.mxu0 0.0
      %1566 = vmatprep.subr.mxu0 0.0
      %1567 = vmatpush1.msra.mxu0 0.0
      %1568 = vmatprep.subr.mxu0 0.0
      %1569 = vmatpush1.msra.mxu0 0.0
      %1570 = vmatprep.subr.mxu0 0.0
      %1571 = vmatpush1.msra.mxu0 0.0
      %1572 = vmatprep.subr.mxu0 0.0
      %1573 = vmatpush1.msra.mxu0 0.0
      %1574 = vmatprep.subr.mxu0 0.0
      %1575 = vmatpush1.msra.mxu0 0.0
      %1576 = vmatprep.subr.mxu0 0.0
      %1577 = vmatpush1.msra.mxu0 0.0
      %1578 = vmatprep.subr.mxu0 0.0
      %1579 = vmatpush1.msra.mxu0 0.0
      %1580 = vmatprep.subr.mxu0 0.0
      %1581 = vmatpush1.msra.mxu0 0.0
      %1582 = vmatprep.subr.mxu0 0.0
      %1583 = vmatpush1.msra.mxu0 0.0
      %1584 = vmatprep.subr.mxu0 0.0
      %1585 = vmatpush1.msra.mxu0 0.0
      %1586 = vmatprep.subr.mxu0 0.0
      %1587 = vmatpush1.msra.mxu0 0.0
      %1588 = vmatprep.subr.mxu0 0.0
      %1589 = vmatpush1.msra.mxu0 0.0
      %1590 = vmatprep.subr.mxu0 0.0
      %1591 = vmatpush1.msra.mxu0 0.0
      %1592 = vmatprep.subr.mxu0 0.0
      %1593 = vmatpush1.msra.mxu0 0.0
      %1594 = vmatprep.subr.mxu0 0.0
      %1595 = vmatpush1.msra.mxu0 0.0
      %1596 = vmatprep.subr.mxu0 0.0
      %1597 = vmatpush1.msra.mxu0 0.0
      %1598 = vmatprep.subr.mxu0 0.0
      %1599 = vmatpush1.msra.mxu0 0.0
      %1600 = vmatprep.subr.mxu0 0.0
      %1601 = vmatpush1.msra.mxu0 0.0
      %1602 = vmatprep.subr.mxu0 0.0
      %1603 = vmatpush1.msra.mxu0 0.0
      %1604 = vmatprep.subr.mxu0 0.0
      %1605 = vmatpush1.msra.mxu0 0.0
      %1606 = vmatprep.subr.mxu0 0.0
      %1607 = vmatpush1.msra.mxu0 0.0
      %1608 = vmatprep.subr.mxu0 0.0
      %1609 = vmatpush1.msra.mxu0 0.0
      %1610 = vmatprep.subr.mxu0 0.0
      %1611 = vmatpush1.msra.mxu0 0.0
      %1612 = vmatprep.subr.mxu0 0.0
      %1613 = vmatpush1.msra.mxu0 0.0
      %1614 = vmatprep.subr.mxu0 0.0
      %1615 = vmatpush1.msra.mxu0 0.0
      %1616 = vmatprep.mubr.f32.mxu0 0.0
      %1617 = vmatmul.mubr.f32.gmra.mrb[0].mxu0 %v1471
      %v1618 = vpop.f32.mrb[0].mxu0
      %v1619 = vadd.f32 0.0, %v1618
      %v1620 = vpop.f32.mrb[0].mxu0
      %v1621 = vadd.f32 0.0, %v1620
      %1622 = vdwg.mxu0
      %v1623 = vadd.f32 %v1442, %v1548
      %v1624 = vadd.f32 %v1443, %v1550
      %v1625 = vadd.f32 %v1444, %v1619
      %v1626 = vadd.f32 %v1445, %v1621
      %v1627 = vld [vmem:[%s2] sm:$0xff]
      %1629 = vset.pattern.permute.xlu0 0
      %1630 = vperm.xlu0 %1629, %v1627
      %v1631 = vpop.permute.xlu0 %1630
      %v1633 = vadd.f32 %v1623, %v1631
      %v1634 = vadd.f32 %v1624, %v1631
      %v1635 = vadd.f32 %v1625, %v1631
      %v1636 = vadd.f32 %v1626, %v1631
      %v1637 = vadd.f32 %v1633, %v1634
      %v1638 = vadd.f32 %v1637, %v1635
      %v1639 = vadd.f32 %v1638, %v1636
      %1640 = vadd.xlane.f32.xlu0 %v1639
      %v1641 = vpop.xlane.xlu0 %1640
      %v1642 = vadd.f32 %v1641, 0.0
      %v1643 = vmul.f32 %v1633, %v1633
      %v1644 = vmul.f32 %v1634, %v1634
      %v1645 = vmul.f32 %v1635, %v1635
      %v1646 = vmul.f32 %v1636, %v1636
      %v1647 = vadd.f32 %v1643, %v1644
      %v1648 = vadd.f32 %v1647, %v1645
      %v1649 = vadd.f32 %v1648, %v1646
      %1650 = vadd.xlane.f32.xlu0 %v1649
      %v1651 = vpop.xlane.xlu0 %1650
      %v1652 = vadd.f32 %v1651, 0.0
      %vm1653 = vcmask 261120
      %1654 = vst.msk [vmem:[%s237] sm:$0xff] %vm1653, %v1633
      %1656 = vrot.lane.b32.xlu0 %v1633, 32
      %v1657 = vpop.permute.xlu0 %1656
      %vm1659 = vcmask 785920
      %1660 = vst.msk [vmem:[%s237] sm:$0xff] %vm1659, %v1657
      %1661 = vrot.lane.b32.xlu0 %v1633, 64
      %v1662 = vpop.permute.xlu0 %1661
      %1664 = vst.msk [vmem:[%s237 + $0x8] sm:$0xff] %vm1653, %v1662
      %1665 = vrot.lane.b32.xlu0 %v1633, 96
      %v1666 = vpop.permute.xlu0 %1665
      %1668 = vst.msk [vmem:[%s237 + $0x8] sm:$0xff] %vm1659, %v1666
      %1669 = vst.msk [vmem:[%s237 + $0x10] sm:$0xff] %vm1653, %v1634
      %1671 = vrot.lane.b32.xlu0 %v1634, 32
      %v1672 = vpop.permute.xlu0 %1671
      %1674 = vst.msk [vmem:[%s237 + $0x10] sm:$0xff] %vm1659, %v1672
      %1675 = vrot.lane.b32.xlu0 %v1634, 64
      %v1676 = vpop.permute.xlu0 %1675
      %1678 = vst.msk [vmem:[%s237 + $0x18] sm:$0xff] %vm1653, %v1676
      %1679 = vrot.lane.b32.xlu0 %v1634, 96
      %v1680 = vpop.permute.xlu0 %1679
      %1682 = vst.msk [vmem:[%s237 + $0x18] sm:$0xff] %vm1659, %v1680
      %1683 = vst.msk [vmem:[%s237 + $0x20] sm:$0xff] %vm1653, %v1635
      %1685 = vrot.lane.b32.xlu0 %v1635, 32
      %v1686 = vpop.permute.xlu0 %1685
      %1688 = vst.msk [vmem:[%s237 + $0x20] sm:$0xff] %vm1659, %v1686
      %1689 = vrot.lane.b32.xlu0 %v1635, 64
      %v1690 = vpop.permute.xlu0 %1689
      %1692 = vst.msk [vmem:[%s237 + $0x28] sm:$0xff] %vm1653, %v1690
      %1693 = vrot.lane.b32.xlu0 %v1635, 96
      %v1694 = vpop.permute.xlu0 %1693
      %1696 = vst.msk [vmem:[%s237 + $0x28] sm:$0xff] %vm1659, %v1694
      %1697 = vst.msk [vmem:[%s237 + $0x30] sm:$0xff] %vm1653, %v1636
      %1699 = vrot.lane.b32.xlu0 %v1636, 32
      %v1700 = vpop.permute.xlu0 %1699
      %1702 = vst.msk [vmem:[%s237 + $0x30] sm:$0xff] %vm1659, %v1700
      %1703 = vrot.lane.b32.xlu0 %v1636, 64
      %v1704 = vpop.permute.xlu0 %1703
      %1706 = vst.msk [vmem:[%s237 + $0x38] sm:$0xff] %vm1653, %v1704
      %1707 = vrot.lane.b32.xlu0 %v1636, 96
      %v1708 = vpop.permute.xlu0 %1707
      %1710 = vst.msk [vmem:[%s237 + $0x38] sm:$0xff] %vm1659, %v1708
      %s1711 = scalar_lea.vmem %s1, 32
      %v1712 = vld [vmem:[%s1711] sm:$0xff]
      %v1713 = vld [vmem:[%s232] sm:$0xff]
      %v1714 = vld [vmem:[%s232 + $0x8] sm:$0xff]
      %v1715 = vld [vmem:[%s232 + $0x10] sm:$0xf]
      %s1716 = scalar_lea.vmem %s1, 40
      %v1717 = vld [vmem:[%s1716] sm:$0xff]
      %v1718 = vld [vmem:[%s251] sm:$0xff]
      %v1719 = vld [vmem:[%s251 + $0x8] sm:$0xff]
      %v1720 = vld [vmem:[%s251 + $0x10] sm:$0xf]
      %v1724 = vcombine.high %v1718, %v1718
      %v1725 = vcombine.high %v1719, %v1719
      %1726 = vrot.lane.b32.xlu0 %v1718, 96
      %v1727 = vpop.permute.xlu0 %1726
      %1728 = vrot.lane.b32.xlu0 %v1724, 96
      %v1729 = vpop.permute.xlu0 %1728
      %1730 = vrot.lane.b32.xlu0 %v1719, 96
      %v1731 = vpop.permute.xlu0 %1730
      %1732 = vrot.lane.b32.xlu0 %v1725, 96
      %v1733 = vpop.permute.xlu0 %1732
      %1734 = vrot.lane.b32.xlu0 %v1720, 96
      %v1735 = vpop.permute.xlu0 %1734
      %v1736 = vsel %vm922, %v1727, %v1729
      %v1737 = vsel %vm922, %v1729, %v1731
      %v1738 = vsel %vm922, %v1731, %v1733
      %v1739 = vsel %vm922, %v1733, %v1735
      %v1741 = vsel %vm258, %v1717, 0
      %v1743 = vsel %vm262, %v1736, 0
      %v1745 = vsel %vm262, %v1737, 0
      %v1747 = vsel %vm262, %v1738, 0
      %v1749 = vsel %vm262, %v1739, 0
      %1751 = vmatprep.subr.mxu0 %v1745
      %1752 = vmatpush1.msra.mxu0 %v1743
      %1753 = vmatprep.subr.mxu0 0.0
      %1754 = vmatpush1.msra.mxu0 0.0
      %1755 = vmatprep.subr.mxu0 0.0
      %1756 = vmatpush1.msra.mxu0 0.0
      %1757 = vmatprep.subr.mxu0 0.0
      %1758 = vmatpush1.msra.mxu0 0.0
      %1759 = vmatprep.subr.mxu0 0.0
      %1760 = vmatpush1.msra.mxu0 0.0
      %1761 = vmatprep.subr.mxu0 0.0
      %1762 = vmatpush1.msra.mxu0 0.0
      %1763 = vmatprep.subr.mxu0 0.0
      %1764 = vmatpush1.msra.mxu0 0.0
      %1765 = vmatprep.subr.mxu0 0.0
      %1766 = vmatpush1.msra.mxu0 0.0
      %1767 = vmatprep.subr.mxu0 0.0
      %1768 = vmatpush1.msra.mxu0 0.0
      %1769 = vmatprep.subr.mxu0 0.0
      %1770 = vmatpush1.msra.mxu0 0.0
      %1771 = vmatprep.subr.mxu0 0.0
      %1772 = vmatpush1.msra.mxu0 0.0
      %1773 = vmatprep.subr.mxu0 0.0
      %1774 = vmatpush1.msra.mxu0 0.0
      %1775 = vmatprep.subr.mxu0 0.0
      %1776 = vmatpush1.msra.mxu0 0.0
      %1777 = vmatprep.subr.mxu0 0.0
      %1778 = vmatpush1.msra.mxu0 0.0
      %1779 = vmatprep.subr.mxu0 0.0
      %1780 = vmatpush1.msra.mxu0 0.0
      %1781 = vmatprep.subr.mxu0 0.0
      %1782 = vmatpush1.msra.mxu0 0.0
      %1783 = vmatprep.subr.mxu0 0.0
      %1784 = vmatpush1.msra.mxu0 0.0
      %1785 = vmatprep.subr.mxu0 0.0
      %1786 = vmatpush1.msra.mxu0 0.0
      %1787 = vmatprep.subr.mxu0 0.0
      %1788 = vmatpush1.msra.mxu0 0.0
      %1789 = vmatprep.subr.mxu0 0.0
      %1790 = vmatpush1.msra.mxu0 0.0
      %1791 = vmatprep.subr.mxu0 0.0
      %1792 = vmatpush1.msra.mxu0 0.0
      %1793 = vmatprep.subr.mxu0 0.0
      %1794 = vmatpush1.msra.mxu0 0.0
      %1795 = vmatprep.subr.mxu0 0.0
      %1796 = vmatpush1.msra.mxu0 0.0
      %1797 = vmatprep.subr.mxu0 0.0
      %1798 = vmatpush1.msra.mxu0 0.0
      %1799 = vmatprep.subr.mxu0 0.0
      %1800 = vmatpush1.msra.mxu0 0.0
      %1801 = vmatprep.subr.mxu0 0.0
      %1802 = vmatpush1.msra.mxu0 0.0
      %1803 = vmatprep.subr.mxu0 0.0
      %1804 = vmatpush1.msra.mxu0 0.0
      %1805 = vmatprep.subr.mxu0 0.0
      %1806 = vmatpush1.msra.mxu0 0.0
      %1807 = vmatprep.subr.mxu0 0.0
      %1808 = vmatpush1.msra.mxu0 0.0
      %1809 = vmatprep.subr.mxu0 0.0
      %1810 = vmatpush1.msra.mxu0 0.0
      %1811 = vmatprep.subr.mxu0 0.0
      %1812 = vmatpush1.msra.mxu0 0.0
      %1813 = vmatprep.subr.mxu0 0.0
      %1814 = vmatpush1.msra.mxu0 0.0
      %1815 = vmatprep.mubr.f32.mxu0 0.0
      %1816 = vmatmul.mubr.f32.gmra.mrb[0].mxu0 %v1741
      %v1817 = vpop.f32.mrb[0].mxu0
      %v1818 = vadd.f32 0.0, %v1817
      %v1819 = vpop.f32.mrb[0].mxu0
      %v1820 = vadd.f32 0.0, %v1819
      %1821 = vdwg.mxu0
      %1822 = vmatprep.subr.mxu0 %v1749
      %1823 = vmatpush1.msra.mxu0 %v1747
      %1824 = vmatprep.subr.mxu0 0.0
      %1825 = vmatpush1.msra.mxu0 0.0
      %1826 = vmatprep.subr.mxu0 0.0
      %1827 = vmatpush1.msra.mxu0 0.0
      %1828 = vmatprep.subr.mxu0 0.0
      %1829 = vmatpush1.msra.mxu0 0.0
      %1830 = vmatprep.subr.mxu0 0.0
      %1831 = vmatpush1.msra.mxu0 0.0
      %1832 = vmatprep.subr.mxu0 0.0
      %1833 = vmatpush1.msra.mxu0 0.0
      %1834 = vmatprep.subr.mxu0 0.0
      %1835 = vmatpush1.msra.mxu0 0.0
      %1836 = vmatprep.subr.mxu0 0.0
      %1837 = vmatpush1.msra.mxu0 0.0
      %1838 = vmatprep.subr.mxu0 0.0
      %1839 = vmatpush1.msra.mxu0 0.0
      %1840 = vmatprep.subr.mxu0 0.0
      %1841 = vmatpush1.msra.mxu0 0.0
      %1842 = vmatprep.subr.mxu0 0.0
      %1843 = vmatpush1.msra.mxu0 0.0
      %1844 = vmatprep.subr.mxu0 0.0
      %1845 = vmatpush1.msra.mxu0 0.0
      %1846 = vmatprep.subr.mxu0 0.0
      %1847 = vmatpush1.msra.mxu0 0.0
      %1848 = vmatprep.subr.mxu0 0.0
      %1849 = vmatpush1.msra.mxu0 0.0
      %1850 = vmatprep.subr.mxu0 0.0
      %1851 = vmatpush1.msra.mxu0 0.0
      %1852 = vmatprep.subr.mxu0 0.0
      %1853 = vmatpush1.msra.mxu0 0.0
      %1854 = vmatprep.subr.mxu0 0.0
      %1855 = vmatpush1.msra.mxu0 0.0
      %1856 = vmatprep.subr.mxu0 0.0
      %1857 = vmatpush1.msra.mxu0 0.0
      %1858 = vmatprep.subr.mxu0 0.0
      %1859 = vmatpush1.msra.mxu0 0.0
      %1860 = vmatprep.subr.mxu0 0.0
      %1861 = vmatpush1.msra.mxu0 0.0
      %1862 = vmatprep.subr.mxu0 0.0
      %1863 = vmatpush1.msra.mxu0 0.0
      %1864 = vmatprep.subr.mxu0 0.0
      %1865 = vmatpush1.msra.mxu0 0.0
      %1866 = vmatprep.subr.mxu0 0.0
      %1867 = vmatpush1.msra.mxu0 0.0
      %1868 = vmatprep.subr.mxu0 0.0
      %1869 = vmatpush1.msra.mxu0 0.0
      %1870 = vmatprep.subr.mxu0 0.0
      %1871 = vmatpush1.msra.mxu0 0.0
      %1872 = vmatprep.subr.mxu0 0.0
      %1873 = vmatpush1.msra.mxu0 0.0
      %1874 = vmatprep.subr.mxu0 0.0
      %1875 = vmatpush1.msra.mxu0 0.0
      %1876 = vmatprep.subr.mxu0 0.0
      %1877 = vmatpush1.msra.mxu0 0.0
      %1878 = vmatprep.subr.mxu0 0.0
      %1879 = vmatpush1.msra.mxu0 0.0
      %1880 = vmatprep.subr.mxu0 0.0
      %1881 = vmatpush1.msra.mxu0 0.0
      %1882 = vmatprep.subr.mxu0 0.0
      %1883 = vmatpush1.msra.mxu0 0.0
      %1884 = vmatprep.subr.mxu0 0.0
      %1885 = vmatpush1.msra.mxu0 0.0
      %1886 = vmatprep.mubr.f32.mxu0 0.0
      %1887 = vmatmul.mubr.f32.gmra.mrb[0].mxu0 %v1741
      %v1888 = vpop.f32.mrb[0].mxu0
      %v1889 = vadd.f32 0.0, %v1888
      %v1890 = vpop.f32.mrb[0].mxu0
      %v1891 = vadd.f32 0.0, %v1890
      %1892 = vdwg.mxu0
      %v1896 = vcombine.high %v1713, %v1713
      %v1897 = vcombine.high %v1714, %v1714
      %1898 = vrot.lane.b32.xlu0 %v1713, 96
      %v1899 = vpop.permute.xlu0 %1898
      %1900 = vrot.lane.b32.xlu0 %v1896, 96
      %v1901 = vpop.permute.xlu0 %1900
      %1902 = vrot.lane.b32.xlu0 %v1714, 96
      %v1903 = vpop.permute.xlu0 %1902
      %1904 = vrot.lane.b32.xlu0 %v1897, 96
      %v1905 = vpop.permute.xlu0 %1904
      %1906 = vrot.lane.b32.xlu0 %v1715, 96
      %v1907 = vpop.permute.xlu0 %1906
      %v1908 = vsel %vm922, %v1899, %v1901
      %v1909 = vsel %vm922, %v1901, %v1903
      %v1910 = vsel %vm922, %v1903, %v1905
      %v1911 = vsel %vm922, %v1905, %v1907
      %v1913 = vsel %vm258, %v1712, 0
      %v1915 = vsel %vm262, %v1908, 0
      %v1917 = vsel %vm262, %v1909, 0
      %v1919 = vsel %vm262, %v1910, 0
      %v1921 = vsel %vm262, %v1911, 0
      %1923 = vmatprep.subr.mxu0 %v1917
      %1924 = vmatpush1.msra.mxu0 %v1915
      %1925 = vmatprep.subr.mxu0 0.0
      %1926 = vmatpush1.msra.mxu0 0.0
      %1927 = vmatprep.subr.mxu0 0.0
      %1928 = vmatpush1.msra.mxu0 0.0
      %1929 = vmatprep.subr.mxu0 0.0
      %1930 = vmatpush1.msra.mxu0 0.0
      %1931 = vmatprep.subr.mxu0 0.0
      %1932 = vmatpush1.msra.mxu0 0.0
      %1933 = vmatprep.subr.mxu0 0.0
      %1934 = vmatpush1.msra.mxu0 0.0
      %1935 = vmatprep.subr.mxu0 0.0
      %1936 = vmatpush1.msra.mxu0 0.0
      %1937 = vmatprep.subr.mxu0 0.0
      %1938 = vmatpush1.msra.mxu0 0.0
      %1939 = vmatprep.subr.mxu0 0.0
      %1940 = vmatpush1.msra.mxu0 0.0
      %1941 = vmatprep.subr.mxu0 0.0
      %1942 = vmatpush1.msra.mxu0 0.0
      %1943 = vmatprep.subr.mxu0 0.0
      %1944 = vmatpush1.msra.mxu0 0.0
      %1945 = vmatprep.subr.mxu0 0.0
      %1946 = vmatpush1.msra.mxu0 0.0
      %1947 = vmatprep.subr.mxu0 0.0
      %1948 = vmatpush1.msra.mxu0 0.0
      %1949 = vmatprep.subr.mxu0 0.0
      %1950 = vmatpush1.msra.mxu0 0.0
      %1951 = vmatprep.subr.mxu0 0.0
      %1952 = vmatpush1.msra.mxu0 0.0
      %1953 = vmatprep.subr.mxu0 0.0
      %1954 = vmatpush1.msra.mxu0 0.0
      %1955 = vmatprep.subr.mxu0 0.0
      %1956 = vmatpush1.msra.mxu0 0.0
      %1957 = vmatprep.subr.mxu0 0.0
      %1958 = vmatpush1.msra.mxu0 0.0
      %1959 = vmatprep.subr.mxu0 0.0
      %1960 = vmatpush1.msra.mxu0 0.0
      %1961 = vmatprep.subr.mxu0 0.0
      %1962 = vmatpush1.msra.mxu0 0.0
      %1963 = vmatprep.subr.mxu0 0.0
      %1964 = vmatpush1.msra.mxu0 0.0
      %1965 = vmatprep.subr.mxu0 0.0
      %1966 = vmatpush1.msra.mxu0 0.0
      %1967 = vmatprep.subr.mxu0 0.0
      %1968 = vmatpush1.msra.mxu0 0.0
      %1969 = vmatprep.subr.mxu0 0.0
      %1970 = vmatpush1.msra.mxu0 0.0
      %1971 = vmatprep.subr.mxu0 0.0
      %1972 = vmatpush1.msra.mxu0 0.0
      %1973 = vmatprep.subr.mxu0 0.0
      %1974 = vmatpush1.msra.mxu0 0.0
      %1975 = vmatprep.subr.mxu0 0.0
      %1976 = vmatpush1.msra.mxu0 0.0
      %1977 = vmatprep.subr.mxu0 0.0
      %1978 = vmatpush1.msra.mxu0 0.0
      %1979 = vmatprep.subr.mxu0 0.0
      %1980 = vmatpush1.msra.mxu0 0.0
      %1981 = vmatprep.subr.mxu0 0.0
      %1982 = vmatpush1.msra.mxu0 0.0
      %1983 = vmatprep.subr.mxu0 0.0
      %1984 = vmatpush1.msra.mxu0 0.0
      %1985 = vmatprep.subr.mxu0 0.0
      %1986 = vmatpush1.msra.mxu0 0.0
      %1987 = vmatprep.mubr.f32.mxu0 0.0
      %1988 = vmatmul.mubr.f32.gmra.mrb[0].mxu0 %v1913
      %v1989 = vpop.f32.mrb[0].mxu0
      %v1990 = vadd.f32 %v1818, %v1989
      %v1991 = vpop.f32.mrb[0].mxu0
      %v1992 = vadd.f32 %v1820, %v1991
      %1993 = vdwg.mxu0
      %1994 = vmatprep.subr.mxu0 %v1921
      %1995 = vmatpush1.msra.mxu0 %v1919
      %1996 = vmatprep.subr.mxu0 0.0
      %1997 = vmatpush1.msra.mxu0 0.0
      %1998 = vmatprep.subr.mxu0 0.0
      %1999 = vmatpush1.msra.mxu0 0.0
      %2000 = vmatprep.subr.mxu0 0.0
      %2001 = vmatpush1.msra.mxu0 0.0
      %2002 = vmatprep.subr.mxu0 0.0
      %2003 = vmatpush1.msra.mxu0 0.0
      %2004 = vmatprep.subr.mxu0 0.0
      %2005 = vmatpush1.msra.mxu0 0.0
      %2006 = vmatprep.subr.mxu0 0.0
      %2007 = vmatpush1.msra.mxu0 0.0
      %2008 = vmatprep.subr.mxu0 0.0
      %2009 = vmatpush1.msra.mxu0 0.0
      %2010 = vmatprep.subr.mxu0 0.0
      %2011 = vmatpush1.msra.mxu0 0.0
      %2012 = vmatprep.subr.mxu0 0.0
      %2013 = vmatpush1.msra.mxu0 0.0
      %2014 = vmatprep.subr.mxu0 0.0
      %2015 = vmatpush1.msra.mxu0 0.0
      %2016 = vmatprep.subr.mxu0 0.0
      %2017 = vmatpush1.msra.mxu0 0.0
      %2018 = vmatprep.subr.mxu0 0.0
      %2019 = vmatpush1.msra.mxu0 0.0
      %2020 = vmatprep.subr.mxu0 0.0
      %2021 = vmatpush1.msra.mxu0 0.0
      %2022 = vmatprep.subr.mxu0 0.0
      %2023 = vmatpush1.msra.mxu0 0.0
      %2024 = vmatprep.subr.mxu0 0.0
      %2025 = vmatpush1.msra.mxu0 0.0
      %2026 = vmatprep.subr.mxu0 0.0
      %2027 = vmatpush1.msra.mxu0 0.0
      %2028 = vmatprep.subr.mxu0 0.0
      %2029 = vmatpush1.msra.mxu0 0.0
      %2030 = vmatprep.subr.mxu0 0.0
      %2031 = vmatpush1.msra.mxu0 0.0
      %2032 = vmatprep.subr.mxu0 0.0
      %2033 = vmatpush1.msra.mxu0 0.0
      %2034 = vmatprep.subr.mxu0 0.0
      %2035 = vmatpush1.msra.mxu0 0.0
      %2036 = vmatprep.subr.mxu0 0.0
      %2037 = vmatpush1.msra.mxu0 0.0
      %2038 = vmatprep.subr.mxu0 0.0
      %2039 = vmatpush1.msra.mxu0 0.0
      %2040 = vmatprep.subr.mxu0 0.0
      %2041 = vmatpush1.msra.mxu0 0.0
      %2042 = vmatprep.subr.mxu0 0.0
      %2043 = vmatpush1.msra.mxu0 0.0
      %2044 = vmatprep.subr.mxu0 0.0
      %2045 = vmatpush1.msra.mxu0 0.0
      %2046 = vmatprep.subr.mxu0 0.0
      %2047 = vmatpush1.msra.mxu0 0.0
      %2048 = vmatprep.subr.mxu0 0.0
      %2049 = vmatpush1.msra.mxu0 0.0
      %2050 = vmatprep.subr.mxu0 0.0
      %2051 = vmatpush1.msra.mxu0 0.0
      %2052 = vmatprep.subr.mxu0 0.0
      %2053 = vmatpush1.msra.mxu0 0.0
      %2054 = vmatprep.subr.mxu0 0.0
      %2055 = vmatpush1.msra.mxu0 0.0
      %2056 = vmatprep.subr.mxu0 0.0
      %2057 = vmatpush1.msra.mxu0 0.0
      %2058 = vmatprep.mubr.f32.mxu0 0.0
      %2059 = vmatmul.mubr.f32.gmra.mrb[0].mxu0 %v1913
      %v2060 = vpop.f32.mrb[0].mxu0
      %v2061 = vadd.f32 %v1889, %v2060
      %v2062 = vpop.f32.mrb[0].mxu0
      %v2063 = vadd.f32 %v1891, %v2062
      %2064 = vdwg.mxu0
      %s2065 = scalar_lea.vmem %s1, 48
      %v2066 = vld [vmem:[%s2065] sm:$0xff]
      %v2067 = vld [vmem:[%s572] sm:$0xff]
      %v2068 = vld [vmem:[%s572 + $0x8] sm:$0xff]
      %v2069 = vld [vmem:[%s572 + $0x10] sm:$0xf]
      %v2073 = vcombine.high %v2067, %v2067
      %v2074 = vcombine.high %v2068, %v2068
      %2075 = vrot.lane.b32.xlu0 %v2067, 96
      %v2076 = vpop.permute.xlu0 %2075
      %2077 = vrot.lane.b32.xlu0 %v2073, 96
      %v2078 = vpop.permute.xlu0 %2077
      %2079 = vrot.lane.b32.xlu0 %v2068, 96
      %v2080 = vpop.permute.xlu0 %2079
      %2081 = vrot.lane.b32.xlu0 %v2074, 96
      %v2082 = vpop.permute.xlu0 %2081
      %2083 = vrot.lane.b32.xlu0 %v2069, 96
      %v2084 = vpop.permute.xlu0 %2083
      %v2085 = vsel %vm922, %v2076, %v2078
      %v2086 = vsel %vm922, %v2078, %v2080
      %v2087 = vsel %vm922, %v2080, %v2082
      %v2088 = vsel %vm922, %v2082, %v2084
      %v2090 = vsel %vm258, %v2066, 0
      %v2092 = vsel %vm262, %v2085, 0
      %v2094 = vsel %vm262, %v2086, 0
      %v2096 = vsel %vm262, %v2087, 0
      %v2098 = vsel %vm262, %v2088, 0
      %2100 = vmatprep.subr.mxu0 %v2094
      %2101 = vmatpush1.msra.mxu0 %v2092
      %2102 = vmatprep.subr.mxu0 0.0
      %2103 = vmatpush1.msra.mxu0 0.0
      %2104 = vmatprep.subr.mxu0 0.0
      %2105 = vmatpush1.msra.mxu0 0.0
      %2106 = vmatprep.subr.mxu0 0.0
      %2107 = vmatpush1.msra.mxu0 0.0
      %2108 = vmatprep.subr.mxu0 0.0
      %2109 = vmatpush1.msra.mxu0 0.0
      %2110 = vmatprep.subr.mxu0 0.0
      %2111 = vmatpush1.msra.mxu0 0.0
      %2112 = vmatprep.subr.mxu0 0.0
      %2113 = vmatpush1.msra.mxu0 0.0
      %2114 = vmatprep.subr.mxu0 0.0
      %2115 = vmatpush1.msra.mxu0 0.0
      %2116 = vmatprep.subr.mxu0 0.0
      %2117 = vmatpush1.msra.mxu0 0.0
      %2118 = vmatprep.subr.mxu0 0.0
      %2119 = vmatpush1.msra.mxu0 0.0
      %2120 = vmatprep.subr.mxu0 0.0
      %2121 = vmatpush1.msra.mxu0 0.0
      %2122 = vmatprep.subr.mxu0 0.0
      %2123 = vmatpush1.msra.mxu0 0.0
      %2124 = vmatprep.subr.mxu0 0.0
      %2125 = vmatpush1.msra.mxu0 0.0
      %2126 = vmatprep.subr.mxu0 0.0
      %2127 = vmatpush1.msra.mxu0 0.0
      %2128 = vmatprep.subr.mxu0 0.0
      %2129 = vmatpush1.msra.mxu0 0.0
      %2130 = vmatprep.subr.mxu0 0.0
      %2131 = vmatpush1.msra.mxu0 0.0
      %2132 = vmatprep.subr.mxu0 0.0
      %2133 = vmatpush1.msra.mxu0 0.0
      %2134 = vmatprep.subr.mxu0 0.0
      %2135 = vmatpush1.msra.mxu0 0.0
      %2136 = vmatprep.subr.mxu0 0.0
      %2137 = vmatpush1.msra.mxu0 0.0
      %2138 = vmatprep.subr.mxu0 0.0
      %2139 = vmatpush1.msra.mxu0 0.0
      %2140 = vmatprep.subr.mxu0 0.0
      %2141 = vmatpush1.msra.mxu0 0.0
      %2142 = vmatprep.subr.mxu0 0.0
      %2143 = vmatpush1.msra.mxu0 0.0
      %2144 = vmatprep.subr.mxu0 0.0
      %2145 = vmatpush1.msra.mxu0 0.0
      %2146 = vmatprep.subr.mxu0 0.0
      %2147 = vmatpush1.msra.mxu0 0.0
      %2148 = vmatprep.subr.mxu0 0.0
      %2149 = vmatpush1.msra.mxu0 0.0
      %2150 = vmatprep.subr.mxu0 0.0
      %2151 = vmatpush1.msra.mxu0 0.0
      %2152 = vmatprep.subr.mxu0 0.0
      %2153 = vmatpush1.msra.mxu0 0.0
      %2154 = vmatprep.subr.mxu0 0.0
      %2155 = vmatpush1.msra.mxu0 0.0
      %2156 = vmatprep.subr.mxu0 0.0
      %2157 = vmatpush1.msra.mxu0 0.0
      %2158 = vmatprep.subr.mxu0 0.0
      %2159 = vmatpush1.msra.mxu0 0.0
      %2160 = vmatprep.subr.mxu0 0.0
      %2161 = vmatpush1.msra.mxu0 0.0
      %2162 = vmatprep.subr.mxu0 0.0
      %2163 = vmatpush1.msra.mxu0 0.0
      %2164 = vmatprep.mubr.f32.mxu0 0.0
      %2165 = vmatmul.mubr.f32.gmra.mrb[0].mxu0 %v2090
      %v2166 = vpop.f32.mrb[0].mxu0
      %v2167 = vadd.f32 0.0, %v2166
      %v2168 = vpop.f32.mrb[0].mxu0
      %v2169 = vadd.f32 0.0, %v2168
      %2170 = vdwg.mxu0
      %2171 = vmatprep.subr.mxu0 %v2098
      %2172 = vmatpush1.msra.mxu0 %v2096
      %2173 = vmatprep.subr.mxu0 0.0
      %2174 = vmatpush1.msra.mxu0 0.0
      %2175 = vmatprep.subr.mxu0 0.0
      %2176 = vmatpush1.msra.mxu0 0.0
      %2177 = vmatprep.subr.mxu0 0.0
      %2178 = vmatpush1.msra.mxu0 0.0
      %2179 = vmatprep.subr.mxu0 0.0
      %2180 = vmatpush1.msra.mxu0 0.0
      %2181 = vmatprep.subr.mxu0 0.0
      %2182 = vmatpush1.msra.mxu0 0.0
      %2183 = vmatprep.subr.mxu0 0.0
      %2184 = vmatpush1.msra.mxu0 0.0
      %2185 = vmatprep.subr.mxu0 0.0
      %2186 = vmatpush1.msra.mxu0 0.0
      %2187 = vmatprep.subr.mxu0 0.0
      %2188 = vmatpush1.msra.mxu0 0.0
      %2189 = vmatprep.subr.mxu0 0.0
      %2190 = vmatpush1.msra.mxu0 0.0
      %2191 = vmatprep.subr.mxu0 0.0
      %2192 = vmatpush1.msra.mxu0 0.0
      %2193 = vmatprep.subr.mxu0 0.0
      %2194 = vmatpush1.msra.mxu0 0.0
      %2195 = vmatprep.subr.mxu0 0.0
      %2196 = vmatpush1.msra.mxu0 0.0
      %2197 = vmatprep.subr.mxu0 0.0
      %2198 = vmatpush1.msra.mxu0 0.0
      %2199 = vmatprep.subr.mxu0 0.0
      %2200 = vmatpush1.msra.mxu0 0.0
      %2201 = vmatprep.subr.mxu0 0.0
      %2202 = vmatpush1.msra.mxu0 0.0
      %2203 = vmatprep.subr.mxu0 0.0
      %2204 = vmatpush1.msra.mxu0 0.0
      %2205 = vmatprep.subr.mxu0 0.0
      %2206 = vmatpush1.msra.mxu0 0.0
      %2207 = vmatprep.subr.mxu0 0.0
      %2208 = vmatpush1.msra.mxu0 0.0
      %2209 = vmatprep.subr.mxu0 0.0
      %2210 = vmatpush1.msra.mxu0 0.0
      %2211 = vmatprep.subr.mxu0 0.0
      %2212 = vmatpush1.msra.mxu0 0.0
      %2213 = vmatprep.subr.mxu0 0.0
      %2214 = vmatpush1.msra.mxu0 0.0
      %2215 = vmatprep.subr.mxu0 0.0
      %2216 = vmatpush1.msra.mxu0 0.0
      %2217 = vmatprep.subr.mxu0 0.0
      %2218 = vmatpush1.msra.mxu0 0.0
      %2219 = vmatprep.subr.mxu0 0.0
      %2220 = vmatpush1.msra.mxu0 0.0
      %2221 = vmatprep.subr.mxu0 0.0
      %2222 = vmatpush1.msra.mxu0 0.0
      %2223 = vmatprep.subr.mxu0 0.0
      %2224 = vmatpush1.msra.mxu0 0.0
      %2225 = vmatprep.subr.mxu0 0.0
      %2226 = vmatpush1.msra.mxu0 0.0
      %2227 = vmatprep.subr.mxu0 0.0
      %2228 = vmatpush1.msra.mxu0 0.0
      %2229 = vmatprep.subr.mxu0 0.0
      %2230 = vmatpush1.msra.mxu0 0.0
      %2231 = vmatprep.subr.mxu0 0.0
      %2232 = vmatpush1.msra.mxu0 0.0
      %2233 = vmatprep.subr.mxu0 0.0
      %2234 = vmatpush1.msra.mxu0 0.0
      %2235 = vmatprep.mubr.f32.mxu0 0.0
      %2236 = vmatmul.mubr.f32.gmra.mrb[0].mxu0 %v2090
      %v2237 = vpop.f32.mrb[0].mxu0
      %v2238 = vadd.f32 0.0, %v2237
      %v2239 = vpop.f32.mrb[0].mxu0
      %v2240 = vadd.f32 0.0, %v2239
      %2241 = vdwg.mxu0
      %v2242 = vadd.f32 %v1990, %v2167
      %v2243 = vadd.f32 %v1992, %v2169
      %v2244 = vadd.f32 %v2061, %v2238
      %v2245 = vadd.f32 %v2063, %v2240
      %s2246 = scalar_lea.vmem %s1, 56
      %v2247 = vld [vmem:[%s2246] sm:$0xff]
      %v2248 = vld [vmem:[%s738] sm:$0xff]
      %v2249 = vld [vmem:[%s738 + $0x8] sm:$0xff]
      %v2250 = vld [vmem:[%s738 + $0x10] sm:$0xf]
      %v2254 = vcombine.high %v2248, %v2248
      %v2255 = vcombine.high %v2249, %v2249
      %2256 = vrot.lane.b32.xlu0 %v2248, 96
      %v2257 = vpop.permute.xlu0 %2256
      %2258 = vrot.lane.b32.xlu0 %v2254, 96
      %v2259 = vpop.permute.xlu0 %2258
      %2260 = vrot.lane.b32.xlu0 %v2249, 96
      %v2261 = vpop.permute.xlu0 %2260
      %2262 = vrot.lane.b32.xlu0 %v2255, 96
      %v2263 = vpop.permute.xlu0 %2262
      %2264 = vrot.lane.b32.xlu0 %v2250, 96
      %v2265 = vpop.permute.xlu0 %2264
      %v2266 = vsel %vm922, %v2257, %v2259
      %v2267 = vsel %vm922, %v2259, %v2261
      %v2268 = vsel %vm922, %v2261, %v2263
      %v2269 = vsel %vm922, %v2263, %v2265
      %v2271 = vsel %vm258, %v2247, 0
      %v2273 = vsel %vm262, %v2266, 0
      %v2275 = vsel %vm262, %v2267, 0
      %v2277 = vsel %vm262, %v2268, 0
      %v2279 = vsel %vm262, %v2269, 0
      %2281 = vmatprep.subr.mxu0 %v2275
      %2282 = vmatpush1.msra.mxu0 %v2273
      %2283 = vmatprep.subr.mxu0 0.0
      %2284 = vmatpush1.msra.mxu0 0.0
      %2285 = vmatprep.subr.mxu0 0.0
      %2286 = vmatpush1.msra.mxu0 0.0
      %2287 = vmatprep.subr.mxu0 0.0
      %2288 = vmatpush1.msra.mxu0 0.0
      %2289 = vmatprep.subr.mxu0 0.0
      %2290 = vmatpush1.msra.mxu0 0.0
      %2291 = vmatprep.subr.mxu0 0.0
      %2292 = vmatpush1.msra.mxu0 0.0
      %2293 = vmatprep.subr.mxu0 0.0
      %2294 = vmatpush1.msra.mxu0 0.0
      %2295 = vmatprep.subr.mxu0 0.0
      %2296 = vmatpush1.msra.mxu0 0.0
      %2297 = vmatprep.subr.mxu0 0.0
      %2298 = vmatpush1.msra.mxu0 0.0
      %2299 = vmatprep.subr.mxu0 0.0
      %2300 = vmatpush1.msra.mxu0 0.0
      %2301 = vmatprep.subr.mxu0 0.0
      %2302 = vmatpush1.msra.mxu0 0.0
      %2303 = vmatprep.subr.mxu0 0.0
      %2304 = vmatpush1.msra.mxu0 0.0
      %2305 = vmatprep.subr.mxu0 0.0
      %2306 = vmatpush1.msra.mxu0 0.0
      %2307 = vmatprep.subr.mxu0 0.0
      %2308 = vmatpush1.msra.mxu0 0.0
      %2309 = vmatprep.subr.mxu0 0.0
      %2310 = vmatpush1.msra.mxu0 0.0
      %2311 = vmatprep.subr.mxu0 0.0
      %2312 = vmatpush1.msra.mxu0 0.0
      %2313 = vmatprep.subr.mxu0 0.0
      %2314 = vmatpush1.msra.mxu0 0.0
      %2315 = vmatprep.subr.mxu0 0.0
      %2316 = vmatpush1.msra.mxu0 0.0
      %2317 = vmatprep.subr.mxu0 0.0
      %2318 = vmatpush1.msra.mxu0 0.0
      %2319 = vmatprep.subr.mxu0 0.0
      %2320 = vmatpush1.msra.mxu0 0.0
      %2321 = vmatprep.subr.mxu0 0.0
      %2322 = vmatpush1.msra.mxu0 0.0
      %2323 = vmatprep.subr.mxu0 0.0
      %2324 = vmatpush1.msra.mxu0 0.0
      %2325 = vmatprep.subr.mxu0 0.0
      %2326 = vmatpush1.msra.mxu0 0.0
      %2327 = vmatprep.subr.mxu0 0.0
      %2328 = vmatpush1.msra.mxu0 0.0
      %2329 = vmatprep.subr.mxu0 0.0
      %2330 = vmatpush1.msra.mxu0 0.0
      %2331 = vmatprep.subr.mxu0 0.0
      %2332 = vmatpush1.msra.mxu0 0.0
      %2333 = vmatprep.subr.mxu0 0.0
      %2334 = vmatpush1.msra.mxu0 0.0
      %2335 = vmatprep.subr.mxu0 0.0
      %2336 = vmatpush1.msra.mxu0 0.0
      %2337 = vmatprep.subr.mxu0 0.0
      %2338 = vmatpush1.msra.mxu0 0.0
      %2339 = vmatprep.subr.mxu0 0.0
      %2340 = vmatpush1.msra.mxu0 0.0
      %2341 = vmatprep.subr.mxu0 0.0
      %2342 = vmatpush1.msra.mxu0 0.0
      %2343 = vmatprep.subr.mxu0 0.0
      %2344 = vmatpush1.msra.mxu0 0.0
      %2345 = vmatprep.mubr.f32.mxu0 0.0
      %2346 = vmatmul.mubr.f32.gmra.mrb[0].mxu0 %v2271
      %v2347 = vpop.f32.mrb[0].mxu0
      %v2348 = vadd.f32 0.0, %v2347
      %v2349 = vpop.f32.mrb[0].mxu0
      %v2350 = vadd.f32 0.0, %v2349
      %2351 = vdwg.mxu0
      %2352 = vmatprep.subr.mxu0 %v2279
      %2353 = vmatpush1.msra.mxu0 %v2277
      %2354 = vmatprep.subr.mxu0 0.0
      %2355 = vmatpush1.msra.mxu0 0.0
      %2356 = vmatprep.subr.mxu0 0.0
      %2357 = vmatpush1.msra.mxu0 0.0
      %2358 = vmatprep.subr.mxu0 0.0
      %2359 = vmatpush1.msra.mxu0 0.0
      %2360 = vmatprep.subr.mxu0 0.0
      %2361 = vmatpush1.msra.mxu0 0.0
      %2362 = vmatprep.subr.mxu0 0.0
      %2363 = vmatpush1.msra.mxu0 0.0
      %2364 = vmatprep.subr.mxu0 0.0
      %2365 = vmatpush1.msra.mxu0 0.0
      %2366 = vmatprep.subr.mxu0 0.0
      %2367 = vmatpush1.msra.mxu0 0.0
      %2368 = vmatprep.subr.mxu0 0.0
      %2369 = vmatpush1.msra.mxu0 0.0
      %2370 = vmatprep.subr.mxu0 0.0
      %2371 = vmatpush1.msra.mxu0 0.0
      %2372 = vmatprep.subr.mxu0 0.0
      %2373 = vmatpush1.msra.mxu0 0.0
      %2374 = vmatprep.subr.mxu0 0.0
      %2375 = vmatpush1.msra.mxu0 0.0
      %2376 = vmatprep.subr.mxu0 0.0
      %2377 = vmatpush1.msra.mxu0 0.0
      %2378 = vmatprep.subr.mxu0 0.0
      %2379 = vmatpush1.msra.mxu0 0.0
      %2380 = vmatprep.subr.mxu0 0.0
      %2381 = vmatpush1.msra.mxu0 0.0
      %2382 = vmatprep.subr.mxu0 0.0
      %2383 = vmatpush1.msra.mxu0 0.0
      %2384 = vmatprep.subr.mxu0 0.0
      %2385 = vmatpush1.msra.mxu0 0.0
      %2386 = vmatprep.subr.mxu0 0.0
      %2387 = vmatpush1.msra.mxu0 0.0
      %2388 = vmatprep.subr.mxu0 0.0
      %2389 = vmatpush1.msra.mxu0 0.0
      %2390 = vmatprep.subr.mxu0 0.0
      %2391 = vmatpush1.msra.mxu0 0.0
      %2392 = vmatprep.subr.mxu0 0.0
      %2393 = vmatpush1.msra.mxu0 0.0
      %2394 = vmatprep.subr.mxu0 0.0
      %2395 = vmatpush1.msra.mxu0 0.0
      %2396 = vmatprep.subr.mxu0 0.0
      %2397 = vmatpush1.msra.mxu0 0.0
      %2398 = vmatprep.subr.mxu0 0.0
      %2399 = vmatpush1.msra.mxu0 0.0
      %2400 = vmatprep.subr.mxu0 0.0
      %2401 = vmatpush1.msra.mxu0 0.0
      %2402 = vmatprep.subr.mxu0 0.0
      %2403 = vmatpush1.msra.mxu0 0.0
      %2404 = vmatprep.subr.mxu0 0.0
      %2405 = vmatpush1.msra.mxu0 0.0
      %2406 = vmatprep.subr.mxu0 0.0
      %2407 = vmatpush1.msra.mxu0 0.0
      %2408 = vmatprep.subr.mxu0 0.0
      %2409 = vmatpush1.msra.mxu0 0.0
      %2410 = vmatprep.subr.mxu0 0.0
      %2411 = vmatpush1.msra.mxu0 0.0
      %2412 = vmatprep.subr.mxu0 0.0
      %2413 = vmatpush1.msra.mxu0 0.0
      %2414 = vmatprep.subr.mxu0 0.0
      %2415 = vmatpush1.msra.mxu0 0.0
      %2416 = vmatprep.mubr.f32.mxu0 0.0
      %2417 = vmatmul.mubr.f32.gmra.mrb[0].mxu0 %v2271
      %v2418 = vpop.f32.mrb[0].mxu0
      %v2419 = vadd.f32 0.0, %v2418
      %v2420 = vpop.f32.mrb[0].mxu0
      %v2421 = vadd.f32 0.0, %v2420
      %2422 = vdwg.mxu0
      %v2423 = vadd.f32 %v2242, %v2348
      %v2424 = vadd.f32 %v2243, %v2350
      %v2425 = vadd.f32 %v2244, %v2419
      %v2426 = vadd.f32 %v2245, %v2421
      %s2427 = scalar_lea.vmem %s1, 96
      %v2428 = vld [vmem:[%s2427] sm:$0xff]
      %v2429 = vld [vmem:[%s232] sm:$0xff]
      %v2430 = vld [vmem:[%s232 + $0x8] sm:$0xff]
      %v2431 = vld [vmem:[%s232 + $0x10] sm:$0xf]
      %v2435 = vcombine.high %v2429, %v2429
      %v2436 = vcombine.high %v2430, %v2430
      %2437 = vrot.lane.b32.xlu0 %v2429, 64
      %v2438 = vpop.permute.xlu0 %2437
      %2439 = vrot.lane.b32.xlu0 %v2435, 64
      %v2440 = vpop.permute.xlu0 %2439
      %2441 = vrot.lane.b32.xlu0 %v2430, 64
      %v2442 = vpop.permute.xlu0 %2441
      %2443 = vrot.lane.b32.xlu0 %v2436, 64
      %v2444 = vpop.permute.xlu0 %2443
      %2445 = vrot.lane.b32.xlu0 %v2431, 64
      %v2446 = vpop.permute.xlu0 %2445
      %vm2447 = vcmask 523264
      %v2448 = vsel %vm2447, %v2438, %v2440
      %v2449 = vsel %vm2447, %v2440, %v2442
      %v2450 = vsel %vm2447, %v2442, %v2444
      %v2451 = vsel %vm2447, %v2444, %v2446
      %v2453 = vsel %vm258, %v2428, 0
      %v2455 = vsel %vm262, %v2448, 0
      %v2457 = vsel %vm262, %v2449, 0
      %v2459 = vsel %vm262, %v2450, 0
      %v2461 = vsel %vm262, %v2451, 0
      %2463 = vmatprep.subr.mxu0 %v2457
      %2464 = vmatpush1.msra.mxu0 %v2455
      %2465 = vmatprep.subr.mxu0 0.0
      %2466 = vmatpush1.msra.mxu0 0.0
      %2467 = vmatprep.subr.mxu0 0.0
      %2468 = vmatpush1.msra.mxu0 0.0
      %2469 = vmatprep.subr.mxu0 0.0
      %2470 = vmatpush1.msra.mxu0 0.0
      %2471 = vmatprep.subr.mxu0 0.0
      %2472 = vmatpush1.msra.mxu0 0.0
      %2473 = vmatprep.subr.mxu0 0.0
      %2474 = vmatpush1.msra.mxu0 0.0
      %2475 = vmatprep.subr.mxu0 0.0
      %2476 = vmatpush1.msra.mxu0 0.0
      %2477 = vmatprep.subr.mxu0 0.0
      %2478 = vmatpush1.msra.mxu0 0.0
      %2479 = vmatprep.subr.mxu0 0.0
      %2480 = vmatpush1.msra.mxu0 0.0
      %2481 = vmatprep.subr.mxu0 0.0
      %2482 = vmatpush1.msra.mxu0 0.0
      %2483 = vmatprep.subr.mxu0 0.0
      %2484 = vmatpush1.msra.mxu0 0.0
      %2485 = vmatprep.subr.mxu0 0.0
      %2486 = vmatpush1.msra.mxu0 0.0
      %2487 = vmatprep.subr.mxu0 0.0
      %2488 = vmatpush1.msra.mxu0 0.0
      %2489 = vmatprep.subr.mxu0 0.0
      %2490 = vmatpush1.msra.mxu0 0.0
      %2491 = vmatprep.subr.mxu0 0.0
      %2492 = vmatpush1.msra.mxu0 0.0
      %2493 = vmatprep.subr.mxu0 0.0
      %2494 = vmatpush1.msra.mxu0 0.0
      %2495 = vmatprep.subr.mxu0 0.0
      %2496 = vmatpush1.msra.mxu0 0.0
      %2497 = vmatprep.subr.mxu0 0.0
      %2498 = vmatpush1.msra.mxu0 0.0
      %2499 = vmatprep.subr.mxu0 0.0
      %2500 = vmatpush1.msra.mxu0 0.0
      %2501 = vmatprep.subr.mxu0 0.0
      %2502 = vmatpush1.msra.mxu0 0.0
      %2503 = vmatprep.subr.mxu0 0.0
      %2504 = vmatpush1.msra.mxu0 0.0
      %2505 = vmatprep.subr.mxu0 0.0
      %2506 = vmatpush1.msra.mxu0 0.0
      %2507 = vmatprep.subr.mxu0 0.0
      %2508 = vmatpush1.msra.mxu0 0.0
      %2509 = vmatprep.subr.mxu0 0.0
      %2510 = vmatpush1.msra.mxu0 0.0
      %2511 = vmatprep.subr.mxu0 0.0
      %2512 = vmatpush1.msra.mxu0 0.0
      %2513 = vmatprep.subr.mxu0 0.0
      %2514 = vmatpush1.msra.mxu0 0.0
      %2515 = vmatprep.subr.mxu0 0.0
      %2516 = vmatpush1.msra.mxu0 0.0
      %2517 = vmatprep.subr.mxu0 0.0
      %2518 = vmatpush1.msra.mxu0 0.0
      %2519 = vmatprep.subr.mxu0 0.0
      %2520 = vmatpush1.msra.mxu0 0.0
      %2521 = vmatprep.subr.mxu0 0.0
      %2522 = vmatpush1.msra.mxu0 0.0
      %2523 = vmatprep.subr.mxu0 0.0
      %2524 = vmatpush1.msra.mxu0 0.0
      %2525 = vmatprep.subr.mxu0 0.0
      %2526 = vmatpush1.msra.mxu0 0.0
      %2527 = vmatprep.mubr.f32.mxu0 0.0
      %2528 = vmatmul.mubr.f32.gmra.mrb[0].mxu0 %v2453
      %v2529 = vpop.f32.mrb[0].mxu0
      %v2530 = vadd.f32 0.0, %v2529
      %v2531 = vpop.f32.mrb[0].mxu0
      %v2532 = vadd.f32 0.0, %v2531
      %2533 = vdwg.mxu0
      %2534 = vmatprep.subr.mxu0 %v2461
      %2535 = vmatpush1.msra.mxu0 %v2459
      %2536 = vmatprep.subr.mxu0 0.0
      %2537 = vmatpush1.msra.mxu0 0.0
      %2538 = vmatprep.subr.mxu0 0.0
      %2539 = vmatpush1.msra.mxu0 0.0
      %2540 = vmatprep.subr.mxu0 0.0
      %2541 = vmatpush1.msra.mxu0 0.0
      %2542 = vmatprep.subr.mxu0 0.0
      %2543 = vmatpush1.msra.mxu0 0.0
      %2544 = vmatprep.subr.mxu0 0.0
      %2545 = vmatpush1.msra.mxu0 0.0
      %2546 = vmatprep.subr.mxu0 0.0
      %2547 = vmatpush1.msra.mxu0 0.0
      %2548 = vmatprep.subr.mxu0 0.0
      %2549 = vmatpush1.msra.mxu0 0.0
      %2550 = vmatprep.subr.mxu0 0.0
      %2551 = vmatpush1.msra.mxu0 0.0
      %2552 = vmatprep.subr.mxu0 0.0
      %2553 = vmatpush1.msra.mxu0 0.0
      %2554 = vmatprep.subr.mxu0 0.0
      %2555 = vmatpush1.msra.mxu0 0.0
      %2556 = vmatprep.subr.mxu0 0.0
      %2557 = vmatpush1.msra.mxu0 0.0
      %2558 = vmatprep.subr.mxu0 0.0
      %2559 = vmatpush1.msra.mxu0 0.0
      %2560 = vmatprep.subr.mxu0 0.0
      %2561 = vmatpush1.msra.mxu0 0.0
      %2562 = vmatprep.subr.mxu0 0.0
      %2563 = vmatpush1.msra.mxu0 0.0
      %2564 = vmatprep.subr.mxu0 0.0
      %2565 = vmatpush1.msra.mxu0 0.0
      %2566 = vmatprep.subr.mxu0 0.0
      %2567 = vmatpush1.msra.mxu0 0.0
      %2568 = vmatprep.subr.mxu0 0.0
      %2569 = vmatpush1.msra.mxu0 0.0
      %2570 = vmatprep.subr.mxu0 0.0
      %2571 = vmatpush1.msra.mxu0 0.0
      %2572 = vmatprep.subr.mxu0 0.0
      %2573 = vmatpush1.msra.mxu0 0.0
      %2574 = vmatprep.subr.mxu0 0.0
      %2575 = vmatpush1.msra.mxu0 0.0
      %2576 = vmatprep.subr.mxu0 0.0
      %2577 = vmatpush1.msra.mxu0 0.0
      %2578 = vmatprep.subr.mxu0 0.0
      %2579 = vmatpush1.msra.mxu0 0.0
      %2580 = vmatprep.subr.mxu0 0.0
      %2581 = vmatpush1.msra.mxu0 0.0
      %2582 = vmatprep.subr.mxu0 0.0
      %2583 = vmatpush1.msra.mxu0 0.0
      %2584 = vmatprep.subr.mxu0 0.0
      %2585 = vmatpush1.msra.mxu0 0.0
      %2586 = vmatprep.subr.mxu0 0.0
      %2587 = vmatpush1.msra.mxu0 0.0
      %2588 = vmatprep.subr.mxu0 0.0
      %2589 = vmatpush1.msra.mxu0 0.0
      %2590 = vmatprep.subr.mxu0 0.0
      %2591 = vmatpush1.msra.mxu0 0.0
      %2592 = vmatprep.subr.mxu0 0.0
      %2593 = vmatpush1.msra.mxu0 0.0
      %2594 = vmatprep.subr.mxu0 0.0
      %2595 = vmatpush1.msra.mxu0 0.0
      %2596 = vmatprep.subr.mxu0 0.0
      %2597 = vmatpush1.msra.mxu0 0.0
      %2598 = vmatprep.mubr.f32.mxu0 0.0
      %2599 = vmatmul.mubr.f32.gmra.mrb[0].mxu0 %v2453
      %v2600 = vpop.f32.mrb[0].mxu0
      %v2601 = vadd.f32 0.0, %v2600
      %v2602 = vpop.f32.mrb[0].mxu0
      %v2603 = vadd.f32 0.0, %v2602
      %2604 = vdwg.mxu0
      %v2605 = vadd.f32 %v2423, %v2530
      %v2606 = vadd.f32 %v2424, %v2532
      %v2607 = vadd.f32 %v2425, %v2601
      %v2608 = vadd.f32 %v2426, %v2603
      %s2609 = scalar_lea.vmem %s1, 104
      %v2610 = vld [vmem:[%s2609] sm:$0xff]
      %v2611 = vld [vmem:[%s251] sm:$0xff]
      %v2612 = vld [vmem:[%s251 + $0x8] sm:$0xff]
      %v2613 = vld [vmem:[%s251 + $0x10] sm:$0xf]
      %v2617 = vcombine.high %v2611, %v2611
      %v2618 = vcombine.high %v2612, %v2612
      %2619 = vrot.lane.b32.xlu0 %v2611, 64
      %v2620 = vpop.permute.xlu0 %2619
      %2621 = vrot.lane.b32.xlu0 %v2617, 64
      %v2622 = vpop.permute.xlu0 %2621
      %2623 = vrot.lane.b32.xlu0 %v2612, 64
      %v2624 = vpop.permute.xlu0 %2623
      %2625 = vrot.lane.b32.xlu0 %v2618, 64
      %v2626 = vpop.permute.xlu0 %2625
      %2627 = vrot.lane.b32.xlu0 %v2613, 64
      %v2628 = vpop.permute.xlu0 %2627
      %v2629 = vsel %vm2447, %v2620, %v2622
      %v2630 = vsel %vm2447, %v2622, %v2624
      %v2631 = vsel %vm2447, %v2624, %v2626
      %v2632 = vsel %vm2447, %v2626, %v2628
      %v2634 = vsel %vm258, %v2610, 0
      %v2636 = vsel %vm262, %v2629, 0
      %v2638 = vsel %vm262, %v2630, 0
      %v2640 = vsel %vm262, %v2631, 0
      %v2642 = vsel %vm262, %v2632, 0
      %2644 = vmatprep.subr.mxu0 %v2638
      %2645 = vmatpush1.msra.mxu0 %v2636
      %2646 = vmatprep.subr.mxu0 0.0
      %2647 = vmatpush1.msra.mxu0 0.0
      %2648 = vmatprep.subr.mxu0 0.0
      %2649 = vmatpush1.msra.mxu0 0.0
      %2650 = vmatprep.subr.mxu0 0.0
      %2651 = vmatpush1.msra.mxu0 0.0
      %2652 = vmatprep.subr.mxu0 0.0
      %2653 = vmatpush1.msra.mxu0 0.0
      %2654 = vmatprep.subr.mxu0 0.0
      %2655 = vmatpush1.msra.mxu0 0.0
      %2656 = vmatprep.subr.mxu0 0.0
      %2657 = vmatpush1.msra.mxu0 0.0
      %2658 = vmatprep.subr.mxu0 0.0
      %2659 = vmatpush1.msra.mxu0 0.0
      %2660 = vmatprep.subr.mxu0 0.0
      %2661 = vmatpush1.msra.mxu0 0.0
      %2662 = vmatprep.subr.mxu0 0.0
      %2663 = vmatpush1.msra.mxu0 0.0
      %2664 = vmatprep.subr.mxu0 0.0
      %2665 = vmatpush1.msra.mxu0 0.0
      %2666 = vmatprep.subr.mxu0 0.0
      %2667 = vmatpush1.msra.mxu0 0.0
      %2668 = vmatprep.subr.mxu0 0.0
      %2669 = vmatpush1.msra.mxu0 0.0
      %2670 = vmatprep.subr.mxu0 0.0
      %2671 = vmatpush1.msra.mxu0 0.0
      %2672 = vmatprep.subr.mxu0 0.0
      %2673 = vmatpush1.msra.mxu0 0.0
      %2674 = vmatprep.subr.mxu0 0.0
      %2675 = vmatpush1.msra.mxu0 0.0
      %2676 = vmatprep.subr.mxu0 0.0
      %2677 = vmatpush1.msra.mxu0 0.0
      %2678 = vmatprep.subr.mxu0 0.0
      %2679 = vmatpush1.msra.mxu0 0.0
      %2680 = vmatprep.subr.mxu0 0.0
      %2681 = vmatpush1.msra.mxu0 0.0
      %2682 = vmatprep.subr.mxu0 0.0
      %2683 = vmatpush1.msra.mxu0 0.0
      %2684 = vmatprep.subr.mxu0 0.0
      %2685 = vmatpush1.msra.mxu0 0.0
      %2686 = vmatprep.subr.mxu0 0.0
      %2687 = vmatpush1.msra.mxu0 0.0
      %2688 = vmatprep.subr.mxu0 0.0
      %2689 = vmatpush1.msra.mxu0 0.0
      %2690 = vmatprep.subr.mxu0 0.0
      %2691 = vmatpush1.msra.mxu0 0.0
      %2692 = vmatprep.subr.mxu0 0.0
      %2693 = vmatpush1.msra.mxu0 0.0
      %2694 = vmatprep.subr.mxu0 0.0
      %2695 = vmatpush1.msra.mxu0 0.0
      %2696 = vmatprep.subr.mxu0 0.0
      %2697 = vmatpush1.msra.mxu0 0.0
      %2698 = vmatprep.subr.mxu0 0.0
      %2699 = vmatpush1.msra.mxu0 0.0
      %2700 = vmatprep.subr.mxu0 0.0
      %2701 = vmatpush1.msra.mxu0 0.0
      %2702 = vmatprep.subr.mxu0 0.0
      %2703 = vmatpush1.msra.mxu0 0.0
      %2704 = vmatprep.subr.mxu0 0.0
      %2705 = vmatpush1.msra.mxu0 0.0
      %2706 = vmatprep.subr.mxu0 0.0
      %2707 = vmatpush1.msra.mxu0 0.0
      %2708 = vmatprep.mubr.f32.mxu0 0.0
      %2709 = vmatmul.mubr.f32.gmra.mrb[0].mxu0 %v2634
      %v2710 = vpop.f32.mrb[0].mxu0
      %v2711 = vadd.f32 0.0, %v2710
      %v2712 = vpop.f32.mrb[0].mxu0
      %v2713 = vadd.f32 0.0, %v2712
      %2714 = vdwg.mxu0
      %2715 = vmatprep.subr.mxu0 %v2642
      %2716 = vmatpush1.msra.mxu0 %v2640
      %2717 = vmatprep.subr.mxu0 0.0
      %2718 = vmatpush1.msra.mxu0 0.0
      %2719 = vmatprep.subr.mxu0 0.0
      %2720 = vmatpush1.msra.mxu0 0.0
      %2721 = vmatprep.subr.mxu0 0.0
      %2722 = vmatpush1.msra.mxu0 0.0
      %2723 = vmatprep.subr.mxu0 0.0
      %2724 = vmatpush1.msra.mxu0 0.0
      %2725 = vmatprep.subr.mxu0 0.0
      %2726 = vmatpush1.msra.mxu0 0.0
      %2727 = vmatprep.subr.mxu0 0.0
      %2728 = vmatpush1.msra.mxu0 0.0
      %2729 = vmatprep.subr.mxu0 0.0
      %2730 = vmatpush1.msra.mxu0 0.0
      %2731 = vmatprep.subr.mxu0 0.0
      %2732 = vmatpush1.msra.mxu0 0.0
      %2733 = vmatprep.subr.mxu0 0.0
      %2734 = vmatpush1.msra.mxu0 0.0
      %2735 = vmatprep.subr.mxu0 0.0
      %2736 = vmatpush1.msra.mxu0 0.0
      %2737 = vmatprep.subr.mxu0 0.0
      %2738 = vmatpush1.msra.mxu0 0.0
      %2739 = vmatprep.subr.mxu0 0.0
      %2740 = vmatpush1.msra.mxu0 0.0
      %2741 = vmatprep.subr.mxu0 0.0
      %2742 = vmatpush1.msra.mxu0 0.0
      %2743 = vmatprep.subr.mxu0 0.0
      %2744 = vmatpush1.msra.mxu0 0.0
      %2745 = vmatprep.subr.mxu0 0.0
      %2746 = vmatpush1.msra.mxu0 0.0
      %2747 = vmatprep.subr.mxu0 0.0
      %2748 = vmatpush1.msra.mxu0 0.0
      %2749 = vmatprep.subr.mxu0 0.0
      %2750 = vmatpush1.msra.mxu0 0.0
      %2751 = vmatprep.subr.mxu0 0.0
      %2752 = vmatpush1.msra.mxu0 0.0
      %2753 = vmatprep.subr.mxu0 0.0
      %2754 = vmatpush1.msra.mxu0 0.0
      %2755 = vmatprep.subr.mxu0 0.0
      %2756 = vmatpush1.msra.mxu0 0.0
      %2757 = vmatprep.subr.mxu0 0.0
      %2758 = vmatpush1.msra.mxu0 0.0
      %2759 = vmatprep.subr.mxu0 0.0
      %2760 = vmatpush1.msra.mxu0 0.0
      %2761 = vmatprep.subr.mxu0 0.0
      %2762 = vmatpush1.msra.mxu0 0.0
      %2763 = vmatprep.subr.mxu0 0.0
      %2764 = vmatpush1.msra.mxu0 0.0
      %2765 = vmatprep.subr.mxu0 0.0
      %2766 = vmatpush1.msra.mxu0 0.0
      %2767 = vmatprep.subr.mxu0 0.0
      %2768 = vmatpush1.msra.mxu0 0.0
      %2769 = vmatprep.subr.mxu0 0.0
      %2770 = vmatpush1.msra.mxu0 0.0
      %2771 = vmatprep.subr.mxu0 0.0
      %2772 = vmatpush1.msra.mxu0 0.0
      %2773 = vmatprep.subr.mxu0 0.0
      %2774 = vmatpush1.msra.mxu0 0.0
      %2775 = vmatprep.subr.mxu0 0.0
      %2776 = vmatpush1.msra.mxu0 0.0
      %2777 = vmatprep.subr.mxu0 0.0
      %2778 = vmatpush1.msra.mxu0 0.0
      %2779 = vmatprep.mubr.f32.mxu0 0.0
      %2780 = vmatmul.mubr.f32.gmra.mrb[0].mxu0 %v2634
      %v2781 = vpop.f32.mrb[0].mxu0
      %v2782 = vadd.f32 0.0, %v2781
      %v2783 = vpop.f32.mrb[0].mxu0
      %v2784 = vadd.f32 0.0, %v2783
      %2785 = vdwg.mxu0
      %v2786 = vadd.f32 %v2605, %v2711
      %v2787 = vadd.f32 %v2606, %v2713
      %v2788 = vadd.f32 %v2607, %v2782
      %v2789 = vadd.f32 %v2608, %v2784
      %s2790 = scalar_lea.vmem %s1, 112
      %v2791 = vld [vmem:[%s2790] sm:$0xff]
      %v2792 = vld [vmem:[%s572] sm:$0xff]
      %v2793 = vld [vmem:[%s572 + $0x8] sm:$0xff]
      %v2794 = vld [vmem:[%s572 + $0x10] sm:$0xf]
      %v2798 = vcombine.high %v2792, %v2792
      %v2799 = vcombine.high %v2793, %v2793
      %2800 = vrot.lane.b32.xlu0 %v2792, 64
      %v2801 = vpop.permute.xlu0 %2800
      %2802 = vrot.lane.b32.xlu0 %v2798, 64
      %v2803 = vpop.permute.xlu0 %2802
      %2804 = vrot.lane.b32.xlu0 %v2793, 64
      %v2805 = vpop.permute.xlu0 %2804
      %2806 = vrot.lane.b32.xlu0 %v2799, 64
      %v2807 = vpop.permute.xlu0 %2806
      %2808 = vrot.lane.b32.xlu0 %v2794, 64
      %v2809 = vpop.permute.xlu0 %2808
      %v2810 = vsel %vm2447, %v2801, %v2803
      %v2811 = vsel %vm2447, %v2803, %v2805
      %v2812 = vsel %vm2447, %v2805, %v2807
      %v2813 = vsel %vm2447, %v2807, %v2809
      %v2815 = vsel %vm258, %v2791, 0
      %v2817 = vsel %vm262, %v2810, 0
      %v2819 = vsel %vm262, %v2811, 0
      %v2821 = vsel %vm262, %v2812, 0
      %v2823 = vsel %vm262, %v2813, 0
      %2825 = vmatprep.subr.mxu0 %v2819
      %2826 = vmatpush1.msra.mxu0 %v2817
      %2827 = vmatprep.subr.mxu0 0.0
      %2828 = vmatpush1.msra.mxu0 0.0
      %2829 = vmatprep.subr.mxu0 0.0
      %2830 = vmatpush1.msra.mxu0 0.0
      %2831 = vmatprep.subr.mxu0 0.0
      %2832 = vmatpush1.msra.mxu0 0.0
      %2833 = vmatprep.subr.mxu0 0.0
      %2834 = vmatpush1.msra.mxu0 0.0
      %2835 = vmatprep.subr.mxu0 0.0
      %2836 = vmatpush1.msra.mxu0 0.0
      %2837 = vmatprep.subr.mxu0 0.0
      %2838 = vmatpush1.msra.mxu0 0.0
      %2839 = vmatprep.subr.mxu0 0.0
      %2840 = vmatpush1.msra.mxu0 0.0
      %2841 = vmatprep.subr.mxu0 0.0
      %2842 = vmatpush1.msra.mxu0 0.0
      %2843 = vmatprep.subr.mxu0 0.0
      %2844 = vmatpush1.msra.mxu0 0.0
      %2845 = vmatprep.subr.mxu0 0.0
      %2846 = vmatpush1.msra.mxu0 0.0
      %2847 = vmatprep.subr.mxu0 0.0
      %2848 = vmatpush1.msra.mxu0 0.0
      %2849 = vmatprep.subr.mxu0 0.0
      %2850 = vmatpush1.msra.mxu0 0.0
      %2851 = vmatprep.subr.mxu0 0.0
      %2852 = vmatpush1.msra.mxu0 0.0
      %2853 = vmatprep.subr.mxu0 0.0
      %2854 = vmatpush1.msra.mxu0 0.0
      %2855 = vmatprep.subr.mxu0 0.0
      %2856 = vmatpush1.msra.mxu0 0.0
      %2857 = vmatprep.subr.mxu0 0.0
      %2858 = vmatpush1.msra.mxu0 0.0
      %2859 = vmatprep.subr.mxu0 0.0
      %2860 = vmatpush1.msra.mxu0 0.0
      %2861 = vmatprep.subr.mxu0 0.0
      %2862 = vmatpush1.msra.mxu0 0.0
      %2863 = vmatprep.subr.mxu0 0.0
      %2864 = vmatpush1.msra.mxu0 0.0
      %2865 = vmatprep.subr.mxu0 0.0
      %2866 = vmatpush1.msra.mxu0 0.0
      %2867 = vmatprep.subr.mxu0 0.0
      %2868 = vmatpush1.msra.mxu0 0.0
      %2869 = vmatprep.subr.mxu0 0.0
      %2870 = vmatpush1.msra.mxu0 0.0
      %2871 = vmatprep.subr.mxu0 0.0
      %2872 = vmatpush1.msra.mxu0 0.0
      %2873 = vmatprep.subr.mxu0 0.0
      %2874 = vmatpush1.msra.mxu0 0.0
      %2875 = vmatprep.subr.mxu0 0.0
      %2876 = vmatpush1.msra.mxu0 0.0
      %2877 = vmatprep.subr.mxu0 0.0
      %2878 = vmatpush1.msra.mxu0 0.0
      %2879 = vmatprep.subr.mxu0 0.0
      %2880 = vmatpush1.msra.mxu0 0.0
      %2881 = vmatprep.subr.mxu0 0.0
      %2882 = vmatpush1.msra.mxu0 0.0
      %2883 = vmatprep.subr.mxu0 0.0
      %2884 = vmatpush1.msra.mxu0 0.0
      %2885 = vmatprep.subr.mxu0 0.0
      %2886 = vmatpush1.msra.mxu0 0.0
      %2887 = vmatprep.subr.mxu0 0.0
      %2888 = vmatpush1.msra.mxu0 0.0
      %2889 = vmatprep.mubr.f32.mxu0 0.0
      %2890 = vmatmul.mubr.f32.gmra.mrb[0].mxu0 %v2815
      %v2891 = vpop.f32.mrb[0].mxu0
      %v2892 = vadd.f32 0.0, %v2891
      %v2893 = vpop.f32.mrb[0].mxu0
      %v2894 = vadd.f32 0.0, %v2893
      %2895 = vdwg.mxu0
      %2896 = vmatprep.subr.mxu0 %v2823
      %2897 = vmatpush1.msra.mxu0 %v2821
      %2898 = vmatprep.subr.mxu0 0.0
      %2899 = vmatpush1.msra.mxu0 0.0
      %2900 = vmatprep.subr.mxu0 0.0
      %2901 = vmatpush1.msra.mxu0 0.0
      %2902 = vmatprep.subr.mxu0 0.0
      %2903 = vmatpush1.msra.mxu0 0.0
      %2904 = vmatprep.subr.mxu0 0.0
      %2905 = vmatpush1.msra.mxu0 0.0
      %2906 = vmatprep.subr.mxu0 0.0
      %2907 = vmatpush1.msra.mxu0 0.0
      %2908 = vmatprep.subr.mxu0 0.0
      %2909 = vmatpush1.msra.mxu0 0.0
      %2910 = vmatprep.subr.mxu0 0.0
      %2911 = vmatpush1.msra.mxu0 0.0
      %2912 = vmatprep.subr.mxu0 0.0
      %2913 = vmatpush1.msra.mxu0 0.0
      %2914 = vmatprep.subr.mxu0 0.0
      %2915 = vmatpush1.msra.mxu0 0.0
      %2916 = vmatprep.subr.mxu0 0.0
      %2917 = vmatpush1.msra.mxu0 0.0
      %2918 = vmatprep.subr.mxu0 0.0
      %2919 = vmatpush1.msra.mxu0 0.0
      %2920 = vmatprep.subr.mxu0 0.0
      %2921 = vmatpush1.msra.mxu0 0.0
      %2922 = vmatprep.subr.mxu0 0.0
      %2923 = vmatpush1.msra.mxu0 0.0
      %2924 = vmatprep.subr.mxu0 0.0
      %2925 = vmatpush1.msra.mxu0 0.0
      %2926 = vmatprep.subr.mxu0 0.0
      %2927 = vmatpush1.msra.mxu0 0.0
      %2928 = vmatprep.subr.mxu0 0.0
      %2929 = vmatpush1.msra.mxu0 0.0
      %2930 = vmatprep.subr.mxu0 0.0
      %2931 = vmatpush1.msra.mxu0 0.0
      %2932 = vmatprep.subr.mxu0 0.0
      %2933 = vmatpush1.msra.mxu0 0.0
      %2934 = vmatprep.subr.mxu0 0.0
      %2935 = vmatpush1.msra.mxu0 0.0
      %2936 = vmatprep.subr.mxu0 0.0
      %2937 = vmatpush1.msra.mxu0 0.0
      %2938 = vmatprep.subr.mxu0 0.0
      %2939 = vmatpush1.msra.mxu0 0.0
      %2940 = vmatprep.subr.mxu0 0.0
      %2941 = vmatpush1.msra.mxu0 0.0
      %2942 = vmatprep.subr.mxu0 0.0
      %2943 = vmatpush1.msra.mxu0 0.0
      %2944 = vmatprep.subr.mxu0 0.0
      %2945 = vmatpush1.msra.mxu0 0.0
      %2946 = vmatprep.subr.mxu0 0.0
      %2947 = vmatpush1.msra.mxu0 0.0
      %2948 = vmatprep.subr.mxu0 0.0
      %2949 = vmatpush1.msra.mxu0 0.0
      %2950 = vmatprep.subr.mxu0 0.0
      %2951 = vmatpush1.msra.mxu0 0.0
      %2952 = vmatprep.subr.mxu0 0.0
      %2953 = vmatpush1.msra.mxu0 0.0
      %2954 = vmatprep.subr.mxu0 0.0
      %2955 = vmatpush1.msra.mxu0 0.0
      %2956 = vmatprep.subr.mxu0 0.0
      %2957 = vmatpush1.msra.mxu0 0.0
      %2958 = vmatprep.subr.mxu0 0.0
      %2959 = vmatpush1.msra.mxu0 0.0
      %2960 = vmatprep.mubr.f32.mxu0 0.0
      %2961 = vmatmul.mubr.f32.gmra.mrb[0].mxu0 %v2815
      %v2962 = vpop.f32.mrb[0].mxu0
      %v2963 = vadd.f32 0.0, %v2962
      %v2964 = vpop.f32.mrb[0].mxu0
      %v2965 = vadd.f32 0.0, %v2964
      %2966 = vdwg.mxu0
      %v2967 = vadd.f32 %v2786, %v2892
      %v2968 = vadd.f32 %v2787, %v2894
      %v2969 = vadd.f32 %v2788, %v2963
      %v2970 = vadd.f32 %v2789, %v2965
      %s2971 = scalar_lea.vmem %s1, 120
      %v2972 = vld [vmem:[%s2971] sm:$0xff]
      %v2973 = vld [vmem:[%s738] sm:$0xff]
      %v2974 = vld [vmem:[%s738 + $0x8] sm:$0xff]
      %v2975 = vld [vmem:[%s738 + $0x10] sm:$0xf]
      %v2979 = vcombine.high %v2973, %v2973
      %v2980 = vcombine.high %v2974, %v2974
      %2981 = vrot.lane.b32.xlu0 %v2973, 64
      %v2982 = vpop.permute.xlu0 %2981
      %2983 = vrot.lane.b32.xlu0 %v2979, 64
      %v2984 = vpop.permute.xlu0 %2983
      %2985 = vrot.lane.b32.xlu0 %v2974, 64
      %v2986 = vpop.permute.xlu0 %2985
      %2987 = vrot.lane.b32.xlu0 %v2980, 64
      %v2988 = vpop.permute.xlu0 %2987
      %2989 = vrot.lane.b32.xlu0 %v2975, 64
      %v2990 = vpop.permute.xlu0 %2989
      %v2991 = vsel %vm2447, %v2982, %v2984
      %v2992 = vsel %vm2447, %v2984, %v2986
      %v2993 = vsel %vm2447, %v2986, %v2988
      %v2994 = vsel %vm2447, %v2988, %v2990
      %v2996 = vsel %vm258, %v2972, 0
      %v2998 = vsel %vm262, %v2991, 0
      %v3000 = vsel %vm262, %v2992, 0
      %v3002 = vsel %vm262, %v2993, 0
      %v3004 = vsel %vm262, %v2994, 0
      %3006 = vmatprep.subr.mxu0 %v3000
      %3007 = vmatpush1.msra.mxu0 %v2998
      %3008 = vmatprep.subr.mxu0 0.0
      %3009 = vmatpush1.msra.mxu0 0.0
      %3010 = vmatprep.subr.mxu0 0.0
      %3011 = vmatpush1.msra.mxu0 0.0
      %3012 = vmatprep.subr.mxu0 0.0
      %3013 = vmatpush1.msra.mxu0 0.0
      %3014 = vmatprep.subr.mxu0 0.0
      %3015 = vmatpush1.msra.mxu0 0.0
      %3016 = vmatprep.subr.mxu0 0.0
      %3017 = vmatpush1.msra.mxu0 0.0
      %3018 = vmatprep.subr.mxu0 0.0
      %3019 = vmatpush1.msra.mxu0 0.0
      %3020 = vmatprep.subr.mxu0 0.0
      %3021 = vmatpush1.msra.mxu0 0.0
      %3022 = vmatprep.subr.mxu0 0.0
      %3023 = vmatpush1.msra.mxu0 0.0
      %3024 = vmatprep.subr.mxu0 0.0
      %3025 = vmatpush1.msra.mxu0 0.0
      %3026 = vmatprep.subr.mxu0 0.0
      %3027 = vmatpush1.msra.mxu0 0.0
      %3028 = vmatprep.subr.mxu0 0.0
      %3029 = vmatpush1.msra.mxu0 0.0
      %3030 = vmatprep.subr.mxu0 0.0
      %3031 = vmatpush1.msra.mxu0 0.0
      %3032 = vmatprep.subr.mxu0 0.0
      %3033 = vmatpush1.msra.mxu0 0.0
      %3034 = vmatprep.subr.mxu0 0.0
      %3035 = vmatpush1.msra.mxu0 0.0
      %3036 = vmatprep.subr.mxu0 0.0
      %3037 = vmatpush1.msra.mxu0 0.0
      %3038 = vmatprep.subr.mxu0 0.0
      %3039 = vmatpush1.msra.mxu0 0.0
      %3040 = vmatprep.subr.mxu0 0.0
      %3041 = vmatpush1.msra.mxu0 0.0
      %3042 = vmatprep.subr.mxu0 0.0
      %3043 = vmatpush1.msra.mxu0 0.0
      %3044 = vmatprep.subr.mxu0 0.0
      %3045 = vmatpush1.msra.mxu0 0.0
      %3046 = vmatprep.subr.mxu0 0.0
      %3047 = vmatpush1.msra.mxu0 0.0
      %3048 = vmatprep.subr.mxu0 0.0
      %3049 = vmatpush1.msra.mxu0 0.0
      %3050 = vmatprep.subr.mxu0 0.0
      %3051 = vmatpush1.msra.mxu0 0.0
      %3052 = vmatprep.subr.mxu0 0.0
      %3053 = vmatpush1.msra.mxu0 0.0
      %3054 = vmatprep.subr.mxu0 0.0
      %3055 = vmatpush1.msra.mxu0 0.0
      %3056 = vmatprep.subr.mxu0 0.0
      %3057 = vmatpush1.msra.mxu0 0.0
      %3058 = vmatprep.subr.mxu0 0.0
      %3059 = vmatpush1.msra.mxu0 0.0
      %3060 = vmatprep.subr.mxu0 0.0
      %3061 = vmatpush1.msra.mxu0 0.0
      %3062 = vmatprep.subr.mxu0 0.0
      %3063 = vmatpush1.msra.mxu0 0.0
      %3064 = vmatprep.subr.mxu0 0.0
      %3065 = vmatpush1.msra.mxu0 0.0
      %3066 = vmatprep.subr.mxu0 0.0
      %3067 = vmatpush1.msra.mxu0 0.0
      %3068 = vmatprep.subr.mxu0 0.0
      %3069 = vmatpush1.msra.mxu0 0.0
      %3070 = vmatprep.mubr.f32.mxu0 0.0
      %3071 = vmatmul.mubr.f32.gmra.mrb[0].mxu0 %v2996
      %v3072 = vpop.f32.mrb[0].mxu0
      %v3073 = vadd.f32 0.0, %v3072
      %v3074 = vpop.f32.mrb[0].mxu0
      %v3075 = vadd.f32 0.0, %v3074
      %3076 = vdwg.mxu0
      %3077 = vmatprep.subr.mxu0 %v3004
      %3078 = vmatpush1.msra.mxu0 %v3002
      %3079 = vmatprep.subr.mxu0 0.0
      %3080 = vmatpush1.msra.mxu0 0.0
      %3081 = vmatprep.subr.mxu0 0.0
      %3082 = vmatpush1.msra.mxu0 0.0
      %3083 = vmatprep.subr.mxu0 0.0
      %3084 = vmatpush1.msra.mxu0 0.0
      %3085 = vmatprep.subr.mxu0 0.0
      %3086 = vmatpush1.msra.mxu0 0.0
      %3087 = vmatprep.subr.mxu0 0.0
      %3088 = vmatpush1.msra.mxu0 0.0
      %3089 = vmatprep.subr.mxu0 0.0
      %3090 = vmatpush1.msra.mxu0 0.0
      %3091 = vmatprep.subr.mxu0 0.0
      %3092 = vmatpush1.msra.mxu0 0.0
      %3093 = vmatprep.subr.mxu0 0.0
      %3094 = vmatpush1.msra.mxu0 0.0
      %3095 = vmatprep.subr.mxu0 0.0
      %3096 = vmatpush1.msra.mxu0 0.0
      %3097 = vmatprep.subr.mxu0 0.0
      %3098 = vmatpush1.msra.mxu0 0.0
      %3099 = vmatprep.subr.mxu0 0.0
      %3100 = vmatpush1.msra.mxu0 0.0
      %3101 = vmatprep.subr.mxu0 0.0
      %3102 = vmatpush1.msra.mxu0 0.0
      %3103 = vmatprep.subr.mxu0 0.0
      %3104 = vmatpush1.msra.mxu0 0.0
      %3105 = vmatprep.subr.mxu0 0.0
      %3106 = vmatpush1.msra.mxu0 0.0
      %3107 = vmatprep.subr.mxu0 0.0
      %3108 = vmatpush1.msra.mxu0 0.0
      %3109 = vmatprep.subr.mxu0 0.0
      %3110 = vmatpush1.msra.mxu0 0.0
      %3111 = vmatprep.subr.mxu0 0.0
      %3112 = vmatpush1.msra.mxu0 0.0
      %3113 = vmatprep.subr.mxu0 0.0
      %3114 = vmatpush1.msra.mxu0 0.0
      %3115 = vmatprep.subr.mxu0 0.0
      %3116 = vmatpush1.msra.mxu0 0.0
      %3117 = vmatprep.subr.mxu0 0.0
      %3118 = vmatpush1.msra.mxu0 0.0
      %3119 = vmatprep.subr.mxu0 0.0
      %3120 = vmatpush1.msra.mxu0 0.0
      %3121 = vmatprep.subr.mxu0 0.0
      %3122 = vmatpush1.msra.mxu0 0.0
      %3123 = vmatprep.subr.mxu0 0.0
      %3124 = vmatpush1.msra.mxu0 0.0
      %3125 = vmatprep.subr.mxu0 0.0
      %3126 = vmatpush1.msra.mxu0 0.0
      %3127 = vmatprep.subr.mxu0 0.0
      %3128 = vmatpush1.msra.mxu0 0.0
      %3129 = vmatprep.subr.mxu0 0.0
      %3130 = vmatpush1.msra.mxu0 0.0
      %3131 = vmatprep.subr.mxu0 0.0
      %3132 = vmatpush1.msra.mxu0 0.0
      %3133 = vmatprep.subr.mxu0 0.0
      %3134 = vmatpush1.msra.mxu0 0.0
      %3135 = vmatprep.subr.mxu0 0.0
      %3136 = vmatpush1.msra.mxu0 0.0
      %3137 = vmatprep.subr.mxu0 0.0
      %3138 = vmatpush1.msra.mxu0 0.0
      %3139 = vmatprep.subr.mxu0 0.0
      %3140 = vmatpush1.msra.mxu0 0.0
      %3141 = vmatprep.mubr.f32.mxu0 0.0
      %3142 = vmatmul.mubr.f32.gmra.mrb[0].mxu0 %v2996
      %v3143 = vpop.f32.mrb[0].mxu0
      %v3144 = vadd.f32 0.0, %v3143
      %v3145 = vpop.f32.mrb[0].mxu0
      %v3146 = vadd.f32 0.0, %v3145
      %3147 = vdwg.mxu0
      %v3148 = vadd.f32 %v2967, %v3073
      %v3149 = vadd.f32 %v2968, %v3075
      %v3150 = vadd.f32 %v2969, %v3144
      %v3151 = vadd.f32 %v2970, %v3146
      %v3152 = vld [vmem:[%s2] sm:$0xff]
      %3154 = vset.pattern.permute.xlu0 0
      %3155 = vperm.xlu0 %3154, %v3152
      %v3156 = vpop.permute.xlu0 %3155
      %v3158 = vadd.f32 %v3148, %v3156
      %v3159 = vadd.f32 %v3149, %v3156
      %v3160 = vadd.f32 %v3150, %v3156
      %v3161 = vadd.f32 %v3151, %v3156
      %v3162 = vadd.f32 %v3158, %v3159
      %v3163 = vadd.f32 %v3162, %v3160
      %v3164 = vadd.f32 %v3163, %v3161
      %3165 = vadd.xlane.f32.xlu0 %v3164
      %v3166 = vpop.xlane.xlu0 %3165
      %v3167 = vadd.f32 %v1642, %v3166
      %v3168 = vmul.f32 %v3158, %v3158
      %v3169 = vmul.f32 %v3159, %v3159
      %v3170 = vmul.f32 %v3160, %v3160
      %v3171 = vmul.f32 %v3161, %v3161
      %v3172 = vadd.f32 %v3168, %v3169
      %v3173 = vadd.f32 %v3172, %v3170
      %v3174 = vadd.f32 %v3173, %v3171
      %3175 = vadd.xlane.f32.xlu0 %v3174
      %v3176 = vpop.xlane.xlu0 %3175
      %v3177 = vadd.f32 %v1652, %v3176
      %3179 = vrot.lane.b32.xlu0 %v3158, 32
      %v3180 = vpop.permute.xlu0 %3179
      %vm3182 = vcmask 523520
      %3183 = vst.msk [vmem:[%s237] sm:$0xff] %vm3182, %v3180
      %3184 = vrot.lane.b32.xlu0 %v3158, 64
      %v3185 = vpop.permute.xlu0 %3184
      %vm3187 = vcmask 1048320
      %3188 = vst.msk [vmem:[%s237] sm:$0xff] %vm3187, %v3185
      %3189 = vrot.lane.b32.xlu0 %v3158, 96
      %v3190 = vpop.permute.xlu0 %3189
      %3192 = vst.msk [vmem:[%s237 + $0x8] sm:$0xff] %vm3182, %v3190
      %3193 = vst.msk [vmem:[%s237 + $0x8] sm:$0xff] %vm3187, %v3158
      %3195 = vrot.lane.b32.xlu0 %v3159, 32
      %v3196 = vpop.permute.xlu0 %3195
      %3198 = vst.msk [vmem:[%s237 + $0x10] sm:$0xff] %vm3182, %v3196
      %3199 = vrot.lane.b32.xlu0 %v3159, 64
      %v3200 = vpop.permute.xlu0 %3199
      %3202 = vst.msk [vmem:[%s237 + $0x10] sm:$0xff] %vm3187, %v3200
      %3203 = vrot.lane.b32.xlu0 %v3159, 96
      %v3204 = vpop.permute.xlu0 %3203
      %3206 = vst.msk [vmem:[%s237 + $0x18] sm:$0xff] %vm3182, %v3204
      %3207 = vst.msk [vmem:[%s237 + $0x18] sm:$0xff] %vm3187, %v3159
      %3209 = vrot.lane.b32.xlu0 %v3160, 32
      %v3210 = vpop.permute.xlu0 %3209
      %3212 = vst.msk [vmem:[%s237 + $0x20] sm:$0xff] %vm3182, %v3210
      %3213 = vrot.lane.b32.xlu0 %v3160, 64
      %v3214 = vpop.permute.xlu0 %3213
      %3216 = vst.msk [vmem:[%s237 + $0x20] sm:$0xff] %vm3187, %v3214
      %3217 = vrot.lane.b32.xlu0 %v3160, 96
      %v3218 = vpop.permute.xlu0 %3217
      %3220 = vst.msk [vmem:[%s237 + $0x28] sm:$0xff] %vm3182, %v3218
      %3221 = vst.msk [vmem:[%s237 + $0x28] sm:$0xff] %vm3187, %v3160
      %3223 = vrot.lane.b32.xlu0 %v3161, 32
      %v3224 = vpop.permute.xlu0 %3223
      %3226 = vst.msk [vmem:[%s237 + $0x30] sm:$0xff] %vm3182, %v3224
      %3227 = vrot.lane.b32.xlu0 %v3161, 64
      %v3228 = vpop.permute.xlu0 %3227
      %3230 = vst.msk [vmem:[%s237 + $0x30] sm:$0xff] %vm3187, %v3228
      %3231 = vrot.lane.b32.xlu0 %v3161, 96
      %v3232 = vpop.permute.xlu0 %3231
      %3234 = vst.msk [vmem:[%s237 + $0x38] sm:$0xff] %vm3182, %v3232
      %3235 = vst.msk [vmem:[%s237 + $0x38] sm:$0xff] %vm3187, %v3161
      %vm3236 = vcmask 7168
      %3237 = vst.msk [vmem:[%s241] sm:$0xff] %vm3236, %v3167
      %3238 = vst.msk [vmem:[%s245] sm:$0xff] %vm3236, %v3177
      %p3239 = scmp.lt.s32.totalorder %s17, 1
      %s3240 = scalar_select %p3239, %s17, 1
      %s3241 = smul.addr %s3240, 8
      %s3242 = smul.addr %s3241, 8
      %s3243 = scalar_lea.vmem %s3, %s3242
      %p3244 = scmp.lt.s32.totalorder %s17, 1
      %s3245 = scalar_select %p3244, %s17, 1
      %s3246 = smul.addr %s3245, 8
      %s3247 = scalar_lea.vmem %s4, %s3246
      %p3248 = scmp.lt.s32.totalorder %s17, 1
      %s3249 = scalar_select %p3248, %s17, 1
      %s3250 = smul.addr %s3249, 8
      %s3251 = scalar_lea.vmem %s5, %s3250
      // Predicated region
      $region33: #{factorized_expansion2.2} parent=31 // pred_check
        %p3252 = pneg %p103
      $region34: #{factorized_expansion2.2} parent=31 // pred_check_branch
        %3254 = sbr.rel (%p3252) target = $region36
      $region35: #{factorized_expansion2.2} parent=31 // pred_region
        _
      $region36: #{factorized_expansion2.2} parent=31 // pred_fallthru
        _
      // Predicated region
      $region37: #{factorized_expansion2.2} parent=31 // pred_check
        %p3255 = pneg %p129
      $region38: #{factorized_expansion2.2} parent=31 // pred_check_branch
        %3257 = sbr.rel (%p3255) target = $region40
      $region39: #{factorized_expansion2.2} parent=31 // pred_region
        _
      $region40: #{factorized_expansion2.2} parent=31 // pred_fallthru
        _
      // Predicated region
      $region41: #{factorized_expansion2.2} parent=31 // pred_check
        %p3258 = pneg %p155
      $region42: #{factorized_expansion2.2} parent=31 // pred_check_branch
        %3260 = sbr.rel (%p3258) target = $region44
      $region43: #{factorized_expansion2.2} parent=31 // pred_region
        _
      $region44: #{factorized_expansion2.2} parent=31 // pred_fallthru
        _
    $region32: #{factorized_expansion2.2} parent=5 // pred_fallthru
      _
    %p3261 = scmp.le.s32.totalorder 2, %s12
    // Predicated region
    $region45: #{factorized_expansion2.2} parent=5 // pred_check
      %p3262 = pneg %p3261
    $region46: #{factorized_expansion2.2} parent=5 // pred_check_branch
      %3264 = sbr.rel (%p3262) target = $region48
    $region47: #{factorized_expansion2.2} parent=5 // pred_region
      %s3265 = ssub.s32 %s12, 2
      // Predicated region
      $region49: #{factorized_expansion2.2} parent=47 // pred_check
        %p3266 = pneg %p109
      $region50: #{factorized_expansion2.2} parent=47 // pred_check_branch
        %3268 = sbr.rel (%p3266) target = $region52
      $region51: #{factorized_expansion2.2} parent=47 // pred_region
        %p3269 = scmp.lt.s32.totalorder %s18, 1
        %s3270 = scalar_select %p3269, %s18, 1
        %s3271 = smul.addr %s3270, 8
        %s3272 = smul.addr %s3271, 8
        %s3273 = scalar_lea.vmem %s3, %s3272
      $region52: #{factorized_expansion2.2} parent=47 // pred_fallthru
        _
      // Predicated region
      $region53: #{factorized_expansion2.2} parent=47 // pred_check
        %p3274 = pneg %p135
      $region54: #{factorized_expansion2.2} parent=47 // pred_check_branch
        %3276 = sbr.rel (%p3274) target = $region56
      $region55: #{factorized_expansion2.2} parent=47 // pred_region
        %p3277 = scmp.lt.s32.totalorder %s18, 1
        %s3278 = scalar_select %p3277, %s18, 1
        %s3279 = smul.addr %s3278, 8
        %s3280 = scalar_lea.vmem %s4, %s3279
      $region56: #{factorized_expansion2.2} parent=47 // pred_fallthru
        _
      // Predicated region
      $region57: #{factorized_expansion2.2} parent=47 // pred_check
        %p3281 = pneg %p161
      $region58: #{factorized_expansion2.2} parent=47 // pred_check_branch
        %3283 = sbr.rel (%p3281) target = $region60
      $region59: #{factorized_expansion2.2} parent=47 // pred_region
        %p3284 = scmp.lt.s32.totalorder %s18, 1
        %s3285 = scalar_select %p3284, %s18, 1
        %s3286 = smul.addr %s3285, 8
        %s3287 = scalar_lea.vmem %s5, %s3286
      $region60: #{factorized_expansion2.2} parent=47 // pred_fallthru
        _
    $region48: #{factorized_expansion2.2} parent=5 // pred_fallthru
      _
  $region6: #{factorized_expansion2.2} parent=0 // loop_footer
    %s16 = sadd.s32 1, %s12
  $region7: #{factorized_expansion2.2} parent=0 // loop_footer_branch
    %11 = sbr.rel target = $region3
  $region8: #{factorized_expansion2.2} parent=0 // loop_exit
    _

</llo_original>
